<compile_context>
chip_gen: v6e
topology: v6e:2x2x1
jax: 0.10.0
libtpu: 0.0.40
codegen_flags: <defaults>
</compile_context>

<pallas_src>
import functools

import jax
import jax.numpy as jnp
import numpy as np
from jax import lax
from jax.experimental import pallas as pl
from jax.experimental.pallas import tpu as pltpu


# bf16 matmul operands (f32 accumulation via preferred_element_type). Native MXU format
# on v6e/v7x, also supported by v5e's MXU; all elementwise math stays f32.
USE_BF16_MATMULS = True
_MM_DTYPE = jnp.bfloat16 if USE_BF16_MATMULS else jnp.float32


def _dot(a, b):
    # Cast the activation operand to the (possibly bf16) weight dtype; accumulate in f32.
    return jnp.dot(a.astype(b.dtype), b, preferred_element_type=jnp.float32)


# ----------------------------- Pallas kernels ------------------------------

def _backbone_kernel(x_ref, w1_ref, b1_ref, w2_ref, b2_ref,
                     fw1_ref, fb1_ref, fw2_ref, fb2_ref,
                     out_ref,
                     lhs1_ref, p1r_ref, h1_ref, lhs2_ref, fc1in_ref,
                     *, fuse_log_softmax):
    tb = x_ref.shape[0]

    # ---- conv1: ONE matmul, K = 5 (kh taps) * 28 (full image width) = 140 ----------
    # lhs1[(b, i), kh*28 + w] = x[b, i+kh, w];  w1_ref is the banded (Toeplitz) weight
    # with columns (j, o), so the matmul directly yields conv1 (pre-bias) outputs.
    for kh in range(5):
        lhs1_ref[:, kh * 28:(kh + 1) * 28] = (
            x_ref[:, kh:kh + 24, :].reshape(tb * 24, 28))
    y1 = _dot(lhs1_ref[...], w1_ref[...])            # [(b, i), j*10 + o] = [tb*24, 240]
    y1 = y1.reshape(tb, 24, 240)

    # ---- maxpool 2x2 + bias + relu (after conv1) ------------------------------------
    # Row (i) pairs first, then lane-window (j) pairs; result h1[b, ph, pw*10 + c].
    for ph in range(12):
        p1r_ref[:, ph, :] = jnp.maximum(y1[:, 2 * ph, :], y1[:, 2 * ph + 1, :])
    for pw in range(12):
        m = jnp.maximum(p1r_ref[:, :, 20 * pw:20 * pw + 10],
                        p1r_ref[:, :, 20 * pw + 10:20 * pw + 20])
        h1_ref[:, :, 10 * pw:10 * pw + 10] = jnp.maximum(m + b1_ref[...], 0.0)

    # ---- conv2: ONE matmul, K = 5 (kh) * 12 (pw) * 10 (cin) = 600 -------------------
    # (Dropout2d: eval mode -> identity.)
    # lhs2[(b, i2), kh*120 + pw*10 + c] = h1[b, i2+kh, pw*10 + c]
    for kh in range(5):
        lhs2_ref[:, kh * 120:(kh + 1) * 120] = (
            h1_ref[:, kh:kh + 8, :].reshape(tb * 8, 120))
    y2 = _dot(lhs2_ref[...], w2_ref[...])            # [(b, i2), j2*20 + o2] = [tb*8, 160]
    y2 = y2.reshape(tb, 8, 160)

    # ---- maxpool 2x2 + bias + relu (after conv2), fused with the fc1-input build ----
    # torch's x.view(-1, 320) (C, H, W) flatten order is folded into fw1; here we write
    # position-major (q, r, o2) 20-lane slabs into a [tb, 320] scratch for one K=320 fc1.
    for q in range(4):
        row = jnp.maximum(y2[:, 2 * q, :], y2[:, 2 * q + 1, :])          # [tb, 160]
        for r in range(4):
            v = jnp.maximum(row[:, 40 * r:40 * r + 20],
                            row[:, 40 * r + 20:40 * r + 40])             # [tb, 20]
            c0 = q * 80 + r * 20
            fc1in_ref[:, c0:c0 + 20] = jnp.maximum(v + b2_ref[...], 0.0)

    # ---- fc1 (+relu), dropout (eval: identity), fc2 ---------------------------------
    h = jnp.maximum(_dot(fc1in_ref[...], fw1_ref[...]) + fb1_ref[...], 0.0)   # [tb, 50]
    z = _dot(h, fw2_ref[...]) + fb2_ref[...]                                  # [tb, 10]

    if fuse_log_softmax:
        # grid == 1: the whole batch is in this tile, so log_softmax(dim=0) fuses here.
        m0 = jnp.max(z, axis=0, keepdims=True)
        lse = jnp.log(jnp.sum(jnp.exp(z - m0), axis=0, keepdims=True)) + m0
        out_ref[...] = z - lse
    else:
        out_ref[...] = z


def _log_softmax_dim0_kernel(z_ref, o_ref):
    # log_softmax over dim 0 (the batch dimension), exactly as the original module.
    z = z_ref[...]
    m = jnp.max(z, axis=0, keepdims=True)
    lse = jnp.log(jnp.sum(jnp.exp(z - m), axis=0, keepdims=True)) + m
    o_ref[...] = z - lse


# --------------------------- pallas_call wrappers ---------------------------

def _pick_batch_tile(batch):
    # Whole batch in one tile (grid == 1, log_softmax fused) up to 64 images; beyond
    # that, tiles of <=64 keep VMEM bounded (v7x: 64 MiB) and give v7x's two
    # TensorCores separate batch tiles via the "parallel" grid axis.
    if batch <= 64:
        return batch
    for tb in (64, 32, 16, 8):
        if batch % tb == 0:
            return tb
    return batch  # rare fallback: single tile


def net_forward_pallas(prepped, x_nchw):
    batch = x_nchw.shape[0]
    tb = _pick_batch_tile(batch)
    grid = batch // tb
    fuse = (grid == 1)

    x = x_nchw[:, 0]                                           # [B, 28, 28]
    kernel = functools.partial(_backbone_kernel, fuse_log_softmax=fuse)

    out = pl.pallas_call(
        kernel,
        out_shape=jax.ShapeDtypeStruct((batch, 10), jnp.float32),
        grid_spec=pltpu.PrefetchScalarGridSpec(
            num_scalar_prefetch=0,
            grid=(grid,),
            in_specs=[
                pl.BlockSpec((tb, 28, 28), lambda i: (i, 0, 0)),    # raw image tile
                pl.BlockSpec((140, 240), lambda i: (0, 0)),         # conv1 banded weight
                pl.BlockSpec((1, 10), lambda i: (0, 0)),            # conv1 bias
                pl.BlockSpec((600, 160), lambda i: (0, 0)),         # conv2 banded weight
                pl.BlockSpec((1, 20), lambda i: (0, 0)),            # conv2 bias
                pl.BlockSpec((320, 50), lambda i: (0, 0)),          # fc1 weight (permuted)
                pl.BlockSpec((1, 50), lambda i: (0, 0)),            # fc1 bias
                pl.BlockSpec((50, 10), lambda i: (0, 0)),           # fc2 weight
                pl.BlockSpec((1, 10), lambda i: (0, 0)),            # fc2 bias
            ],
            out_specs=pl.BlockSpec((tb, 10), lambda i: (i, 0)),
            scratch_shapes=[
                pltpu.VMEM((tb * 24, 140), jnp.float32),   # conv1 matmul LHS
                pltpu.VMEM((tb, 12, 240), jnp.float32),    # row-pooled conv1
                pltpu.VMEM((tb, 12, 120), jnp.float32),    # pooled+relu conv1
                pltpu.VMEM((tb * 8, 600), jnp.float32),    # conv2 matmul LHS
                pltpu.VMEM((tb, 320), jnp.float32),        # pooled+relu conv2 (fc1 input)
            ],
        ),
        compiler_params=pltpu.CompilerParams(
            dimension_semantics=("parallel",),
            vmem_limit_bytes=32 * 1024 * 1024,
        ),
    )(x, prepped["w1"], prepped["b1"], prepped["w2"], prepped["b2"],
      prepped["fw1"], prepped["fb1"], prepped["fw2"], prepped["fb2"])

    if fuse:
        return out

    # grid > 1: log_softmax(dim=0) couples all batch rows -> tiny follow-up kernel.
    return pl.pallas_call(
        _log_softmax_dim0_kernel,
        out_shape=jax.ShapeDtypeStruct((batch, 10), jnp.float32),
        in_specs=[pl.BlockSpec(memory_space=pltpu.MemorySpace.VMEM)],
        out_specs=pl.BlockSpec(memory_space=pltpu.MemorySpace.VMEM),
    )(out)


net_forward = jax.jit(net_forward_pallas)


# ------------------------------ params --------------------------------------

def init_params(key):
    ks = jax.random.split(key, 8)
    s = 0.05
    return {
        "conv1_w": s * jax.random.normal(ks[0], (10, 1, 5, 5), jnp.float32),
        "conv1_b": s * jax.random.normal(ks[1], (10,), jnp.float32),
        "conv2_w": s * jax.random.normal(ks[2], (20, 10, 5, 5), jnp.float32),
        "conv2_b": s * jax.random.normal(ks[3], (20,), jnp.float32),
        "fc1_w": s * jax.random.normal(ks[4], (50, 320), jnp.float32),   # torch [out, in]
        "fc1_b": s * jax.random.normal(ks[5], (50,), jnp.float32),
        "fc2_w": s * jax.random.normal(ks[6], (10, 50), jnp.float32),
        "fc2_b": s * jax.random.normal(ks[7], (10,), jnp.float32),
    }


def prepare_params(params):
    """One-time re-layout of torch-layout weights into matmul-ready layouts.

    conv1 -> banded/Toeplitz [140, 240]: rows kh*28 + w, cols j*10 + o,
             value w1[o, 0, kh, w - j] (zero outside the 5-tap band).
    conv2 -> banded/Toeplitz [600, 160]: rows kh*120 + pw*10 + c, cols j2*20 + o2,
             value w2[o2, c, kh, pw - j2] (zero outside the band).
    fc1   -> [320, 50] rows ordered (q, r, o2) to match the kernel's pooled layout
             (torch's (C, H, W) flatten order folded in here).
    """
    w1 = np.asarray(params["conv1_w"], np.float32)[:, 0]          # [o, kh, kw]
    w1_t = np.transpose(w1, (1, 2, 0))                            # [kh, kw, o]
    w1t = np.zeros((5, 28, 24, 10), np.float32)                   # [kh, w, j, o]
    for j in range(24):
        w1t[:, j:j + 5, j, :] = w1_t
    w1t = w1t.reshape(140, 240)

    w2 = np.asarray(params["conv2_w"], np.float32)                # [o2, c, kh, kw]
    w2_t = np.transpose(w2, (2, 3, 1, 0))                         # [kh, kw, c, o2]
    w2t = np.zeros((5, 12, 10, 8, 20), np.float32)                # [kh, pw, c, j2, o2]
    for j2 in range(8):
        w2t[:, j2:j2 + 5, :, j2, :] = w2_t
    w2t = w2t.reshape(600, 160)

    fw1 = np.transpose(
        np.asarray(params["fc1_w"], np.float32).reshape(50, 20, 4, 4),
        (2, 3, 1, 0)).reshape(320, 50)                            # rows = q*80+r*20+o2
    fw2 = np.asarray(params["fc2_w"], np.float32).T               # [50, 10]

    return {
        "w1": jnp.asarray(w1t, _MM_DTYPE),
        "b1": jnp.asarray(params["conv1_b"], jnp.float32).reshape(1, 10),
        "w2": jnp.asarray(w2t, _MM_DTYPE),
        "b2": jnp.asarray(params["conv2_b"], jnp.float32).reshape(1, 20),
        "fw1": jnp.asarray(fw1, _MM_DTYPE),
        "fb1": jnp.asarray(params["fc1_b"], jnp.float32).reshape(1, 50),
        "fw2": jnp.asarray(fw2, _MM_DTYPE),
        "fb2": jnp.asarray(params["fc2_b"], jnp.float32).reshape(1, 10),
    }


# --------------------------- pure-JAX reference ------------------------------

def net_forward_reference(params, x_nchw):
    dn = ("NCHW", "OIHW", "NCHW")
    b = x_nchw.shape[0]
    y1 = lax.conv_general_dilated(x_nchw, params["conv1_w"], (1, 1), "VALID",
                                  dimension_numbers=dn)
    y1 = y1 + params["conv1_b"][None, :, None, None]
    p1 = jnp.maximum(y1.reshape(b, 10, 12, 2, 12, 2).max(axis=(3, 5)), 0.0)
    y2 = lax.conv_general_dilated(p1, params["conv2_w"], (1, 1), "VALID",
                                  dimension_numbers=dn)
    y2 = y2 + params["conv2_b"][None, :, None, None]
    p2 = jnp.maximum(y2.reshape(b, 20, 4, 2, 4, 2).max(axis=(3, 5)), 0.0)
    flat = p2.reshape(b, 320)
    h = jnp.maximum(flat @ params["fc1_w"].T + params["fc1_b"], 0.0)
    z = h @ params["fc2_w"].T + params["fc2_b"]
    return jax.nn.log_softmax(z, axis=0)


# --------------------------------- main --------------------------------------

if __name__ == "__main__":
    key = jax.random.PRNGKey(0)
    k_param, k_x = jax.random.split(key)
    params = init_params(k_param)
    prepped = prepare_params(params)

    # MNIST-shaped input: the 320-wide flatten requires 28x28 single-channel images.
    x = jax.random.normal(k_x, (2, 1, 28, 28), jnp.float32)

    out = net_forward(prepped, x)
    out = jax.block_until_ready(out)
    assert out.shape == (2, 10)
    assert bool(jnp.all(jnp.isfinite(out)))

    ref = net_forward_reference(params, x)
    tol = 3e-2 if USE_BF16_MATMULS else 1e-4   # bf16 matmul operands -> looser tolerance
    assert bool(jnp.allclose(out, ref, atol=tol, rtol=tol)), (
        "max abs err %e" % float(jnp.max(jnp.abs(out - ref))))

    print("KERNEL_OK")
</pallas_src>

<mosaic_0001>
module attributes {stable_mosaic.version = 11 : i64} {
  func.func @_backbone_kernel(%arg0: i32, %arg1: memref<2x28x28xf32, #tpu.memory_space<vmem>>, %arg2: memref<140x240xbf16, #tpu.memory_space<vmem>>, %arg3: memref<1x10xf32, #tpu.memory_space<vmem>>, %arg4: memref<600x160xbf16, #tpu.memory_space<vmem>>, %arg5: memref<1x20xf32, #tpu.memory_space<vmem>>, %arg6: memref<320x50xbf16, #tpu.memory_space<vmem>>, %arg7: memref<1x50xf32, #tpu.memory_space<vmem>>, %arg8: memref<50x10xbf16, #tpu.memory_space<vmem>>, %arg9: memref<1x10xf32, #tpu.memory_space<vmem>>, %arg10: memref<2x10xf32, #tpu.memory_space<vmem>>, %arg11: memref<48x140xf32, #tpu.memory_space<vmem>>, %arg12: memref<2x12x240xf32, #tpu.memory_space<vmem>>, %arg13: memref<2x12x120xf32, #tpu.memory_space<vmem>>, %arg14: memref<16x600xf32, #tpu.memory_space<vmem>>, %arg15: memref<2x320xf32, #tpu.memory_space<vmem>>) attributes {dimension_semantics = [#tpu.dimension_semantics<parallel>], iteration_bounds = array<i64: 1>, scalar_prefetch = 0 : i64, scratch_operands = 5 : i64, tpu.core_type = #tpu.core_type<tc>, window_params = [{transform_indices = @transform_0, window_bounds = array<i64: 2, 28, 28>}, {pipeline_mode = #tpu.pipeline_mode<synchronous>, transform_indices = @transform_1, window_bounds = array<i64: 140, 240>}, {pipeline_mode = #tpu.pipeline_mode<synchronous>, transform_indices = @transform_2, window_bounds = array<i64: 1, 10>}, {pipeline_mode = #tpu.pipeline_mode<synchronous>, transform_indices = @transform_3, window_bounds = array<i64: 600, 160>}, {pipeline_mode = #tpu.pipeline_mode<synchronous>, transform_indices = @transform_4, window_bounds = array<i64: 1, 20>}, {pipeline_mode = #tpu.pipeline_mode<synchronous>, transform_indices = @transform_5, window_bounds = array<i64: 320, 50>}, {pipeline_mode = #tpu.pipeline_mode<synchronous>, transform_indices = @transform_6, window_bounds = array<i64: 1, 50>}, {pipeline_mode = #tpu.pipeline_mode<synchronous>, transform_indices = @transform_7, window_bounds = array<i64: 50, 10>}, {pipeline_mode = #tpu.pipeline_mode<synchronous>, transform_indices = @transform_8, window_bounds = array<i64: 1, 10>}, {transform_indices = @transform_9, window_bounds = array<i64: 2, 10>}]} {
    %c0 = arith.constant 0 : index
    %c0_0 = arith.constant 0 : index
    %c0_1 = arith.constant 0 : index
    %0 = vector.load %arg1[%c0, %c0_0, %c0_1] : memref<2x28x28xf32, #tpu.memory_space<vmem>>, vector<2x24x28xf32>
    %1 = vector.shape_cast %0 : vector<2x24x28xf32> to vector<48x28xf32>
    %c0_2 = arith.constant 0 : index
    %c0_3 = arith.constant 0 : index
    %2 = vector.load %arg11[%c0_2, %c0_3] : memref<48x140xf32, #tpu.memory_space<vmem>>, vector<48x28xf32>
    tpu.vector_store %arg11[%c0_2, %c0_3], %1 {strides = array<i32>} : memref<48x140xf32, #tpu.memory_space<vmem>>, vector<48x28xf32>,
    %c0_4 = arith.constant 0 : index
    %c1 = arith.constant 1 : index
    %c0_5 = arith.constant 0 : index
    %3 = vector.load %arg1[%c0_4, %c1, %c0_5] : memref<2x28x28xf32, #tpu.memory_space<vmem>>, vector<2x24x28xf32>
    %4 = vector.shape_cast %3 : vector<2x24x28xf32> to vector<48x28xf32>
    %c0_6 = arith.constant 0 : index
    %c28 = arith.constant 28 : index
    %5 = vector.load %arg11[%c0_6, %c28] : memref<48x140xf32, #tpu.memory_space<vmem>>, vector<48x28xf32>
    tpu.vector_store %arg11[%c0_6, %c28], %4 {strides = array<i32>} : memref<48x140xf32, #tpu.memory_space<vmem>>, vector<48x28xf32>,
    %c0_7 = arith.constant 0 : index
    %c2 = arith.constant 2 : index
    %c0_8 = arith.constant 0 : index
    %6 = vector.load %arg1[%c0_7, %c2, %c0_8] : memref<2x28x28xf32, #tpu.memory_space<vmem>>, vector<2x24x28xf32>
    %7 = vector.shape_cast %6 : vector<2x24x28xf32> to vector<48x28xf32>
    %c0_9 = arith.constant 0 : index
    %c56 = arith.constant 56 : index
    %8 = vector.load %arg11[%c0_9, %c56] : memref<48x140xf32, #tpu.memory_space<vmem>>, vector<48x28xf32>
    tpu.vector_store %arg11[%c0_9, %c56], %7 {strides = array<i32>} : memref<48x140xf32, #tpu.memory_space<vmem>>, vector<48x28xf32>,
    %c0_10 = arith.constant 0 : index
    %c3 = arith.constant 3 : index
    %c0_11 = arith.constant 0 : index
    %9 = vector.load %arg1[%c0_10, %c3, %c0_11] : memref<2x28x28xf32, #tpu.memory_space<vmem>>, vector<2x24x28xf32>
    %10 = vector.shape_cast %9 : vector<2x24x28xf32> to vector<48x28xf32>
    %c0_12 = arith.constant 0 : index
    %c84 = arith.constant 84 : index
    %11 = vector.load %arg11[%c0_12, %c84] : memref<48x140xf32, #tpu.memory_space<vmem>>, vector<48x28xf32>
    tpu.vector_store %arg11[%c0_12, %c84], %10 {strides = array<i32>} : memref<48x140xf32, #tpu.memory_space<vmem>>, vector<48x28xf32>,
    %c0_13 = arith.constant 0 : index
    %c4 = arith.constant 4 : index
    %c0_14 = arith.constant 0 : index
    %12 = vector.load %arg1[%c0_13, %c4, %c0_14] : memref<2x28x28xf32, #tpu.memory_space<vmem>>, vector<2x24x28xf32>
    %13 = vector.shape_cast %12 : vector<2x24x28xf32> to vector<48x28xf32>
    %c0_15 = arith.constant 0 : index
    %c112 = arith.constant 112 : index
    %14 = vector.load %arg11[%c0_15, %c112] : memref<48x140xf32, #tpu.memory_space<vmem>>, vector<48x28xf32>
    tpu.vector_store %arg11[%c0_15, %c112], %13 {strides = array<i32>} : memref<48x140xf32, #tpu.memory_space<vmem>>, vector<48x28xf32>,
    %c0_16 = arith.constant 0 : index
    %c0_17 = arith.constant 0 : index
    %15 = vector.load %arg11[%c0_16, %c0_17] : memref<48x140xf32, #tpu.memory_space<vmem>>, vector<48x140xf32>
    %c0_18 = arith.constant 0 : index
    %c0_19 = arith.constant 0 : index
    %16 = vector.load %arg2[%c0_18, %c0_19] : memref<140x240xbf16, #tpu.memory_space<vmem>>, vector<140x240xbf16>
    %17 = arith.truncf %15 : vector<48x140xf32> to vector<48x140xbf16>
    %cst = arith.constant dense<0.000000e+00> : vector<48x240xf32>
    %18 = tpu.matmul %17, %16, %cst {dimension_numbers = #tpu.dot_dimension_numbers<[1], [0], [0], [1], [0, 0, 1, 1], [], []>} : vector<48x140xbf16>, vector<140x240xbf16>, vector<48x240xf32> -> vector<48x240xf32>
    %19 = vector.shape_cast %18 : vector<48x240xf32> to vector<2x24x240xf32>
    %20 = vector.extract_strided_slice %19 {offsets = [0, 0, 0], sizes = [2, 1, 240], strides = [1, 1, 1]} : vector<2x24x240xf32> to vector<2x1x240xf32>
    %21 = vector.shape_cast %20 : vector<2x1x240xf32> to vector<2x240xf32>
    %22 = vector.extract_strided_slice %19 {offsets = [0, 1, 0], sizes = [2, 1, 240], strides = [1, 1, 1]} : vector<2x24x240xf32> to vector<2x1x240xf32>
    %23 = vector.shape_cast %22 : vector<2x1x240xf32> to vector<2x240xf32>
    %24 = arith.maximumf %21, %23 : vector<2x240xf32>
    %c0_20 = arith.constant 0 : index
    %c0_21 = arith.constant 0 : index
    %c0_22 = arith.constant 0 : index
    %25 = vector.load %arg12[%c0_20, %c0_21, %c0_22] : memref<2x12x240xf32, #tpu.memory_space<vmem>>, vector<2x1x240xf32>
    %26 = vector.shape_cast %25 : vector<2x1x240xf32> to vector<2x240xf32>
    %27 = vector.shape_cast %24 : vector<2x240xf32> to vector<2x1x240xf32>
    tpu.vector_store %arg12[%c0_20, %c0_21, %c0_22], %27 {strides = array<i32>} : memref<2x12x240xf32, #tpu.memory_space<vmem>>, vector<2x1x240xf32>,
    %28 = vector.extract_strided_slice %19 {offsets = [0, 2, 0], sizes = [2, 1, 240], strides = [1, 1, 1]} : vector<2x24x240xf32> to vector<2x1x240xf32>
    %29 = vector.shape_cast %28 : vector<2x1x240xf32> to vector<2x240xf32>
    %30 = vector.extract_strided_slice %19 {offsets = [0, 3, 0], sizes = [2, 1, 240], strides = [1, 1, 1]} : vector<2x24x240xf32> to vector<2x1x240xf32>
    %31 = vector.shape_cast %30 : vector<2x1x240xf32> to vector<2x240xf32>
    %32 = arith.maximumf %29, %31 : vector<2x240xf32>
    %c0_23 = arith.constant 0 : index
    %c1_24 = arith.constant 1 : index
    %c0_25 = arith.constant 0 : index
    %33 = vector.load %arg12[%c0_23, %c1_24, %c0_25] : memref<2x12x240xf32, #tpu.memory_space<vmem>>, vector<2x1x240xf32>
    %34 = vector.shape_cast %33 : vector<2x1x240xf32> to vector<2x240xf32>
    %35 = vector.shape_cast %32 : vector<2x240xf32> to vector<2x1x240xf32>
    tpu.vector_store %arg12[%c0_23, %c1_24, %c0_25], %35 {strides = array<i32>} : memref<2x12x240xf32, #tpu.memory_space<vmem>>, vector<2x1x240xf32>,
    %36 = vector.extract_strided_slice %19 {offsets = [0, 4, 0], sizes = [2, 1, 240], strides = [1, 1, 1]} : vector<2x24x240xf32> to vector<2x1x240xf32>
    %37 = vector.shape_cast %36 : vector<2x1x240xf32> to vector<2x240xf32>
    %38 = vector.extract_strided_slice %19 {offsets = [0, 5, 0], sizes = [2, 1, 240], strides = [1, 1, 1]} : vector<2x24x240xf32> to vector<2x1x240xf32>
    %39 = vector.shape_cast %38 : vector<2x1x240xf32> to vector<2x240xf32>
    %40 = arith.maximumf %37, %39 : vector<2x240xf32>
    %c0_26 = arith.constant 0 : index
    %c2_27 = arith.constant 2 : index
    %c0_28 = arith.constant 0 : index
    %41 = vector.load %arg12[%c0_26, %c2_27, %c0_28] : memref<2x12x240xf32, #tpu.memory_space<vmem>>, vector<2x1x240xf32>
    %42 = vector.shape_cast %41 : vector<2x1x240xf32> to vector<2x240xf32>
    %43 = vector.shape_cast %40 : vector<2x240xf32> to vector<2x1x240xf32>
    tpu.vector_store %arg12[%c0_26, %c2_27, %c0_28], %43 {strides = array<i32>} : memref<2x12x240xf32, #tpu.memory_space<vmem>>, vector<2x1x240xf32>,
    %44 = vector.extract_strided_slice %19 {offsets = [0, 6, 0], sizes = [2, 1, 240], strides = [1, 1, 1]} : vector<2x24x240xf32> to vector<2x1x240xf32>
    %45 = vector.shape_cast %44 : vector<2x1x240xf32> to vector<2x240xf32>
    %46 = vector.extract_strided_slice %19 {offsets = [0, 7, 0], sizes = [2, 1, 240], strides = [1, 1, 1]} : vector<2x24x240xf32> to vector<2x1x240xf32>
    %47 = vector.shape_cast %46 : vector<2x1x240xf32> to vector<2x240xf32>
    %48 = arith.maximumf %45, %47 : vector<2x240xf32>
    %c0_29 = arith.constant 0 : index
    %c3_30 = arith.constant 3 : index
    %c0_31 = arith.constant 0 : index
    %49 = vector.load %arg12[%c0_29, %c3_30, %c0_31] : memref<2x12x240xf32, #tpu.memory_space<vmem>>, vector<2x1x240xf32>
    %50 = vector.shape_cast %49 : vector<2x1x240xf32> to vector<2x240xf32>
    %51 = vector.shape_cast %48 : vector<2x240xf32> to vector<2x1x240xf32>
    tpu.vector_store %arg12[%c0_29, %c3_30, %c0_31], %51 {strides = array<i32>} : memref<2x12x240xf32, #tpu.memory_space<vmem>>, vector<2x1x240xf32>,
    %52 = vector.extract_strided_slice %19 {offsets = [0, 8, 0], sizes = [2, 1, 240], strides = [1, 1, 1]} : vector<2x24x240xf32> to vector<2x1x240xf32>
    %53 = vector.shape_cast %52 : vector<2x1x240xf32> to vector<2x240xf32>
    %54 = vector.extract_strided_slice %19 {offsets = [0, 9, 0], sizes = [2, 1, 240], strides = [1, 1, 1]} : vector<2x24x240xf32> to vector<2x1x240xf32>
    %55 = vector.shape_cast %54 : vector<2x1x240xf32> to vector<2x240xf32>
    %56 = arith.maximumf %53, %55 : vector<2x240xf32>
    %c0_32 = arith.constant 0 : index
    %c4_33 = arith.constant 4 : index
    %c0_34 = arith.constant 0 : index
    %57 = vector.load %arg12[%c0_32, %c4_33, %c0_34] : memref<2x12x240xf32, #tpu.memory_space<vmem>>, vector<2x1x240xf32>
    %58 = vector.shape_cast %57 : vector<2x1x240xf32> to vector<2x240xf32>
    %59 = vector.shape_cast %56 : vector<2x240xf32> to vector<2x1x240xf32>
    tpu.vector_store %arg12[%c0_32, %c4_33, %c0_34], %59 {strides = array<i32>} : memref<2x12x240xf32, #tpu.memory_space<vmem>>, vector<2x1x240xf32>,
    %60 = vector.extract_strided_slice %19 {offsets = [0, 10, 0], sizes = [2, 1, 240], strides = [1, 1, 1]} : vector<2x24x240xf32> to vector<2x1x240xf32>
    %61 = vector.shape_cast %60 : vector<2x1x240xf32> to vector<2x240xf32>
    %62 = vector.extract_strided_slice %19 {offsets = [0, 11, 0], sizes = [2, 1, 240], strides = [1, 1, 1]} : vector<2x24x240xf32> to vector<2x1x240xf32>
    %63 = vector.shape_cast %62 : vector<2x1x240xf32> to vector<2x240xf32>
    %64 = arith.maximumf %61, %63 : vector<2x240xf32>
    %c0_35 = arith.constant 0 : index
    %c5 = arith.constant 5 : index
    %c0_36 = arith.constant 0 : index
    %65 = vector.load %arg12[%c0_35, %c5, %c0_36] : memref<2x12x240xf32, #tpu.memory_space<vmem>>, vector<2x1x240xf32>
    %66 = vector.shape_cast %65 : vector<2x1x240xf32> to vector<2x240xf32>
    %67 = vector.shape_cast %64 : vector<2x240xf32> to vector<2x1x240xf32>
    tpu.vector_store %arg12[%c0_35, %c5, %c0_36], %67 {strides = array<i32>} : memref<2x12x240xf32, #tpu.memory_space<vmem>>, vector<2x1x240xf32>,
    %68 = vector.extract_strided_slice %19 {offsets = [0, 12, 0], sizes = [2, 1, 240], strides = [1, 1, 1]} : vector<2x24x240xf32> to vector<2x1x240xf32>
    %69 = vector.shape_cast %68 : vector<2x1x240xf32> to vector<2x240xf32>
    %70 = vector.extract_strided_slice %19 {offsets = [0, 13, 0], sizes = [2, 1, 240], strides = [1, 1, 1]} : vector<2x24x240xf32> to vector<2x1x240xf32>
    %71 = vector.shape_cast %70 : vector<2x1x240xf32> to vector<2x240xf32>
    %72 = arith.maximumf %69, %71 : vector<2x240xf32>
    %c0_37 = arith.constant 0 : index
    %c6 = arith.constant 6 : index
    %c0_38 = arith.constant 0 : index
    %73 = vector.load %arg12[%c0_37, %c6, %c0_38] : memref<2x12x240xf32, #tpu.memory_space<vmem>>, vector<2x1x240xf32>
    %74 = vector.shape_cast %73 : vector<2x1x240xf32> to vector<2x240xf32>
    %75 = vector.shape_cast %72 : vector<2x240xf32> to vector<2x1x240xf32>
    tpu.vector_store %arg12[%c0_37, %c6, %c0_38], %75 {strides = array<i32>} : memref<2x12x240xf32, #tpu.memory_space<vmem>>, vector<2x1x240xf32>,
    %76 = vector.extract_strided_slice %19 {offsets = [0, 14, 0], sizes = [2, 1, 240], strides = [1, 1, 1]} : vector<2x24x240xf32> to vector<2x1x240xf32>
    %77 = vector.shape_cast %76 : vector<2x1x240xf32> to vector<2x240xf32>
    %78 = vector.extract_strided_slice %19 {offsets = [0, 15, 0], sizes = [2, 1, 240], strides = [1, 1, 1]} : vector<2x24x240xf32> to vector<2x1x240xf32>
    %79 = vector.shape_cast %78 : vector<2x1x240xf32> to vector<2x240xf32>
    %80 = arith.maximumf %77, %79 : vector<2x240xf32>
    %c0_39 = arith.constant 0 : index
    %c7 = arith.constant 7 : index
    %c0_40 = arith.constant 0 : index
    %81 = vector.load %arg12[%c0_39, %c7, %c0_40] : memref<2x12x240xf32, #tpu.memory_space<vmem>>, vector<2x1x240xf32>
    %82 = vector.shape_cast %81 : vector<2x1x240xf32> to vector<2x240xf32>
    %83 = vector.shape_cast %80 : vector<2x240xf32> to vector<2x1x240xf32>
    tpu.vector_store %arg12[%c0_39, %c7, %c0_40], %83 {strides = array<i32>} : memref<2x12x240xf32, #tpu.memory_space<vmem>>, vector<2x1x240xf32>,
    %84 = vector.extract_strided_slice %19 {offsets = [0, 16, 0], sizes = [2, 1, 240], strides = [1, 1, 1]} : vector<2x24x240xf32> to vector<2x1x240xf32>
    %85 = vector.shape_cast %84 : vector<2x1x240xf32> to vector<2x240xf32>
    %86 = vector.extract_strided_slice %19 {offsets = [0, 17, 0], sizes = [2, 1, 240], strides = [1, 1, 1]} : vector<2x24x240xf32> to vector<2x1x240xf32>
    %87 = vector.shape_cast %86 : vector<2x1x240xf32> to vector<2x240xf32>
    %88 = arith.maximumf %85, %87 : vector<2x240xf32>
    %c0_41 = arith.constant 0 : index
    %c8 = arith.constant 8 : index
    %c0_42 = arith.constant 0 : index
    %89 = vector.load %arg12[%c0_41, %c8, %c0_42] : memref<2x12x240xf32, #tpu.memory_space<vmem>>, vector<2x1x240xf32>
    %90 = vector.shape_cast %89 : vector<2x1x240xf32> to vector<2x240xf32>
    %91 = vector.shape_cast %88 : vector<2x240xf32> to vector<2x1x240xf32>
    tpu.vector_store %arg12[%c0_41, %c8, %c0_42], %91 {strides = array<i32>} : memref<2x12x240xf32, #tpu.memory_space<vmem>>, vector<2x1x240xf32>,
    %92 = vector.extract_strided_slice %19 {offsets = [0, 18, 0], sizes = [2, 1, 240], strides = [1, 1, 1]} : vector<2x24x240xf32> to vector<2x1x240xf32>
    %93 = vector.shape_cast %92 : vector<2x1x240xf32> to vector<2x240xf32>
    %94 = vector.extract_strided_slice %19 {offsets = [0, 19, 0], sizes = [2, 1, 240], strides = [1, 1, 1]} : vector<2x24x240xf32> to vector<2x1x240xf32>
    %95 = vector.shape_cast %94 : vector<2x1x240xf32> to vector<2x240xf32>
    %96 = arith.maximumf %93, %95 : vector<2x240xf32>
    %c0_43 = arith.constant 0 : index
    %c9 = arith.constant 9 : index
    %c0_44 = arith.constant 0 : index
    %97 = vector.load %arg12[%c0_43, %c9, %c0_44] : memref<2x12x240xf32, #tpu.memory_space<vmem>>, vector<2x1x240xf32>
    %98 = vector.shape_cast %97 : vector<2x1x240xf32> to vector<2x240xf32>
    %99 = vector.shape_cast %96 : vector<2x240xf32> to vector<2x1x240xf32>
    tpu.vector_store %arg12[%c0_43, %c9, %c0_44], %99 {strides = array<i32>} : memref<2x12x240xf32, #tpu.memory_space<vmem>>, vector<2x1x240xf32>,
    %100 = vector.extract_strided_slice %19 {offsets = [0, 20, 0], sizes = [2, 1, 240], strides = [1, 1, 1]} : vector<2x24x240xf32> to vector<2x1x240xf32>
    %101 = vector.shape_cast %100 : vector<2x1x240xf32> to vector<2x240xf32>
    %102 = vector.extract_strided_slice %19 {offsets = [0, 21, 0], sizes = [2, 1, 240], strides = [1, 1, 1]} : vector<2x24x240xf32> to vector<2x1x240xf32>
    %103 = vector.shape_cast %102 : vector<2x1x240xf32> to vector<2x240xf32>
    %104 = arith.maximumf %101, %103 : vector<2x240xf32>
    %c0_45 = arith.constant 0 : index
    %c10 = arith.constant 10 : index
    %c0_46 = arith.constant 0 : index
    %105 = vector.load %arg12[%c0_45, %c10, %c0_46] : memref<2x12x240xf32, #tpu.memory_space<vmem>>, vector<2x1x240xf32>
    %106 = vector.shape_cast %105 : vector<2x1x240xf32> to vector<2x240xf32>
    %107 = vector.shape_cast %104 : vector<2x240xf32> to vector<2x1x240xf32>
    tpu.vector_store %arg12[%c0_45, %c10, %c0_46], %107 {strides = array<i32>} : memref<2x12x240xf32, #tpu.memory_space<vmem>>, vector<2x1x240xf32>,
    %108 = vector.extract_strided_slice %19 {offsets = [0, 22, 0], sizes = [2, 1, 240], strides = [1, 1, 1]} : vector<2x24x240xf32> to vector<2x1x240xf32>
    %109 = vector.shape_cast %108 : vector<2x1x240xf32> to vector<2x240xf32>
    %110 = vector.extract_strided_slice %19 {offsets = [0, 23, 0], sizes = [2, 1, 240], strides = [1, 1, 1]} : vector<2x24x240xf32> to vector<2x1x240xf32>
    %111 = vector.shape_cast %110 : vector<2x1x240xf32> to vector<2x240xf32>
    %112 = arith.maximumf %109, %111 : vector<2x240xf32>
    %c0_47 = arith.constant 0 : index
    %c11 = arith.constant 11 : index
    %c0_48 = arith.constant 0 : index
    %113 = vector.load %arg12[%c0_47, %c11, %c0_48] : memref<2x12x240xf32, #tpu.memory_space<vmem>>, vector<2x1x240xf32>
    %114 = vector.shape_cast %113 : vector<2x1x240xf32> to vector<2x240xf32>
    %115 = vector.shape_cast %112 : vector<2x240xf32> to vector<2x1x240xf32>
    tpu.vector_store %arg12[%c0_47, %c11, %c0_48], %115 {strides = array<i32>} : memref<2x12x240xf32, #tpu.memory_space<vmem>>, vector<2x1x240xf32>,
    %c0_49 = arith.constant 0 : index
    %c0_50 = arith.constant 0 : index
    %c0_51 = arith.constant 0 : index
    %116 = vector.load %arg12[%c0_49, %c0_50, %c0_51] : memref<2x12x240xf32, #tpu.memory_space<vmem>>, vector<2x12x10xf32>
    %c0_52 = arith.constant 0 : index
    %c0_53 = arith.constant 0 : index
    %c10_54 = arith.constant 10 : index
    %117 = vector.load %arg12[%c0_52, %c0_53, %c10_54] : memref<2x12x240xf32, #tpu.memory_space<vmem>>, vector<2x12x10xf32>
    %118 = arith.maximumf %116, %117 : vector<2x12x10xf32>
    %c0_55 = arith.constant 0 : index
    %c0_56 = arith.constant 0 : index
    %119 = vector.load %arg3[%c0_55, %c0_56] : memref<1x10xf32, #tpu.memory_space<vmem>>, vector<1x10xf32>
    %120 = vector.shape_cast %119 : vector<1x10xf32> to vector<1x1x10xf32>
    %121 = vector.broadcast %120 : vector<1x1x10xf32> to vector<2x12x10xf32>
    %122 = arith.addf %118, %121 : vector<2x12x10xf32>
    %cst_57 = arith.constant 0.000000e+00 : f32
    %123 = vector.broadcast %cst_57 : f32 to vector<2x12x10xf32>
    %124 = arith.maximumf %122, %123 : vector<2x12x10xf32>
    %c0_58 = arith.constant 0 : index
    %c0_59 = arith.constant 0 : index
    %c0_60 = arith.constant 0 : index
    %125 = vector.load %arg13[%c0_58, %c0_59, %c0_60] : memref<2x12x120xf32, #tpu.memory_space<vmem>>, vector<2x12x10xf32>
    tpu.vector_store %arg13[%c0_58, %c0_59, %c0_60], %124 {strides = array<i32>} : memref<2x12x120xf32, #tpu.memory_space<vmem>>, vector<2x12x10xf32>,
    %c0_61 = arith.constant 0 : index
    %c0_62 = arith.constant 0 : index
    %c20 = arith.constant 20 : index
    %126 = vector.load %arg12[%c0_61, %c0_62, %c20] : memref<2x12x240xf32, #tpu.memory_space<vmem>>, vector<2x12x10xf32>
    %c0_63 = arith.constant 0 : index
    %c0_64 = arith.constant 0 : index
    %c30 = arith.constant 30 : index
    %127 = vector.load %arg12[%c0_63, %c0_64, %c30] : memref<2x12x240xf32, #tpu.memory_space<vmem>>, vector<2x12x10xf32>
    %128 = arith.maximumf %126, %127 : vector<2x12x10xf32>
    %c0_65 = arith.constant 0 : index
    %c0_66 = arith.constant 0 : index
    %129 = vector.load %arg3[%c0_65, %c0_66] : memref<1x10xf32, #tpu.memory_space<vmem>>, vector<1x10xf32>
    %130 = vector.shape_cast %129 : vector<1x10xf32> to vector<1x1x10xf32>
    %131 = vector.broadcast %130 : vector<1x1x10xf32> to vector<2x12x10xf32>
    %132 = arith.addf %128, %131 : vector<2x12x10xf32>
    %cst_67 = arith.constant 0.000000e+00 : f32
    %133 = vector.broadcast %cst_67 : f32 to vector<2x12x10xf32>
    %134 = arith.maximumf %132, %133 : vector<2x12x10xf32>
    %c0_68 = arith.constant 0 : index
    %c0_69 = arith.constant 0 : index
    %c10_70 = arith.constant 10 : index
    %135 = vector.load %arg13[%c0_68, %c0_69, %c10_70] : memref<2x12x120xf32, #tpu.memory_space<vmem>>, vector<2x12x10xf32>
    tpu.vector_store %arg13[%c0_68, %c0_69, %c10_70], %134 {strides = array<i32>} : memref<2x12x120xf32, #tpu.memory_space<vmem>>, vector<2x12x10xf32>,
    %c0_71 = arith.constant 0 : index
    %c0_72 = arith.constant 0 : index
    %c40 = arith.constant 40 : index
    %136 = vector.load %arg12[%c0_71, %c0_72, %c40] : memref<2x12x240xf32, #tpu.memory_space<vmem>>, vector<2x12x10xf32>
    %c0_73 = arith.constant 0 : index
    %c0_74 = arith.constant 0 : index
    %c50 = arith.constant 50 : index
    %137 = vector.load %arg12[%c0_73, %c0_74, %c50] : memref<2x12x240xf32, #tpu.memory_space<vmem>>, vector<2x12x10xf32>
    %138 = arith.maximumf %136, %137 : vector<2x12x10xf32>
    %c0_75 = arith.constant 0 : index
    %c0_76 = arith.constant 0 : index
    %139 = vector.load %arg3[%c0_75, %c0_76] : memref<1x10xf32, #tpu.memory_space<vmem>>, vector<1x10xf32>
    %140 = vector.shape_cast %139 : vector<1x10xf32> to vector<1x1x10xf32>
    %141 = vector.broadcast %140 : vector<1x1x10xf32> to vector<2x12x10xf32>
    %142 = arith.addf %138, %141 : vector<2x12x10xf32>
    %cst_77 = arith.constant 0.000000e+00 : f32
    %143 = vector.broadcast %cst_77 : f32 to vector<2x12x10xf32>
    %144 = arith.maximumf %142, %143 : vector<2x12x10xf32>
    %c0_78 = arith.constant 0 : index
    %c0_79 = arith.constant 0 : index
    %c20_80 = arith.constant 20 : index
    %145 = vector.load %arg13[%c0_78, %c0_79, %c20_80] : memref<2x12x120xf32, #tpu.memory_space<vmem>>, vector<2x12x10xf32>
    tpu.vector_store %arg13[%c0_78, %c0_79, %c20_80], %144 {strides = array<i32>} : memref<2x12x120xf32, #tpu.memory_space<vmem>>, vector<2x12x10xf32>,
    %c0_81 = arith.constant 0 : index
    %c0_82 = arith.constant 0 : index
    %c60 = arith.constant 60 : index
    %146 = vector.load %arg12[%c0_81, %c0_82, %c60] : memref<2x12x240xf32, #tpu.memory_space<vmem>>, vector<2x12x10xf32>
    %c0_83 = arith.constant 0 : index
    %c0_84 = arith.constant 0 : index
    %c70 = arith.constant 70 : index
    %147 = vector.load %arg12[%c0_83, %c0_84, %c70] : memref<2x12x240xf32, #tpu.memory_space<vmem>>, vector<2x12x10xf32>
    %148 = arith.maximumf %146, %147 : vector<2x12x10xf32>
    %c0_85 = arith.constant 0 : index
    %c0_86 = arith.constant 0 : index
    %149 = vector.load %arg3[%c0_85, %c0_86] : memref<1x10xf32, #tpu.memory_space<vmem>>, vector<1x10xf32>
    %150 = vector.shape_cast %149 : vector<1x10xf32> to vector<1x1x10xf32>
    %151 = vector.broadcast %150 : vector<1x1x10xf32> to vector<2x12x10xf32>
    %152 = arith.addf %148, %151 : vector<2x12x10xf32>
    %cst_87 = arith.constant 0.000000e+00 : f32
    %153 = vector.broadcast %cst_87 : f32 to vector<2x12x10xf32>
    %154 = arith.maximumf %152, %153 : vector<2x12x10xf32>
    %c0_88 = arith.constant 0 : index
    %c0_89 = arith.constant 0 : index
    %c30_90 = arith.constant 30 : index
    %155 = vector.load %arg13[%c0_88, %c0_89, %c30_90] : memref<2x12x120xf32, #tpu.memory_space<vmem>>, vector<2x12x10xf32>
    tpu.vector_store %arg13[%c0_88, %c0_89, %c30_90], %154 {strides = array<i32>} : memref<2x12x120xf32, #tpu.memory_space<vmem>>, vector<2x12x10xf32>,
    %c0_91 = arith.constant 0 : index
    %c0_92 = arith.constant 0 : index
    %c80 = arith.constant 80 : index
    %156 = vector.load %arg12[%c0_91, %c0_92, %c80] : memref<2x12x240xf32, #tpu.memory_space<vmem>>, vector<2x12x10xf32>
    %c0_93 = arith.constant 0 : index
    %c0_94 = arith.constant 0 : index
    %c90 = arith.constant 90 : index
    %157 = vector.load %arg12[%c0_93, %c0_94, %c90] : memref<2x12x240xf32, #tpu.memory_space<vmem>>, vector<2x12x10xf32>
    %158 = arith.maximumf %156, %157 : vector<2x12x10xf32>
    %c0_95 = arith.constant 0 : index
    %c0_96 = arith.constant 0 : index
    %159 = vector.load %arg3[%c0_95, %c0_96] : memref<1x10xf32, #tpu.memory_space<vmem>>, vector<1x10xf32>
    %160 = vector.shape_cast %159 : vector<1x10xf32> to vector<1x1x10xf32>
    %161 = vector.broadcast %160 : vector<1x1x10xf32> to vector<2x12x10xf32>
    %162 = arith.addf %158, %161 : vector<2x12x10xf32>
    %cst_97 = arith.constant 0.000000e+00 : f32
    %163 = vector.broadcast %cst_97 : f32 to vector<2x12x10xf32>
    %164 = arith.maximumf %162, %163 : vector<2x12x10xf32>
    %c0_98 = arith.constant 0 : index
    %c0_99 = arith.constant 0 : index
    %c40_100 = arith.constant 40 : index
    %165 = vector.load %arg13[%c0_98, %c0_99, %c40_100] : memref<2x12x120xf32, #tpu.memory_space<vmem>>, vector<2x12x10xf32>
    tpu.vector_store %arg13[%c0_98, %c0_99, %c40_100], %164 {strides = array<i32>} : memref<2x12x120xf32, #tpu.memory_space<vmem>>, vector<2x12x10xf32>,
    %c0_101 = arith.constant 0 : index
    %c0_102 = arith.constant 0 : index
    %c100 = arith.constant 100 : index
    %166 = vector.load %arg12[%c0_101, %c0_102, %c100] : memref<2x12x240xf32, #tpu.memory_space<vmem>>, vector<2x12x10xf32>
    %c0_103 = arith.constant 0 : index
    %c0_104 = arith.constant 0 : index
    %c110 = arith.constant 110 : index
    %167 = vector.load %arg12[%c0_103, %c0_104, %c110] : memref<2x12x240xf32, #tpu.memory_space<vmem>>, vector<2x12x10xf32>
    %168 = arith.maximumf %166, %167 : vector<2x12x10xf32>
    %c0_105 = arith.constant 0 : index
    %c0_106 = arith.constant 0 : index
    %169 = vector.load %arg3[%c0_105, %c0_106] : memref<1x10xf32, #tpu.memory_space<vmem>>, vector<1x10xf32>
    %170 = vector.shape_cast %169 : vector<1x10xf32> to vector<1x1x10xf32>
    %171 = vector.broadcast %170 : vector<1x1x10xf32> to vector<2x12x10xf32>
    %172 = arith.addf %168, %171 : vector<2x12x10xf32>
    %cst_107 = arith.constant 0.000000e+00 : f32
    %173 = vector.broadcast %cst_107 : f32 to vector<2x12x10xf32>
    %174 = arith.maximumf %172, %173 : vector<2x12x10xf32>
    %c0_108 = arith.constant 0 : index
    %c0_109 = arith.constant 0 : index
    %c50_110 = arith.constant 50 : index
    %175 = vector.load %arg13[%c0_108, %c0_109, %c50_110] : memref<2x12x120xf32, #tpu.memory_space<vmem>>, vector<2x12x10xf32>
    tpu.vector_store %arg13[%c0_108, %c0_109, %c50_110], %174 {strides = array<i32>} : memref<2x12x120xf32, #tpu.memory_space<vmem>>, vector<2x12x10xf32>,
    %c0_111 = arith.constant 0 : index
    %c0_112 = arith.constant 0 : index
    %c120 = arith.constant 120 : index
    %176 = vector.load %arg12[%c0_111, %c0_112, %c120] : memref<2x12x240xf32, #tpu.memory_space<vmem>>, vector<2x12x10xf32>
    %c0_113 = arith.constant 0 : index
    %c0_114 = arith.constant 0 : index
    %c130 = arith.constant 130 : index
    %177 = vector.load %arg12[%c0_113, %c0_114, %c130] : memref<2x12x240xf32, #tpu.memory_space<vmem>>, vector<2x12x10xf32>
    %178 = arith.maximumf %176, %177 : vector<2x12x10xf32>
    %c0_115 = arith.constant 0 : index
    %c0_116 = arith.constant 0 : index
    %179 = vector.load %arg3[%c0_115, %c0_116] : memref<1x10xf32, #tpu.memory_space<vmem>>, vector<1x10xf32>
    %180 = vector.shape_cast %179 : vector<1x10xf32> to vector<1x1x10xf32>
    %181 = vector.broadcast %180 : vector<1x1x10xf32> to vector<2x12x10xf32>
    %182 = arith.addf %178, %181 : vector<2x12x10xf32>
    %cst_117 = arith.constant 0.000000e+00 : f32
    %183 = vector.broadcast %cst_117 : f32 to vector<2x12x10xf32>
    %184 = arith.maximumf %182, %183 : vector<2x12x10xf32>
    %c0_118 = arith.constant 0 : index
    %c0_119 = arith.constant 0 : index
    %c60_120 = arith.constant 60 : index
    %185 = vector.load %arg13[%c0_118, %c0_119, %c60_120] : memref<2x12x120xf32, #tpu.memory_space<vmem>>, vector<2x12x10xf32>
    tpu.vector_store %arg13[%c0_118, %c0_119, %c60_120], %184 {strides = array<i32>} : memref<2x12x120xf32, #tpu.memory_space<vmem>>, vector<2x12x10xf32>,
    %c0_121 = arith.constant 0 : index
    %c0_122 = arith.constant 0 : index
    %c140 = arith.constant 140 : index
    %186 = vector.load %arg12[%c0_121, %c0_122, %c140] : memref<2x12x240xf32, #tpu.memory_space<vmem>>, vector<2x12x10xf32>
    %c0_123 = arith.constant 0 : index
    %c0_124 = arith.constant 0 : index
    %c150 = arith.constant 150 : index
    %187 = vector.load %arg12[%c0_123, %c0_124, %c150] : memref<2x12x240xf32, #tpu.memory_space<vmem>>, vector<2x12x10xf32>
    %188 = arith.maximumf %186, %187 : vector<2x12x10xf32>
    %c0_125 = arith.constant 0 : index
    %c0_126 = arith.constant 0 : index
    %189 = vector.load %arg3[%c0_125, %c0_126] : memref<1x10xf32, #tpu.memory_space<vmem>>, vector<1x10xf32>
    %190 = vector.shape_cast %189 : vector<1x10xf32> to vector<1x1x10xf32>
    %191 = vector.broadcast %190 : vector<1x1x10xf32> to vector<2x12x10xf32>
    %192 = arith.addf %188, %191 : vector<2x12x10xf32>
    %cst_127 = arith.constant 0.000000e+00 : f32
    %193 = vector.broadcast %cst_127 : f32 to vector<2x12x10xf32>
    %194 = arith.maximumf %192, %193 : vector<2x12x10xf32>
    %c0_128 = arith.constant 0 : index
    %c0_129 = arith.constant 0 : index
    %c70_130 = arith.constant 70 : index
    %195 = vector.load %arg13[%c0_128, %c0_129, %c70_130] : memref<2x12x120xf32, #tpu.memory_space<vmem>>, vector<2x12x10xf32>
    tpu.vector_store %arg13[%c0_128, %c0_129, %c70_130], %194 {strides = array<i32>} : memref<2x12x120xf32, #tpu.memory_space<vmem>>, vector<2x12x10xf32>,
    %c0_131 = arith.constant 0 : index
    %c0_132 = arith.constant 0 : index
    %c160 = arith.constant 160 : index
    %196 = vector.load %arg12[%c0_131, %c0_132, %c160] : memref<2x12x240xf32, #tpu.memory_space<vmem>>, vector<2x12x10xf32>
    %c0_133 = arith.constant 0 : index
    %c0_134 = arith.constant 0 : index
    %c170 = arith.constant 170 : index
    %197 = vector.load %arg12[%c0_133, %c0_134, %c170] : memref<2x12x240xf32, #tpu.memory_space<vmem>>, vector<2x12x10xf32>
    %198 = arith.maximumf %196, %197 : vector<2x12x10xf32>
    %c0_135 = arith.constant 0 : index
    %c0_136 = arith.constant 0 : index
    %199 = vector.load %arg3[%c0_135, %c0_136] : memref<1x10xf32, #tpu.memory_space<vmem>>, vector<1x10xf32>
    %200 = vector.shape_cast %199 : vector<1x10xf32> to vector<1x1x10xf32>
    %201 = vector.broadcast %200 : vector<1x1x10xf32> to vector<2x12x10xf32>
    %202 = arith.addf %198, %201 : vector<2x12x10xf32>
    %cst_137 = arith.constant 0.000000e+00 : f32
    %203 = vector.broadcast %cst_137 : f32 to vector<2x12x10xf32>
    %204 = arith.maximumf %202, %203 : vector<2x12x10xf32>
    %c0_138 = arith.constant 0 : index
    %c0_139 = arith.constant 0 : index
    %c80_140 = arith.constant 80 : index
    %205 = vector.load %arg13[%c0_138, %c0_139, %c80_140] : memref<2x12x120xf32, #tpu.memory_space<vmem>>, vector<2x12x10xf32>
    tpu.vector_store %arg13[%c0_138, %c0_139, %c80_140], %204 {strides = array<i32>} : memref<2x12x120xf32, #tpu.memory_space<vmem>>, vector<2x12x10xf32>,
    %c0_141 = arith.constant 0 : index
    %c0_142 = arith.constant 0 : index
    %c180 = arith.constant 180 : index
    %206 = vector.load %arg12[%c0_141, %c0_142, %c180] : memref<2x12x240xf32, #tpu.memory_space<vmem>>, vector<2x12x10xf32>
    %c0_143 = arith.constant 0 : index
    %c0_144 = arith.constant 0 : index
    %c190 = arith.constant 190 : index
    %207 = vector.load %arg12[%c0_143, %c0_144, %c190] : memref<2x12x240xf32, #tpu.memory_space<vmem>>, vector<2x12x10xf32>
    %208 = arith.maximumf %206, %207 : vector<2x12x10xf32>
    %c0_145 = arith.constant 0 : index
    %c0_146 = arith.constant 0 : index
    %209 = vector.load %arg3[%c0_145, %c0_146] : memref<1x10xf32, #tpu.memory_space<vmem>>, vector<1x10xf32>
    %210 = vector.shape_cast %209 : vector<1x10xf32> to vector<1x1x10xf32>
    %211 = vector.broadcast %210 : vector<1x1x10xf32> to vector<2x12x10xf32>
    %212 = arith.addf %208, %211 : vector<2x12x10xf32>
    %cst_147 = arith.constant 0.000000e+00 : f32
    %213 = vector.broadcast %cst_147 : f32 to vector<2x12x10xf32>
    %214 = arith.maximumf %212, %213 : vector<2x12x10xf32>
    %c0_148 = arith.constant 0 : index
    %c0_149 = arith.constant 0 : index
    %c90_150 = arith.constant 90 : index
    %215 = vector.load %arg13[%c0_148, %c0_149, %c90_150] : memref<2x12x120xf32, #tpu.memory_space<vmem>>, vector<2x12x10xf32>
    tpu.vector_store %arg13[%c0_148, %c0_149, %c90_150], %214 {strides = array<i32>} : memref<2x12x120xf32, #tpu.memory_space<vmem>>, vector<2x12x10xf32>,
    %c0_151 = arith.constant 0 : index
    %c0_152 = arith.constant 0 : index
    %c200 = arith.constant 200 : index
    %216 = vector.load %arg12[%c0_151, %c0_152, %c200] : memref<2x12x240xf32, #tpu.memory_space<vmem>>, vector<2x12x10xf32>
    %c0_153 = arith.constant 0 : index
    %c0_154 = arith.constant 0 : index
    %c210 = arith.constant 210 : index
    %217 = vector.load %arg12[%c0_153, %c0_154, %c210] : memref<2x12x240xf32, #tpu.memory_space<vmem>>, vector<2x12x10xf32>
    %218 = arith.maximumf %216, %217 : vector<2x12x10xf32>
    %c0_155 = arith.constant 0 : index
    %c0_156 = arith.constant 0 : index
    %219 = vector.load %arg3[%c0_155, %c0_156] : memref<1x10xf32, #tpu.memory_space<vmem>>, vector<1x10xf32>
    %220 = vector.shape_cast %219 : vector<1x10xf32> to vector<1x1x10xf32>
    %221 = vector.broadcast %220 : vector<1x1x10xf32> to vector<2x12x10xf32>
    %222 = arith.addf %218, %221 : vector<2x12x10xf32>
    %cst_157 = arith.constant 0.000000e+00 : f32
    %223 = vector.broadcast %cst_157 : f32 to vector<2x12x10xf32>
    %224 = arith.maximumf %222, %223 : vector<2x12x10xf32>
    %c0_158 = arith.constant 0 : index
    %c0_159 = arith.constant 0 : index
    %c100_160 = arith.constant 100 : index
    %225 = vector.load %arg13[%c0_158, %c0_159, %c100_160] : memref<2x12x120xf32, #tpu.memory_space<vmem>>, vector<2x12x10xf32>
    tpu.vector_store %arg13[%c0_158, %c0_159, %c100_160], %224 {strides = array<i32>} : memref<2x12x120xf32, #tpu.memory_space<vmem>>, vector<2x12x10xf32>,
    %c0_161 = arith.constant 0 : index
    %c0_162 = arith.constant 0 : index
    %c220 = arith.constant 220 : index
    %226 = vector.load %arg12[%c0_161, %c0_162, %c220] : memref<2x12x240xf32, #tpu.memory_space<vmem>>, vector<2x12x10xf32>
    %c0_163 = arith.constant 0 : index
    %c0_164 = arith.constant 0 : index
    %c230 = arith.constant 230 : index
    %227 = vector.load %arg12[%c0_163, %c0_164, %c230] : memref<2x12x240xf32, #tpu.memory_space<vmem>>, vector<2x12x10xf32>
    %228 = arith.maximumf %226, %227 : vector<2x12x10xf32>
    %c0_165 = arith.constant 0 : index
    %c0_166 = arith.constant 0 : index
    %229 = vector.load %arg3[%c0_165, %c0_166] : memref<1x10xf32, #tpu.memory_space<vmem>>, vector<1x10xf32>
    %230 = vector.shape_cast %229 : vector<1x10xf32> to vector<1x1x10xf32>
    %231 = vector.broadcast %230 : vector<1x1x10xf32> to vector<2x12x10xf32>
    %232 = arith.addf %228, %231 : vector<2x12x10xf32>
    %cst_167 = arith.constant 0.000000e+00 : f32
    %233 = vector.broadcast %cst_167 : f32 to vector<2x12x10xf32>
    %234 = arith.maximumf %232, %233 : vector<2x12x10xf32>
    %c0_168 = arith.constant 0 : index
    %c0_169 = arith.constant 0 : index
    %c110_170 = arith.constant 110 : index
    %235 = vector.load %arg13[%c0_168, %c0_169, %c110_170] : memref<2x12x120xf32, #tpu.memory_space<vmem>>, vector<2x12x10xf32>
    tpu.vector_store %arg13[%c0_168, %c0_169, %c110_170], %234 {strides = array<i32>} : memref<2x12x120xf32, #tpu.memory_space<vmem>>, vector<2x12x10xf32>,
    %c0_171 = arith.constant 0 : index
    %c0_172 = arith.constant 0 : index
    %c0_173 = arith.constant 0 : index
    %236 = vector.load %arg13[%c0_171, %c0_172, %c0_173] : memref<2x12x120xf32, #tpu.memory_space<vmem>>, vector<2x8x120xf32>
    %237 = vector.shape_cast %236 : vector<2x8x120xf32> to vector<16x120xf32>
    %c0_174 = arith.constant 0 : index
    %c0_175 = arith.constant 0 : index
    %238 = vector.load %arg14[%c0_174, %c0_175] : memref<16x600xf32, #tpu.memory_space<vmem>>, vector<16x120xf32>
    tpu.vector_store %arg14[%c0_174, %c0_175], %237 {strides = array<i32>} : memref<16x600xf32, #tpu.memory_space<vmem>>, vector<16x120xf32>,
    %c0_176 = arith.constant 0 : index
    %c1_177 = arith.constant 1 : index
    %c0_178 = arith.constant 0 : index
    %239 = vector.load %arg13[%c0_176, %c1_177, %c0_178] : memref<2x12x120xf32, #tpu.memory_space<vmem>>, vector<2x8x120xf32>
    %240 = vector.shape_cast %239 : vector<2x8x120xf32> to vector<16x120xf32>
    %c0_179 = arith.constant 0 : index
    %c120_180 = arith.constant 120 : index
    %241 = vector.load %arg14[%c0_179, %c120_180] : memref<16x600xf32, #tpu.memory_space<vmem>>, vector<16x120xf32>
    tpu.vector_store %arg14[%c0_179, %c120_180], %240 {strides = array<i32>} : memref<16x600xf32, #tpu.memory_space<vmem>>, vector<16x120xf32>,
    %c0_181 = arith.constant 0 : index
    %c2_182 = arith.constant 2 : index
    %c0_183 = arith.constant 0 : index
    %242 = vector.load %arg13[%c0_181, %c2_182, %c0_183] : memref<2x12x120xf32, #tpu.memory_space<vmem>>, vector<2x8x120xf32>
    %243 = vector.shape_cast %242 : vector<2x8x120xf32> to vector<16x120xf32>
    %c0_184 = arith.constant 0 : index
    %c240 = arith.constant 240 : index
    %244 = vector.load %arg14[%c0_184, %c240] : memref<16x600xf32, #tpu.memory_space<vmem>>, vector<16x120xf32>
    tpu.vector_store %arg14[%c0_184, %c240], %243 {strides = array<i32>} : memref<16x600xf32, #tpu.memory_space<vmem>>, vector<16x120xf32>,
    %c0_185 = arith.constant 0 : index
    %c3_186 = arith.constant 3 : index
    %c0_187 = arith.constant 0 : index
    %245 = vector.load %arg13[%c0_185, %c3_186, %c0_187] : memref<2x12x120xf32, #tpu.memory_space<vmem>>, vector<2x8x120xf32>
    %246 = vector.shape_cast %245 : vector<2x8x120xf32> to vector<16x120xf32>
    %c0_188 = arith.constant 0 : index
    %c360 = arith.constant 360 : index
    %247 = vector.load %arg14[%c0_188, %c360] : memref<16x600xf32, #tpu.memory_space<vmem>>, vector<16x120xf32>
    tpu.vector_store %arg14[%c0_188, %c360], %246 {strides = array<i32>} : memref<16x600xf32, #tpu.memory_space<vmem>>, vector<16x120xf32>,
    %c0_189 = arith.constant 0 : index
    %c4_190 = arith.constant 4 : index
    %c0_191 = arith.constant 0 : index
    %248 = vector.load %arg13[%c0_189, %c4_190, %c0_191] : memref<2x12x120xf32, #tpu.memory_space<vmem>>, vector<2x8x120xf32>
    %249 = vector.shape_cast %248 : vector<2x8x120xf32> to vector<16x120xf32>
    %c0_192 = arith.constant 0 : index
    %c480 = arith.constant 480 : index
    %250 = vector.load %arg14[%c0_192, %c480] : memref<16x600xf32, #tpu.memory_space<vmem>>, vector<16x120xf32>
    tpu.vector_store %arg14[%c0_192, %c480], %249 {strides = array<i32>} : memref<16x600xf32, #tpu.memory_space<vmem>>, vector<16x120xf32>,
    %c0_193 = arith.constant 0 : index
    %c0_194 = arith.constant 0 : index
    %251 = vector.load %arg14[%c0_193, %c0_194] : memref<16x600xf32, #tpu.memory_space<vmem>>, vector<16x600xf32>
    %c0_195 = arith.constant 0 : index
    %c0_196 = arith.constant 0 : index
    %252 = vector.load %arg4[%c0_195, %c0_196] : memref<600x160xbf16, #tpu.memory_space<vmem>>, vector<600x160xbf16>
    %253 = arith.truncf %251 : vector<16x600xf32> to vector<16x600xbf16>
    %cst_197 = arith.constant dense<0.000000e+00> : vector<16x160xf32>
    %254 = tpu.matmul %253, %252, %cst_197 {dimension_numbers = #tpu.dot_dimension_numbers<[1], [0], [0], [1], [0, 0, 1, 1], [], []>} : vector<16x600xbf16>, vector<600x160xbf16>, vector<16x160xf32> -> vector<16x160xf32>
    %255 = vector.shape_cast %254 : vector<16x160xf32> to vector<2x8x160xf32>
    %256 = vector.extract_strided_slice %255 {offsets = [0, 0, 0], sizes = [2, 1, 160], strides = [1, 1, 1]} : vector<2x8x160xf32> to vector<2x1x160xf32>
    %257 = vector.shape_cast %256 : vector<2x1x160xf32> to vector<2x160xf32>
    %258 = vector.extract_strided_slice %255 {offsets = [0, 1, 0], sizes = [2, 1, 160], strides = [1, 1, 1]} : vector<2x8x160xf32> to vector<2x1x160xf32>
    %259 = vector.shape_cast %258 : vector<2x1x160xf32> to vector<2x160xf32>
    %260 = arith.maximumf %257, %259 : vector<2x160xf32>
    %261 = vector.extract_strided_slice %260 {offsets = [0, 0], sizes = [2, 20], strides = [1, 1]} : vector<2x160xf32> to vector<2x20xf32>
    %262 = vector.extract_strided_slice %260 {offsets = [0, 20], sizes = [2, 20], strides = [1, 1]} : vector<2x160xf32> to vector<2x20xf32>
    %263 = arith.maximumf %261, %262 : vector<2x20xf32>
    %c0_198 = arith.constant 0 : index
    %c0_199 = arith.constant 0 : index
    %264 = vector.load %arg5[%c0_198, %c0_199] : memref<1x20xf32, #tpu.memory_space<vmem>>, vector<1x20xf32>
    %265 = vector.broadcast %264 : vector<1x20xf32> to vector<2x20xf32>
    %266 = arith.addf %263, %265 : vector<2x20xf32>
    %cst_200 = arith.constant 0.000000e+00 : f32
    %267 = vector.broadcast %cst_200 : f32 to vector<2x20xf32>
    %268 = arith.maximumf %266, %267 : vector<2x20xf32>
    %c0_201 = arith.constant 0 : index
    %c0_202 = arith.constant 0 : index
    %269 = vector.load %arg15[%c0_201, %c0_202] : memref<2x320xf32, #tpu.memory_space<vmem>>, vector<2x20xf32>
    tpu.vector_store %arg15[%c0_201, %c0_202], %268 {strides = array<i32>} : memref<2x320xf32, #tpu.memory_space<vmem>>, vector<2x20xf32>,
    %270 = vector.extract_strided_slice %260 {offsets = [0, 40], sizes = [2, 20], strides = [1, 1]} : vector<2x160xf32> to vector<2x20xf32>
    %271 = vector.extract_strided_slice %260 {offsets = [0, 60], sizes = [2, 20], strides = [1, 1]} : vector<2x160xf32> to vector<2x20xf32>
    %272 = arith.maximumf %270, %271 : vector<2x20xf32>
    %c0_203 = arith.constant 0 : index
    %c0_204 = arith.constant 0 : index
    %273 = vector.load %arg5[%c0_203, %c0_204] : memref<1x20xf32, #tpu.memory_space<vmem>>, vector<1x20xf32>
    %274 = vector.broadcast %273 : vector<1x20xf32> to vector<2x20xf32>
    %275 = arith.addf %272, %274 : vector<2x20xf32>
    %cst_205 = arith.constant 0.000000e+00 : f32
    %276 = vector.broadcast %cst_205 : f32 to vector<2x20xf32>
    %277 = arith.maximumf %275, %276 : vector<2x20xf32>
    %c0_206 = arith.constant 0 : index
    %c20_207 = arith.constant 20 : index
    %278 = vector.load %arg15[%c0_206, %c20_207] : memref<2x320xf32, #tpu.memory_space<vmem>>, vector<2x20xf32>
    tpu.vector_store %arg15[%c0_206, %c20_207], %277 {strides = array<i32>} : memref<2x320xf32, #tpu.memory_space<vmem>>, vector<2x20xf32>,
    %279 = vector.extract_strided_slice %260 {offsets = [0, 80], sizes = [2, 20], strides = [1, 1]} : vector<2x160xf32> to vector<2x20xf32>
    %280 = vector.extract_strided_slice %260 {offsets = [0, 100], sizes = [2, 20], strides = [1, 1]} : vector<2x160xf32> to vector<2x20xf32>
    %281 = arith.maximumf %279, %280 : vector<2x20xf32>
    %c0_208 = arith.constant 0 : index
    %c0_209 = arith.constant 0 : index
    %282 = vector.load %arg5[%c0_208, %c0_209] : memref<1x20xf32, #tpu.memory_space<vmem>>, vector<1x20xf32>
    %283 = vector.broadcast %282 : vector<1x20xf32> to vector<2x20xf32>
    %284 = arith.addf %281, %283 : vector<2x20xf32>
    %cst_210 = arith.constant 0.000000e+00 : f32
    %285 = vector.broadcast %cst_210 : f32 to vector<2x20xf32>
    %286 = arith.maximumf %284, %285 : vector<2x20xf32>
    %c0_211 = arith.constant 0 : index
    %c40_212 = arith.constant 40 : index
    %287 = vector.load %arg15[%c0_211, %c40_212] : memref<2x320xf32, #tpu.memory_space<vmem>>, vector<2x20xf32>
    tpu.vector_store %arg15[%c0_211, %c40_212], %286 {strides = array<i32>} : memref<2x320xf32, #tpu.memory_space<vmem>>, vector<2x20xf32>,
    %288 = vector.extract_strided_slice %260 {offsets = [0, 120], sizes = [2, 20], strides = [1, 1]} : vector<2x160xf32> to vector<2x20xf32>
    %289 = vector.extract_strided_slice %260 {offsets = [0, 140], sizes = [2, 20], strides = [1, 1]} : vector<2x160xf32> to vector<2x20xf32>
    %290 = arith.maximumf %288, %289 : vector<2x20xf32>
    %c0_213 = arith.constant 0 : index
    %c0_214 = arith.constant 0 : index
    %291 = vector.load %arg5[%c0_213, %c0_214] : memref<1x20xf32, #tpu.memory_space<vmem>>, vector<1x20xf32>
    %292 = vector.broadcast %291 : vector<1x20xf32> to vector<2x20xf32>
    %293 = arith.addf %290, %292 : vector<2x20xf32>
    %cst_215 = arith.constant 0.000000e+00 : f32
    %294 = vector.broadcast %cst_215 : f32 to vector<2x20xf32>
    %295 = arith.maximumf %293, %294 : vector<2x20xf32>
    %c0_216 = arith.constant 0 : index
    %c60_217 = arith.constant 60 : index
    %296 = vector.load %arg15[%c0_216, %c60_217] : memref<2x320xf32, #tpu.memory_space<vmem>>, vector<2x20xf32>
    tpu.vector_store %arg15[%c0_216, %c60_217], %295 {strides = array<i32>} : memref<2x320xf32, #tpu.memory_space<vmem>>, vector<2x20xf32>,
    %297 = vector.extract_strided_slice %255 {offsets = [0, 2, 0], sizes = [2, 1, 160], strides = [1, 1, 1]} : vector<2x8x160xf32> to vector<2x1x160xf32>
    %298 = vector.shape_cast %297 : vector<2x1x160xf32> to vector<2x160xf32>
    %299 = vector.extract_strided_slice %255 {offsets = [0, 3, 0], sizes = [2, 1, 160], strides = [1, 1, 1]} : vector<2x8x160xf32> to vector<2x1x160xf32>
    %300 = vector.shape_cast %299 : vector<2x1x160xf32> to vector<2x160xf32>
    %301 = arith.maximumf %298, %300 : vector<2x160xf32>
    %302 = vector.extract_strided_slice %301 {offsets = [0, 0], sizes = [2, 20], strides = [1, 1]} : vector<2x160xf32> to vector<2x20xf32>
    %303 = vector.extract_strided_slice %301 {offsets = [0, 20], sizes = [2, 20], strides = [1, 1]} : vector<2x160xf32> to vector<2x20xf32>
    %304 = arith.maximumf %302, %303 : vector<2x20xf32>
    %c0_218 = arith.constant 0 : index
    %c0_219 = arith.constant 0 : index
    %305 = vector.load %arg5[%c0_218, %c0_219] : memref<1x20xf32, #tpu.memory_space<vmem>>, vector<1x20xf32>
    %306 = vector.broadcast %305 : vector<1x20xf32> to vector<2x20xf32>
    %307 = arith.addf %304, %306 : vector<2x20xf32>
    %cst_220 = arith.constant 0.000000e+00 : f32
    %308 = vector.broadcast %cst_220 : f32 to vector<2x20xf32>
    %309 = arith.maximumf %307, %308 : vector<2x20xf32>
    %c0_221 = arith.constant 0 : index
    %c80_222 = arith.constant 80 : index
    %310 = vector.load %arg15[%c0_221, %c80_222] : memref<2x320xf32, #tpu.memory_space<vmem>>, vector<2x20xf32>
    tpu.vector_store %arg15[%c0_221, %c80_222], %309 {strides = array<i32>} : memref<2x320xf32, #tpu.memory_space<vmem>>, vector<2x20xf32>,
    %311 = vector.extract_strided_slice %301 {offsets = [0, 40], sizes = [2, 20], strides = [1, 1]} : vector<2x160xf32> to vector<2x20xf32>
    %312 = vector.extract_strided_slice %301 {offsets = [0, 60], sizes = [2, 20], strides = [1, 1]} : vector<2x160xf32> to vector<2x20xf32>
    %313 = arith.maximumf %311, %312 : vector<2x20xf32>
    %c0_223 = arith.constant 0 : index
    %c0_224 = arith.constant 0 : index
    %314 = vector.load %arg5[%c0_223, %c0_224] : memref<1x20xf32, #tpu.memory_space<vmem>>, vector<1x20xf32>
    %315 = vector.broadcast %314 : vector<1x20xf32> to vector<2x20xf32>
    %316 = arith.addf %313, %315 : vector<2x20xf32>
    %cst_225 = arith.constant 0.000000e+00 : f32
    %317 = vector.broadcast %cst_225 : f32 to vector<2x20xf32>
    %318 = arith.maximumf %316, %317 : vector<2x20xf32>
    %c0_226 = arith.constant 0 : index
    %c100_227 = arith.constant 100 : index
    %319 = vector.load %arg15[%c0_226, %c100_227] : memref<2x320xf32, #tpu.memory_space<vmem>>, vector<2x20xf32>
    tpu.vector_store %arg15[%c0_226, %c100_227], %318 {strides = array<i32>} : memref<2x320xf32, #tpu.memory_space<vmem>>, vector<2x20xf32>,
    %320 = vector.extract_strided_slice %301 {offsets = [0, 80], sizes = [2, 20], strides = [1, 1]} : vector<2x160xf32> to vector<2x20xf32>
    %321 = vector.extract_strided_slice %301 {offsets = [0, 100], sizes = [2, 20], strides = [1, 1]} : vector<2x160xf32> to vector<2x20xf32>
    %322 = arith.maximumf %320, %321 : vector<2x20xf32>
    %c0_228 = arith.constant 0 : index
    %c0_229 = arith.constant 0 : index
    %323 = vector.load %arg5[%c0_228, %c0_229] : memref<1x20xf32, #tpu.memory_space<vmem>>, vector<1x20xf32>
    %324 = vector.broadcast %323 : vector<1x20xf32> to vector<2x20xf32>
    %325 = arith.addf %322, %324 : vector<2x20xf32>
    %cst_230 = arith.constant 0.000000e+00 : f32
    %326 = vector.broadcast %cst_230 : f32 to vector<2x20xf32>
    %327 = arith.maximumf %325, %326 : vector<2x20xf32>
    %c0_231 = arith.constant 0 : index
    %c120_232 = arith.constant 120 : index
    %328 = vector.load %arg15[%c0_231, %c120_232] : memref<2x320xf32, #tpu.memory_space<vmem>>, vector<2x20xf32>
    tpu.vector_store %arg15[%c0_231, %c120_232], %327 {strides = array<i32>} : memref<2x320xf32, #tpu.memory_space<vmem>>, vector<2x20xf32>,
    %329 = vector.extract_strided_slice %301 {offsets = [0, 120], sizes = [2, 20], strides = [1, 1]} : vector<2x160xf32> to vector<2x20xf32>
    %330 = vector.extract_strided_slice %301 {offsets = [0, 140], sizes = [2, 20], strides = [1, 1]} : vector<2x160xf32> to vector<2x20xf32>
    %331 = arith.maximumf %329, %330 : vector<2x20xf32>
    %c0_233 = arith.constant 0 : index
    %c0_234 = arith.constant 0 : index
    %332 = vector.load %arg5[%c0_233, %c0_234] : memref<1x20xf32, #tpu.memory_space<vmem>>, vector<1x20xf32>
    %333 = vector.broadcast %332 : vector<1x20xf32> to vector<2x20xf32>
    %334 = arith.addf %331, %333 : vector<2x20xf32>
    %cst_235 = arith.constant 0.000000e+00 : f32
    %335 = vector.broadcast %cst_235 : f32 to vector<2x20xf32>
    %336 = arith.maximumf %334, %335 : vector<2x20xf32>
    %c0_236 = arith.constant 0 : index
    %c140_237 = arith.constant 140 : index
    %337 = vector.load %arg15[%c0_236, %c140_237] : memref<2x320xf32, #tpu.memory_space<vmem>>, vector<2x20xf32>
    tpu.vector_store %arg15[%c0_236, %c140_237], %336 {strides = array<i32>} : memref<2x320xf32, #tpu.memory_space<vmem>>, vector<2x20xf32>,
    %338 = vector.extract_strided_slice %255 {offsets = [0, 4, 0], sizes = [2, 1, 160], strides = [1, 1, 1]} : vector<2x8x160xf32> to vector<2x1x160xf32>
    %339 = vector.shape_cast %338 : vector<2x1x160xf32> to vector<2x160xf32>
    %340 = vector.extract_strided_slice %255 {offsets = [0, 5, 0], sizes = [2, 1, 160], strides = [1, 1, 1]} : vector<2x8x160xf32> to vector<2x1x160xf32>
    %341 = vector.shape_cast %340 : vector<2x1x160xf32> to vector<2x160xf32>
    %342 = arith.maximumf %339, %341 : vector<2x160xf32>
    %343 = vector.extract_strided_slice %342 {offsets = [0, 0], sizes = [2, 20], strides = [1, 1]} : vector<2x160xf32> to vector<2x20xf32>
    %344 = vector.extract_strided_slice %342 {offsets = [0, 20], sizes = [2, 20], strides = [1, 1]} : vector<2x160xf32> to vector<2x20xf32>
    %345 = arith.maximumf %343, %344 : vector<2x20xf32>
    %c0_238 = arith.constant 0 : index
    %c0_239 = arith.constant 0 : index
    %346 = vector.load %arg5[%c0_238, %c0_239] : memref<1x20xf32, #tpu.memory_space<vmem>>, vector<1x20xf32>
    %347 = vector.broadcast %346 : vector<1x20xf32> to vector<2x20xf32>
    %348 = arith.addf %345, %347 : vector<2x20xf32>
    %cst_240 = arith.constant 0.000000e+00 : f32
    %349 = vector.broadcast %cst_240 : f32 to vector<2x20xf32>
    %350 = arith.maximumf %348, %349 : vector<2x20xf32>
    %c0_241 = arith.constant 0 : index
    %c160_242 = arith.constant 160 : index
    %351 = vector.load %arg15[%c0_241, %c160_242] : memref<2x320xf32, #tpu.memory_space<vmem>>, vector<2x20xf32>
    tpu.vector_store %arg15[%c0_241, %c160_242], %350 {strides = array<i32>} : memref<2x320xf32, #tpu.memory_space<vmem>>, vector<2x20xf32>,
    %352 = vector.extract_strided_slice %342 {offsets = [0, 40], sizes = [2, 20], strides = [1, 1]} : vector<2x160xf32> to vector<2x20xf32>
    %353 = vector.extract_strided_slice %342 {offsets = [0, 60], sizes = [2, 20], strides = [1, 1]} : vector<2x160xf32> to vector<2x20xf32>
    %354 = arith.maximumf %352, %353 : vector<2x20xf32>
    %c0_243 = arith.constant 0 : index
    %c0_244 = arith.constant 0 : index
    %355 = vector.load %arg5[%c0_243, %c0_244] : memref<1x20xf32, #tpu.memory_space<vmem>>, vector<1x20xf32>
    %356 = vector.broadcast %355 : vector<1x20xf32> to vector<2x20xf32>
    %357 = arith.addf %354, %356 : vector<2x20xf32>
    %cst_245 = arith.constant 0.000000e+00 : f32
    %358 = vector.broadcast %cst_245 : f32 to vector<2x20xf32>
    %359 = arith.maximumf %357, %358 : vector<2x20xf32>
    %c0_246 = arith.constant 0 : index
    %c180_247 = arith.constant 180 : index
    %360 = vector.load %arg15[%c0_246, %c180_247] : memref<2x320xf32, #tpu.memory_space<vmem>>, vector<2x20xf32>
    tpu.vector_store %arg15[%c0_246, %c180_247], %359 {strides = array<i32>} : memref<2x320xf32, #tpu.memory_space<vmem>>, vector<2x20xf32>,
    %361 = vector.extract_strided_slice %342 {offsets = [0, 80], sizes = [2, 20], strides = [1, 1]} : vector<2x160xf32> to vector<2x20xf32>
    %362 = vector.extract_strided_slice %342 {offsets = [0, 100], sizes = [2, 20], strides = [1, 1]} : vector<2x160xf32> to vector<2x20xf32>
    %363 = arith.maximumf %361, %362 : vector<2x20xf32>
    %c0_248 = arith.constant 0 : index
    %c0_249 = arith.constant 0 : index
    %364 = vector.load %arg5[%c0_248, %c0_249] : memref<1x20xf32, #tpu.memory_space<vmem>>, vector<1x20xf32>
    %365 = vector.broadcast %364 : vector<1x20xf32> to vector<2x20xf32>
    %366 = arith.addf %363, %365 : vector<2x20xf32>
    %cst_250 = arith.constant 0.000000e+00 : f32
    %367 = vector.broadcast %cst_250 : f32 to vector<2x20xf32>
    %368 = arith.maximumf %366, %367 : vector<2x20xf32>
    %c0_251 = arith.constant 0 : index
    %c200_252 = arith.constant 200 : index
    %369 = vector.load %arg15[%c0_251, %c200_252] : memref<2x320xf32, #tpu.memory_space<vmem>>, vector<2x20xf32>
    tpu.vector_store %arg15[%c0_251, %c200_252], %368 {strides = array<i32>} : memref<2x320xf32, #tpu.memory_space<vmem>>, vector<2x20xf32>,
    %370 = vector.extract_strided_slice %342 {offsets = [0, 120], sizes = [2, 20], strides = [1, 1]} : vector<2x160xf32> to vector<2x20xf32>
    %371 = vector.extract_strided_slice %342 {offsets = [0, 140], sizes = [2, 20], strides = [1, 1]} : vector<2x160xf32> to vector<2x20xf32>
    %372 = arith.maximumf %370, %371 : vector<2x20xf32>
    %c0_253 = arith.constant 0 : index
    %c0_254 = arith.constant 0 : index
    %373 = vector.load %arg5[%c0_253, %c0_254] : memref<1x20xf32, #tpu.memory_space<vmem>>, vector<1x20xf32>
    %374 = vector.broadcast %373 : vector<1x20xf32> to vector<2x20xf32>
    %375 = arith.addf %372, %374 : vector<2x20xf32>
    %cst_255 = arith.constant 0.000000e+00 : f32
    %376 = vector.broadcast %cst_255 : f32 to vector<2x20xf32>
    %377 = arith.maximumf %375, %376 : vector<2x20xf32>
    %c0_256 = arith.constant 0 : index
    %c220_257 = arith.constant 220 : index
    %378 = vector.load %arg15[%c0_256, %c220_257] : memref<2x320xf32, #tpu.memory_space<vmem>>, vector<2x20xf32>
    tpu.vector_store %arg15[%c0_256, %c220_257], %377 {strides = array<i32>} : memref<2x320xf32, #tpu.memory_space<vmem>>, vector<2x20xf32>,
    %379 = vector.extract_strided_slice %255 {offsets = [0, 6, 0], sizes = [2, 1, 160], strides = [1, 1, 1]} : vector<2x8x160xf32> to vector<2x1x160xf32>
    %380 = vector.shape_cast %379 : vector<2x1x160xf32> to vector<2x160xf32>
    %381 = vector.extract_strided_slice %255 {offsets = [0, 7, 0], sizes = [2, 1, 160], strides = [1, 1, 1]} : vector<2x8x160xf32> to vector<2x1x160xf32>
    %382 = vector.shape_cast %381 : vector<2x1x160xf32> to vector<2x160xf32>
    %383 = arith.maximumf %380, %382 : vector<2x160xf32>
    %384 = vector.extract_strided_slice %383 {offsets = [0, 0], sizes = [2, 20], strides = [1, 1]} : vector<2x160xf32> to vector<2x20xf32>
    %385 = vector.extract_strided_slice %383 {offsets = [0, 20], sizes = [2, 20], strides = [1, 1]} : vector<2x160xf32> to vector<2x20xf32>
    %386 = arith.maximumf %384, %385 : vector<2x20xf32>
    %c0_258 = arith.constant 0 : index
    %c0_259 = arith.constant 0 : index
    %387 = vector.load %arg5[%c0_258, %c0_259] : memref<1x20xf32, #tpu.memory_space<vmem>>, vector<1x20xf32>
    %388 = vector.broadcast %387 : vector<1x20xf32> to vector<2x20xf32>
    %389 = arith.addf %386, %388 : vector<2x20xf32>
    %cst_260 = arith.constant 0.000000e+00 : f32
    %390 = vector.broadcast %cst_260 : f32 to vector<2x20xf32>
    %391 = arith.maximumf %389, %390 : vector<2x20xf32>
    %c0_261 = arith.constant 0 : index
    %c240_262 = arith.constant 240 : index
    %392 = vector.load %arg15[%c0_261, %c240_262] : memref<2x320xf32, #tpu.memory_space<vmem>>, vector<2x20xf32>
    tpu.vector_store %arg15[%c0_261, %c240_262], %391 {strides = array<i32>} : memref<2x320xf32, #tpu.memory_space<vmem>>, vector<2x20xf32>,
    %393 = vector.extract_strided_slice %383 {offsets = [0, 40], sizes = [2, 20], strides = [1, 1]} : vector<2x160xf32> to vector<2x20xf32>
    %394 = vector.extract_strided_slice %383 {offsets = [0, 60], sizes = [2, 20], strides = [1, 1]} : vector<2x160xf32> to vector<2x20xf32>
    %395 = arith.maximumf %393, %394 : vector<2x20xf32>
    %c0_263 = arith.constant 0 : index
    %c0_264 = arith.constant 0 : index
    %396 = vector.load %arg5[%c0_263, %c0_264] : memref<1x20xf32, #tpu.memory_space<vmem>>, vector<1x20xf32>
    %397 = vector.broadcast %396 : vector<1x20xf32> to vector<2x20xf32>
    %398 = arith.addf %395, %397 : vector<2x20xf32>
    %cst_265 = arith.constant 0.000000e+00 : f32
    %399 = vector.broadcast %cst_265 : f32 to vector<2x20xf32>
    %400 = arith.maximumf %398, %399 : vector<2x20xf32>
    %c0_266 = arith.constant 0 : index
    %c260 = arith.constant 260 : index
    %401 = vector.load %arg15[%c0_266, %c260] : memref<2x320xf32, #tpu.memory_space<vmem>>, vector<2x20xf32>
    tpu.vector_store %arg15[%c0_266, %c260], %400 {strides = array<i32>} : memref<2x320xf32, #tpu.memory_space<vmem>>, vector<2x20xf32>,
    %402 = vector.extract_strided_slice %383 {offsets = [0, 80], sizes = [2, 20], strides = [1, 1]} : vector<2x160xf32> to vector<2x20xf32>
    %403 = vector.extract_strided_slice %383 {offsets = [0, 100], sizes = [2, 20], strides = [1, 1]} : vector<2x160xf32> to vector<2x20xf32>
    %404 = arith.maximumf %402, %403 : vector<2x20xf32>
    %c0_267 = arith.constant 0 : index
    %c0_268 = arith.constant 0 : index
    %405 = vector.load %arg5[%c0_267, %c0_268] : memref<1x20xf32, #tpu.memory_space<vmem>>, vector<1x20xf32>
    %406 = vector.broadcast %405 : vector<1x20xf32> to vector<2x20xf32>
    %407 = arith.addf %404, %406 : vector<2x20xf32>
    %cst_269 = arith.constant 0.000000e+00 : f32
    %408 = vector.broadcast %cst_269 : f32 to vector<2x20xf32>
    %409 = arith.maximumf %407, %408 : vector<2x20xf32>
    %c0_270 = arith.constant 0 : index
    %c280 = arith.constant 280 : index
    %410 = vector.load %arg15[%c0_270, %c280] : memref<2x320xf32, #tpu.memory_space<vmem>>, vector<2x20xf32>
    tpu.vector_store %arg15[%c0_270, %c280], %409 {strides = array<i32>} : memref<2x320xf32, #tpu.memory_space<vmem>>, vector<2x20xf32>,
    %411 = vector.extract_strided_slice %383 {offsets = [0, 120], sizes = [2, 20], strides = [1, 1]} : vector<2x160xf32> to vector<2x20xf32>
    %412 = vector.extract_strided_slice %383 {offsets = [0, 140], sizes = [2, 20], strides = [1, 1]} : vector<2x160xf32> to vector<2x20xf32>
    %413 = arith.maximumf %411, %412 : vector<2x20xf32>
    %c0_271 = arith.constant 0 : index
    %c0_272 = arith.constant 0 : index
    %414 = vector.load %arg5[%c0_271, %c0_272] : memref<1x20xf32, #tpu.memory_space<vmem>>, vector<1x20xf32>
    %415 = vector.broadcast %414 : vector<1x20xf32> to vector<2x20xf32>
    %416 = arith.addf %413, %415 : vector<2x20xf32>
    %cst_273 = arith.constant 0.000000e+00 : f32
    %417 = vector.broadcast %cst_273 : f32 to vector<2x20xf32>
    %418 = arith.maximumf %416, %417 : vector<2x20xf32>
    %c0_274 = arith.constant 0 : index
    %c300 = arith.constant 300 : index
    %419 = vector.load %arg15[%c0_274, %c300] : memref<2x320xf32, #tpu.memory_space<vmem>>, vector<2x20xf32>
    tpu.vector_store %arg15[%c0_274, %c300], %418 {strides = array<i32>} : memref<2x320xf32, #tpu.memory_space<vmem>>, vector<2x20xf32>,
    %c0_275 = arith.constant 0 : index
    %c0_276 = arith.constant 0 : index
    %420 = vector.load %arg15[%c0_275, %c0_276] : memref<2x320xf32, #tpu.memory_space<vmem>>, vector<2x320xf32>
    %c0_277 = arith.constant 0 : index
    %c0_278 = arith.constant 0 : index
    %421 = vector.load %arg6[%c0_277, %c0_278] : memref<320x50xbf16, #tpu.memory_space<vmem>>, vector<320x50xbf16>
    %422 = arith.truncf %420 : vector<2x320xf32> to vector<2x320xbf16>
    %cst_279 = arith.constant dense<0.000000e+00> : vector<2x50xf32>
    %423 = tpu.matmul %422, %421, %cst_279 {dimension_numbers = #tpu.dot_dimension_numbers<[1], [0], [0], [1], [0, 0, 1, 1], [], []>} : vector<2x320xbf16>, vector<320x50xbf16>, vector<2x50xf32> -> vector<2x50xf32>
    %c0_280 = arith.constant 0 : index
    %c0_281 = arith.constant 0 : index
    %424 = vector.load %arg7[%c0_280, %c0_281] : memref<1x50xf32, #tpu.memory_space<vmem>>, vector<1x50xf32>
    %425 = vector.broadcast %424 : vector<1x50xf32> to vector<2x50xf32>
    %426 = arith.addf %423, %425 : vector<2x50xf32>
    %cst_282 = arith.constant 0.000000e+00 : f32
    %427 = vector.broadcast %cst_282 : f32 to vector<2x50xf32>
    %428 = arith.maximumf %426, %427 : vector<2x50xf32>
    %c0_283 = arith.constant 0 : index
    %c0_284 = arith.constant 0 : index
    %429 = vector.load %arg8[%c0_283, %c0_284] : memref<50x10xbf16, #tpu.memory_space<vmem>>, vector<50x10xbf16>
    %430 = arith.truncf %428 : vector<2x50xf32> to vector<2x50xbf16>
    %cst_285 = arith.constant dense<0.000000e+00> : vector<2x10xf32>
    %431 = tpu.matmul %430, %429, %cst_285 {dimension_numbers = #tpu.dot_dimension_numbers<[1], [0], [0], [1], [0, 0, 1, 1], [], []>} : vector<2x50xbf16>, vector<50x10xbf16>, vector<2x10xf32> -> vector<2x10xf32>
    %c0_286 = arith.constant 0 : index
    %c0_287 = arith.constant 0 : index
    %432 = vector.load %arg9[%c0_286, %c0_287] : memref<1x10xf32, #tpu.memory_space<vmem>>, vector<1x10xf32>
    %433 = vector.broadcast %432 : vector<1x10xf32> to vector<2x10xf32>
    %434 = arith.addf %431, %433 : vector<2x10xf32>
    %cst_288 = arith.constant dense<0xFF800000> : vector<10xf32>
    %435 = vector.multi_reduction <maximumf>, %434, %cst_288 [0] : vector<2x10xf32> to vector<10xf32>
    %436 = vector.shape_cast %435 : vector<10xf32> to vector<1x10xf32>
    %437 = vector.broadcast %436 : vector<1x10xf32> to vector<2x10xf32>
    %438 = arith.subf %434, %437 : vector<2x10xf32>
    %439 = math.exp %438 : vector<2x10xf32>
    %cst_289 = arith.constant dense<0.000000e+00> : vector<10xf32>
    %440 = vector.multi_reduction <add>, %439, %cst_289 [0] : vector<2x10xf32> to vector<10xf32>
    %441 = vector.shape_cast %440 : vector<10xf32> to vector<1x10xf32>
    %442 = math.log %441 : vector<1x10xf32>
    %443 = arith.addf %442, %436 : vector<1x10xf32>
    %444 = vector.broadcast %443 : vector<1x10xf32> to vector<2x10xf32>
    %445 = arith.subf %434, %444 : vector<2x10xf32>
    %c0_290 = arith.constant 0 : index
    %c0_291 = arith.constant 0 : index
    %446 = vector.load %arg10[%c0_290, %c0_291] : memref<2x10xf32, #tpu.memory_space<vmem>>, vector<2x10xf32>
    tpu.vector_store %arg10[%c0_290, %c0_291], %445 {strides = array<i32>} : memref<2x10xf32, #tpu.memory_space<vmem>>, vector<2x10xf32>,
    return
  }
  func.func @transform_0(%arg0: i32) -> (i32, i32, i32) {
    %c0_i32 = arith.constant 0 : i32
    %c0_i32_0 = arith.constant 0 : i32
    %c0_i32_1 = arith.constant 0 : i32
    return %arg0, %c0_i32, %c0_i32_0 : i32, i32, i32
  }
  func.func @transform_1(%arg0: i32) -> (i32, i32) {
    %c0_i32 = arith.constant 0 : i32
    %c0_i32_0 = arith.constant 0 : i32
    %c0_i32_1 = arith.constant 0 : i32
    return %c0_i32, %c0_i32_0 : i32, i32
  }
  func.func @transform_2(%arg0: i32) -> (i32, i32) {
    %c0_i32 = arith.constant 0 : i32
    %c0_i32_0 = arith.constant 0 : i32
    %c0_i32_1 = arith.constant 0 : i32
    return %c0_i32, %c0_i32_0 : i32, i32
  }
  func.func @transform_3(%arg0: i32) -> (i32, i32) {
    %c0_i32 = arith.constant 0 : i32
    %c0_i32_0 = arith.constant 0 : i32
    %c0_i32_1 = arith.constant 0 : i32
    return %c0_i32, %c0_i32_0 : i32, i32
  }
  func.func @transform_4(%arg0: i32) -> (i32, i32) {
    %c0_i32 = arith.constant 0 : i32
    %c0_i32_0 = arith.constant 0 : i32
    %c0_i32_1 = arith.constant 0 : i32
    return %c0_i32, %c0_i32_0 : i32, i32
  }
  func.func @transform_5(%arg0: i32) -> (i32, i32) {
    %c0_i32 = arith.constant 0 : i32
    %c0_i32_0 = arith.constant 0 : i32
    %c0_i32_1 = arith.constant 0 : i32
    return %c0_i32, %c0_i32_0 : i32, i32
  }
  func.func @transform_6(%arg0: i32) -> (i32, i32) {
    %c0_i32 = arith.constant 0 : i32
    %c0_i32_0 = arith.constant 0 : i32
    %c0_i32_1 = arith.constant 0 : i32
    return %c0_i32, %c0_i32_0 : i32, i32
  }
  func.func @transform_7(%arg0: i32) -> (i32, i32) {
    %c0_i32 = arith.constant 0 : i32
    %c0_i32_0 = arith.constant 0 : i32
    %c0_i32_1 = arith.constant 0 : i32
    return %c0_i32, %c0_i32_0 : i32, i32
  }
  func.func @transform_8(%arg0: i32) -> (i32, i32) {
    %c0_i32 = arith.constant 0 : i32
    %c0_i32_0 = arith.constant 0 : i32
    %c0_i32_1 = arith.constant 0 : i32
    return %c0_i32, %c0_i32_0 : i32, i32
  }
  func.func @transform_9(%arg0: i32) -> (i32, i32) {
    %c0_i32 = arith.constant 0 : i32
    %c0_i32_0 = arith.constant 0 : i32
    return %arg0, %c0_i32 : i32, i32
  }
}

</mosaic_0001>

<llo_original>
// kernel: net_forward_pallas.1
$region0: #{net_forward_pallas.1}
  #allocation0 [shape = 'u32[]', space=smem, size = 0x4, offset = 0x4, fixed_abs, tag = 'smem constant byte address 0x4 - core index']
  #allocation1 [shape = 'u32[144,128]{1,0:T(1,128)}', space=vmem, size = 0x12000, scoped, tag = 'internal scratch']
  #allocation2 [shape = 'f32[48,140]{1,0:T(8,128)}', space=vmem, size = 0xc000, scoped, tag = 'scratch operand']
  #allocation3 [shape = 'f32[2,12,240]{2,1,0:T(8,128)}', space=vmem, size = 0x8000, scoped, tag = 'scratch operand']
  #allocation4 [shape = 'f32[2,12,120]{2,1,0:T(8,128)}', space=vmem, size = 0x4000, scoped, tag = 'scratch operand']
  #allocation5 [shape = 'f32[16,600]{1,0:T(8,128)}', space=vmem, size = 0xa000, scoped, tag = 'scratch operand']
  #allocation6 [shape = 'f32[2,320]{1,0:T(2,128)}', space=vmem, size = 0xc00, scoped, tag = 'scratch operand']
  %s0 = inlined_call_operand.vmem [shape: f32[2,28,28], index: 0, kind: input, shape index: {}]
  %s1 = inlined_call_operand.vmem [shape: bf16[140,240], index: 1, kind: input, shape index: {}]
  %s2 = inlined_call_operand.vmem [shape: f32[1,10], index: 2, kind: input, shape index: {}]
  %s3 = inlined_call_operand.vmem [shape: bf16[600,160], index: 3, kind: input, shape index: {}]
  %s4 = inlined_call_operand.vmem [shape: f32[1,20], index: 4, kind: input, shape index: {}]
  %s5 = inlined_call_operand.vmem [shape: bf16[320,50], index: 5, kind: input, shape index: {}]
  %s6 = inlined_call_operand.vmem [shape: f32[1,50], index: 6, kind: input, shape index: {}]
  %s7 = inlined_call_operand.vmem [shape: bf16[50,10], index: 7, kind: input, shape index: {}]
  %s8 = inlined_call_operand.vmem [shape: f32[1,10], index: 8, kind: input, shape index: {}]
  %s9 = inlined_call_operand.hbm [shape: f32[2,10], index: 9, kind: output, shape index: {}]
  %s10 = sld [smem:[#allocation0]]
  $region46: #{net_forward_pallas.1} parent=0
    _
  %s12 = ssub.s32 1, %s10
  %s13 = scalar_select 0, %s12, %s10
  $region1: #{net_forward_pallas.1} parent=0
    #allocation7 [shape = 'u8[1024]{0}', space=vmem, size = 0x400, scoped, tag = 'output window, operand 0, single buffered']
    #allocation8 [shape = 's32[1]{0}', space=sflag, size = 0x4, scoped, tag = 'scoped memory for net_forward_pallas.1']
    %14 = vsyncpa [#allocation8], 0
    // Predicated region
    $region2: #{net_forward_pallas.1} parent=1 // pred_check
      _
    $region3: #{net_forward_pallas.1} parent=1 // pred_check_branch
      %16 = sbr.rel (0) target = $region5
    $region4: #{net_forward_pallas.1} parent=1 // pred_region
      _
    $region5: #{net_forward_pallas.1} parent=1 // pred_fallthru
      _
    // Predicated region
    $region6: #{net_forward_pallas.1} parent=1 // pred_check
      _
    $region7: #{net_forward_pallas.1} parent=1 // pred_check_branch
      %18 = sbr.rel (0) target = $region9
    $region8: #{net_forward_pallas.1} parent=1 // pred_region
      _
    $region9: #{net_forward_pallas.1} parent=1 // pred_fallthru
      _
    // Predicated region
    $region10: #{net_forward_pallas.1} parent=1 // pred_check
      _
    $region11: #{net_forward_pallas.1} parent=1 // pred_check_branch
      %20 = sbr.rel (0) target = $region13
    $region12: #{net_forward_pallas.1} parent=1 // pred_region
      _
    $region13: #{net_forward_pallas.1} parent=1 // pred_fallthru
      _
    // Predicated region
    $region14: #{net_forward_pallas.1} parent=1 // pred_check
      _
    $region15: #{net_forward_pallas.1} parent=1 // pred_check_branch
      %22 = sbr.rel (0) target = $region17
    $region16: #{net_forward_pallas.1} parent=1 // pred_region
      _
    $region17: #{net_forward_pallas.1} parent=1 // pred_fallthru
      _
    // Predicated region
    $region18: #{net_forward_pallas.1} parent=1 // pred_check
      _
    $region19: #{net_forward_pallas.1} parent=1 // pred_check_branch
      %24 = sbr.rel (0) target = $region21
    $region20: #{net_forward_pallas.1} parent=1 // pred_region
      _
    $region21: #{net_forward_pallas.1} parent=1 // pred_fallthru
      _
    // Predicated region
    $region22: #{net_forward_pallas.1} parent=1 // pred_check
      _
    $region23: #{net_forward_pallas.1} parent=1 // pred_check_branch
      %26 = sbr.rel (0) target = $region25
    $region24: #{net_forward_pallas.1} parent=1 // pred_region
      _
    $region25: #{net_forward_pallas.1} parent=1 // pred_fallthru
      _
    // Predicated region
    $region26: #{net_forward_pallas.1} parent=1 // pred_check
      _
    $region27: #{net_forward_pallas.1} parent=1 // pred_check_branch
      %28 = sbr.rel (0) target = $region29
    $region28: #{net_forward_pallas.1} parent=1 // pred_region
      _
    $region29: #{net_forward_pallas.1} parent=1 // pred_fallthru
      _
    // Predicated region
    $region30: #{net_forward_pallas.1} parent=1 // pred_check
      _
    $region31: #{net_forward_pallas.1} parent=1 // pred_check_branch
      %30 = sbr.rel (0) target = $region33
    $region32: #{net_forward_pallas.1} parent=1 // pred_region
      _
    $region33: #{net_forward_pallas.1} parent=1 // pred_fallthru
      _
    // Predicated region
    $region34: #{net_forward_pallas.1} parent=1 // pred_check
      _
    $region35: #{net_forward_pallas.1} parent=1 // pred_check_branch
      %32 = sbr.rel (0) target = $region37
    $region36: #{net_forward_pallas.1} parent=1 // pred_region
      _
    $region37: #{net_forward_pallas.1} parent=1 // pred_fallthru
      _
    %v34 = vld [vmem:[%s0] sm:$0xff]
    %v35 = vld [vmem:[%s0 + $0x8] sm:$0xff]
    %v36 = vld [vmem:[%s0 + $0x10] sm:$0xff]
    %v37 = vld [vmem:[%s0 + $0x20] sm:$0xff]
    %v38 = vld [vmem:[%s0 + $0x28] sm:$0xff]
    %v39 = vld [vmem:[%s0 + $0x30] sm:$0xff]
    %vm40 = vcmask 228352
    %41 = vst.msk [vmem:[#allocation2] sm:$0xff] %vm40, %v34
    %42 = vst.msk [vmem:[#allocation2 + $0x10] sm:$0xff] %vm40, %v35
    %43 = vst.msk [vmem:[#allocation2 + $0x20] sm:$0xff] %vm40, %v36
    %44 = vst.msk [vmem:[#allocation2 + $0x30] sm:$0xff] %vm40, %v37
    %45 = vst.msk [vmem:[#allocation2 + $0x40] sm:$0xff] %vm40, %v38
    %46 = vst.msk [vmem:[#allocation2 + $0x50] sm:$0xff] %vm40, %v39
    %v47 = vld [vmem:[%s0 + $0x1] sm:$0xff]
    %v48 = vld [vmem:[%s0 + $0x9] sm:$0xff]
    %v49 = vld [vmem:[%s0 + $0x11] sm:$0xff]
    %v50 = vld [vmem:[%s0 + $0x21] sm:$0xff]
    %v51 = vld [vmem:[%s0 + $0x29] sm:$0xff]
    %v52 = vld [vmem:[%s0 + $0x31] sm:$0xff]
    %59 = vrot.lane.b32.xlu0 %v47, 28
    %v60 = vpop.permute.xlu0 %59
    %61 = vrot.lane.b32.xlu0 %v48, 28
    %v62 = vpop.permute.xlu0 %61
    %63 = vrot.lane.b32.xlu0 %v49, 28
    %v64 = vpop.permute.xlu0 %63
    %65 = vrot.lane.b32.xlu0 %v50, 28
    %v66 = vpop.permute.xlu0 %65
    %67 = vrot.lane.b32.xlu0 %v51, 28
    %v68 = vpop.permute.xlu0 %67
    %69 = vrot.lane.b32.xlu0 %v52, 28
    %v70 = vpop.permute.xlu0 %69
    %vm77 = vcmask 457952
    %78 = vst.msk [vmem:[#allocation2] sm:$0xff] %vm77, %v60
    %79 = vst.msk [vmem:[#allocation2 + $0x10] sm:$0xff] %vm77, %v62
    %80 = vst.msk [vmem:[#allocation2 + $0x20] sm:$0xff] %vm77, %v64
    %81 = vst.msk [vmem:[#allocation2 + $0x30] sm:$0xff] %vm77, %v66
    %82 = vst.msk [vmem:[#allocation2 + $0x40] sm:$0xff] %vm77, %v68
    %83 = vst.msk [vmem:[#allocation2 + $0x50] sm:$0xff] %vm77, %v70
    %v84 = vld [vmem:[%s0 + $0x2] sm:$0xff]
    %v85 = vld [vmem:[%s0 + $0xa] sm:$0xff]
    %v86 = vld [vmem:[%s0 + $0x12] sm:$0xff]
    %v87 = vld [vmem:[%s0 + $0x22] sm:$0xff]
    %v88 = vld [vmem:[%s0 + $0x2a] sm:$0xff]
    %v89 = vld [vmem:[%s0 + $0x32] sm:$0xff]
    %96 = vrot.lane.b32.xlu0 %v84, 56
    %v97 = vpop.permute.xlu0 %96
    %98 = vrot.lane.b32.xlu0 %v85, 56
    %v99 = vpop.permute.xlu0 %98
    %100 = vrot.lane.b32.xlu0 %v86, 56
    %v101 = vpop.permute.xlu0 %100
    %102 = vrot.lane.b32.xlu0 %v87, 56
    %v103 = vpop.permute.xlu0 %102
    %104 = vrot.lane.b32.xlu0 %v88, 56
    %v105 = vpop.permute.xlu0 %104
    %106 = vrot.lane.b32.xlu0 %v89, 56
    %v107 = vpop.permute.xlu0 %106
    %vm114 = vcmask 687552
    %115 = vst.msk [vmem:[#allocation2] sm:$0xff] %vm114, %v97
    %116 = vst.msk [vmem:[#allocation2 + $0x10] sm:$0xff] %vm114, %v99
    %117 = vst.msk [vmem:[#allocation2 + $0x20] sm:$0xff] %vm114, %v101
    %118 = vst.msk [vmem:[#allocation2 + $0x30] sm:$0xff] %vm114, %v103
    %119 = vst.msk [vmem:[#allocation2 + $0x40] sm:$0xff] %vm114, %v105
    %120 = vst.msk [vmem:[#allocation2 + $0x50] sm:$0xff] %vm114, %v107
    %v121 = vld [vmem:[%s0 + $0x3] sm:$0xff]
    %v122 = vld [vmem:[%s0 + $0xb] sm:$0xff]
    %v123 = vld [vmem:[%s0 + $0x13] sm:$0xff]
    %v124 = vld [vmem:[%s0 + $0x23] sm:$0xff]
    %v125 = vld [vmem:[%s0 + $0x2b] sm:$0xff]
    %v126 = vld [vmem:[%s0 + $0x33] sm:$0xff]
    %133 = vrot.lane.b32.xlu0 %v121, 84
    %v134 = vpop.permute.xlu0 %133
    %135 = vrot.lane.b32.xlu0 %v122, 84
    %v136 = vpop.permute.xlu0 %135
    %137 = vrot.lane.b32.xlu0 %v123, 84
    %v138 = vpop.permute.xlu0 %137
    %139 = vrot.lane.b32.xlu0 %v124, 84
    %v140 = vpop.permute.xlu0 %139
    %141 = vrot.lane.b32.xlu0 %v125, 84
    %v142 = vpop.permute.xlu0 %141
    %143 = vrot.lane.b32.xlu0 %v126, 84
    %v144 = vpop.permute.xlu0 %143
    %vm151 = vcmask 917152
    %152 = vst.msk [vmem:[#allocation2] sm:$0xff] %vm151, %v134
    %153 = vst.msk [vmem:[#allocation2 + $0x10] sm:$0xff] %vm151, %v136
    %154 = vst.msk [vmem:[#allocation2 + $0x20] sm:$0xff] %vm151, %v138
    %155 = vst.msk [vmem:[#allocation2 + $0x30] sm:$0xff] %vm151, %v140
    %156 = vst.msk [vmem:[#allocation2 + $0x40] sm:$0xff] %vm151, %v142
    %157 = vst.msk [vmem:[#allocation2 + $0x50] sm:$0xff] %vm151, %v144
    %v158 = vld [vmem:[%s0 + $0x4] sm:$0xff]
    %v159 = vld [vmem:[%s0 + $0xc] sm:$0xff]
    %v160 = vld [vmem:[%s0 + $0x14] sm:$0xff]
    %v161 = vld [vmem:[%s0 + $0x24] sm:$0xff]
    %v162 = vld [vmem:[%s0 + $0x2c] sm:$0xff]
    %v163 = vld [vmem:[%s0 + $0x34] sm:$0xff]
    %170 = vrot.lane.b32.xlu0 %v158, 112
    %v171 = vpop.permute.xlu0 %170
    %172 = vrot.lane.b32.xlu0 %v159, 112
    %v173 = vpop.permute.xlu0 %172
    %174 = vrot.lane.b32.xlu0 %v160, 112
    %v175 = vpop.permute.xlu0 %174
    %176 = vrot.lane.b32.xlu0 %v161, 112
    %v177 = vpop.permute.xlu0 %176
    %178 = vrot.lane.b32.xlu0 %v162, 112
    %v179 = vpop.permute.xlu0 %178
    %180 = vrot.lane.b32.xlu0 %v163, 112
    %v181 = vpop.permute.xlu0 %180
    %vm188 = vcmask 1048448
    %189 = vst.msk [vmem:[#allocation2] sm:$0xff] %vm188, %v171
    %vm190 = vcmask 97280
    %191 = vst.msk [vmem:[#allocation2 + $0x8] sm:$0xff] %vm190, %v171
    %192 = vst.msk [vmem:[#allocation2 + $0x10] sm:$0xff] %vm188, %v173
    %193 = vst.msk [vmem:[#allocation2 + $0x18] sm:$0xff] %vm190, %v173
    %194 = vst.msk [vmem:[#allocation2 + $0x20] sm:$0xff] %vm188, %v175
    %195 = vst.msk [vmem:[#allocation2 + $0x28] sm:$0xff] %vm190, %v175
    %196 = vst.msk [vmem:[#allocation2 + $0x30] sm:$0xff] %vm188, %v177
    %197 = vst.msk [vmem:[#allocation2 + $0x38] sm:$0xff] %vm190, %v177
    %198 = vst.msk [vmem:[#allocation2 + $0x40] sm:$0xff] %vm188, %v179
    %199 = vst.msk [vmem:[#allocation2 + $0x48] sm:$0xff] %vm190, %v179
    %200 = vst.msk [vmem:[#allocation2 + $0x50] sm:$0xff] %vm188, %v181
    %201 = vst.msk [vmem:[#allocation2 + $0x58] sm:$0xff] %vm190, %v181
    %v202 = vld [vmem:[#allocation2] sm:$0xff]
    %v203 = vld [vmem:[#allocation2 + $0x8] sm:$0xff]
    %v204 = vld [vmem:[#allocation2 + $0x10] sm:$0xff]
    %v205 = vld [vmem:[#allocation2 + $0x18] sm:$0xff]
    %v206 = vld [vmem:[#allocation2 + $0x20] sm:$0xff]
    %v207 = vld [vmem:[#allocation2 + $0x28] sm:$0xff]
    %v208 = vld [vmem:[#allocation2 + $0x30] sm:$0xff]
    %v209 = vld [vmem:[#allocation2 + $0x38] sm:$0xff]
    %v210 = vld [vmem:[#allocation2 + $0x40] sm:$0xff]
    %v211 = vld [vmem:[#allocation2 + $0x48] sm:$0xff]
    %v212 = vld [vmem:[#allocation2 + $0x50] sm:$0xff]
    %v213 = vld [vmem:[#allocation2 + $0x58] sm:$0xff]
    %v214 = vld [vmem:[%s1] sm:$0xff]
    %v215 = vld [vmem:[%s1 + $0x8] sm:$0xff]
    %v216 = vld [vmem:[%s1 + $0x10] sm:$0xff]
    %v217 = vld [vmem:[%s1 + $0x18] sm:$0xff]
    %v218 = vld [vmem:[%s1 + $0x20] sm:$0xff]
    %v219 = vld [vmem:[%s1 + $0x28] sm:$0xff]
    %v220 = vld [vmem:[%s1 + $0x30] sm:$0xff]
    %v221 = vld [vmem:[%s1 + $0x38] sm:$0xff]
    %v222 = vld [vmem:[%s1 + $0x40] sm:$0xff]
    %v223 = vld [vmem:[%s1 + $0x48] sm:$0xff]
    %v224 = vld [vmem:[%s1 + $0x50] sm:$0xff]
    %v225 = vld [vmem:[%s1 + $0x58] sm:$0xff]
    %v226 = vld [vmem:[%s1 + $0x60] sm:$0xff]
    %v227 = vld [vmem:[%s1 + $0x68] sm:$0xff]
    %v228 = vld [vmem:[%s1 + $0x70] sm:$0xff]
    %v229 = vld [vmem:[%s1 + $0x78] sm:$0xff]
    %v230 = vld [vmem:[%s1 + $0x80] sm:$0xff]
    %v231 = vld [vmem:[%s1 + $0x88] sm:$0x33]
    %v232 = vpack.c.bf16 %v204, %v202
    %v233 = vpack.c.bf16 %v205, %v203
    %v234 = vpack.c.bf16 %v208, %v206
    %v235 = vpack.c.bf16 %v209, %v207
    %v236 = vpack.c.bf16 %v212, %v210
    %v237 = vpack.c.bf16 %v213, %v211
    %v256 = vunpack.c.l.b16 %v214
    %v257 = vunpack.c.h.b16 %v214
    %v258 = vunpack.c.l.b16 %v215
    %v259 = vunpack.c.h.b16 %v215
    %v260 = vunpack.c.l.b16 %v216
    %v261 = vunpack.c.h.b16 %v216
    %v262 = vunpack.c.l.b16 %v217
    %v263 = vunpack.c.h.b16 %v217
    %v264 = vunpack.c.l.b16 %v218
    %v265 = vunpack.c.h.b16 %v218
    %v266 = vunpack.c.l.b16 %v219
    %v267 = vunpack.c.h.b16 %v219
    %v268 = vunpack.c.l.b16 %v220
    %v269 = vunpack.c.h.b16 %v220
    %v270 = vunpack.c.l.b16 %v221
    %v271 = vunpack.c.h.b16 %v221
    %v272 = vunpack.c.l.b16 %v222
    %v273 = vunpack.c.h.b16 %v222
    %v274 = vunpack.c.l.b16 %v223
    %v275 = vunpack.c.h.b16 %v223
    %v276 = vunpack.c.l.b16 %v224
    %v277 = vunpack.c.h.b16 %v224
    %v278 = vunpack.c.l.b16 %v225
    %v279 = vunpack.c.h.b16 %v225
    %v280 = vunpack.c.l.b16 %v226
    %v281 = vunpack.c.h.b16 %v226
    %v282 = vunpack.c.l.b16 %v227
    %v283 = vunpack.c.h.b16 %v227
    %v284 = vunpack.c.l.b16 %v228
    %v285 = vunpack.c.h.b16 %v228
    %v286 = vunpack.c.l.b16 %v229
    %v287 = vunpack.c.h.b16 %v229
    %v288 = vunpack.c.l.b16 %v230
    %v289 = vunpack.c.h.b16 %v230
    %v290 = vunpack.c.l.b16 %v231
    %v291 = vunpack.c.h.b16 %v231
    %v292 = vpack.c.b16 %v258, %v256
    %v293 = vpack.c.b16 %v259, %v257
    %v294 = vpack.c.b16 %v262, %v260
    %v295 = vpack.c.b16 %v263, %v261
    %v296 = vpack.c.b16 %v266, %v264
    %v297 = vpack.c.b16 %v267, %v265
    %v298 = vpack.c.b16 %v270, %v268
    %v299 = vpack.c.b16 %v271, %v269
    %v300 = vpack.c.b16 %v274, %v272
    %v301 = vpack.c.b16 %v275, %v273
    %v302 = vpack.c.b16 %v278, %v276
    %v303 = vpack.c.b16 %v279, %v277
    %v304 = vpack.c.b16 %v282, %v280
    %v305 = vpack.c.b16 %v283, %v281
    %v306 = vpack.c.b16 %v286, %v284
    %v307 = vpack.c.b16 %v287, %v285
    %v308 = vpack.c.b16 %v290, %v288
    %v309 = vpack.c.b16 %v291, %v289
    %v327 = vsel %vm190, %v233, 0
    %v330 = vsel %vm190, %v235, 0
    %v333 = vsel %vm190, %v237, 0
    %vm335 = vcmask 1045504
    %v337 = vsel %vm335, %v308, 0
    %v340 = vsel %vm335, %v309, 0
    %342 = vmatprep.subr.bf16.mxu0 %v307
    %343 = vmatpush1.bf16.msra.mxu0 %v306
    %344 = vmatprep.subr.bf16.mxu0 %v305
    %345 = vmatpush1.bf16.msra.mxu0 %v304
    %346 = vmatprep.subr.bf16.mxu0 %v303
    %347 = vmatpush1.bf16.msra.mxu0 %v302
    %348 = vmatprep.subr.bf16.mxu0 %v301
    %349 = vmatpush1.bf16.msra.mxu0 %v300
    %350 = vmatprep.subr.bf16.mxu0 %v299
    %351 = vmatpush1.bf16.msra.mxu0 %v298
    %352 = vmatprep.subr.bf16.mxu0 %v297
    %353 = vmatpush1.bf16.msra.mxu0 %v296
    %354 = vmatprep.subr.bf16.mxu0 %v295
    %355 = vmatpush1.bf16.msra.mxu0 %v294
    %356 = vmatprep.subr.bf16.mxu0 %v293
    %357 = vmatpush1.bf16.msra.mxu0 %v292
    %358 = vmatprep.subr.bf16.mxu0 0
    %359 = vmatpush2.bf16.msra.mxu0 0
    %360 = vmatprep.subr.bf16.mxu0 0
    %361 = vmatpush2.bf16.msra.mxu0 0
    %362 = vmatprep.subr.bf16.mxu0 0
    %363 = vmatpush2.bf16.msra.mxu0 0
    %364 = vmatprep.subr.bf16.mxu0 0
    %365 = vmatpush2.bf16.msra.mxu0 0
    %366 = vmatprep.subr.bf16.mxu0 0
    %367 = vmatpush2.bf16.msra.mxu0 0
    %368 = vmatprep.subr.bf16.mxu0 0
    %369 = vmatpush2.bf16.msra.mxu0 0
    %370 = vmatprep.subr.bf16.mxu0 0
    %371 = vmatpush2.bf16.msra.mxu0 0
    %372 = vmatprep.subr.bf16.mxu0 %v340
    %373 = vmatpush2.bf16.msra.mxu0 %v337
    %374 = vmatprep.mubr.bf16.mxu0 %v327
    %375 = vmatmul.mubr.bf16.gmra.mxu0 %v232
    %v376 = vpop.f32.mrf.mxu0
    %v377 = vadd.f32 0.0, %v376
    %v378 = vpop.f32.mrf.mxu0
    %v379 = vadd.f32 0.0, %v378
    %v380 = vpop.f32.mrf.mxu0
    %v381 = vadd.f32 0.0, %v380
    %v382 = vpop.f32.mrf.mxu0
    %v383 = vadd.f32 0.0, %v382
    %384 = vmatprep.mubr.bf16.mxu0 %v330
    %385 = vmatmul.mubr.bf16.gmra.mxu0 %v234
    %v386 = vpop.f32.mrf.mxu0
    %v387 = vadd.f32 0.0, %v386
    %v388 = vpop.f32.mrf.mxu0
    %v389 = vadd.f32 0.0, %v388
    %v390 = vpop.f32.mrf.mxu0
    %v391 = vadd.f32 0.0, %v390
    %v392 = vpop.f32.mrf.mxu0
    %v393 = vadd.f32 0.0, %v392
    %394 = vmatprep.mubr.bf16.mxu0 %v333
    %395 = vmatmul.mubr.bf16.gmra.mxu0 %v236
    %v396 = vpop.f32.mrf.mxu0
    %v397 = vadd.f32 0.0, %v396
    %v398 = vpop.f32.mrf.mxu0
    %v399 = vadd.f32 0.0, %v398
    %v400 = vpop.f32.mrf.mxu0
    %v401 = vadd.f32 0.0, %v400
    %v402 = vpop.f32.mrf.mxu0
    %v403 = vadd.f32 0.0, %v402
    %404 = vdwg.mxu0
    %v409 = vrot.slane %v377, 1
    %v410 = vrot.slane %v379, 1
    %v411 = vrot.slane %v391, 1
    %v412 = vrot.slane %v393, 1
    %v417 = vmax.f32 %v377, %v409
    %v418 = vmax.f32 %v379, %v410
    %v419 = vmax.f32 %v391, %v411
    %v420 = vmax.f32 %v393, %v412
    %v425 = vcombine.low %v417, %v418
    %v427 = vunpack.c.l.s4 1966171168
    %v428 = vunpack.c.0.s8 %v427
    %v429 = vlaneseq
    %v430 = vshrl.u32 %v429, 7
    %v431 = vsub.s32 %v428, %v430
    %v432 = vrot.slane %v425, %v431
    %v434 = vunpack.c.l.s4 1966171168
    %v435 = vunpack.c.0.s8 %v434
    %v436 = vlaneseq
    %v437 = vshrl.u32 %v436, 7
    %v438 = vsub.s32 %v435, %v437
    %v439 = vrot.slane %v432, %v438
    %v440 = vcombine.low %v419, %v420
    %v442 = vunpack.c.l.s4 1966171168
    %v443 = vunpack.c.0.s8 %v442
    %v444 = vlaneseq
    %v445 = vshrl.u32 %v444, 7
    %v446 = vsub.s32 %v443, %v445
    %v447 = vrot.slane %v440, %v446
    %v449 = vunpack.c.l.s4 1966171168
    %v450 = vunpack.c.0.s8 %v449
    %v451 = vlaneseq
    %v452 = vshrl.u32 %v451, 7
    %v453 = vsub.s32 %v450, %v452
    %v454 = vrot.slane %v447, %v453
    %v457 = vlaneseq
    %vm458 = vcmp.ge.s32.totalorder %v457, 0
    %vm459 = vcmp.lt.s32.totalorder %v457, 240
    %vm460 = vmand %vm458, %vm459
    %461 = vst.msk [vmem:[#allocation3] ss:$8 sm:$0x3] %vm460, %v439
    %462 = vst.msk [vmem:[#allocation3] ss:$8 sm:$0x0] %vm460, %v439
    %s463 = scalar_lea.vmem [#allocation3], 32
    %464 = vst.msk [vmem:[%s463] ss:$8 sm:$0x3] %vm460, %v454
    %465 = vst.msk [vmem:[%s463] ss:$8 sm:$0x0] %vm460, %v454
    %v466 = vcombine.high %v439, %v439
    %v467 = vcombine.high %v454, %v454
    %s470 = scalar_lea.vmem [#allocation3], 1
    %471 = vst.msk [vmem:[%s470] ss:$8 sm:$0x3] %vm460, %v466
    %472 = vst.msk [vmem:[%s470] ss:$8 sm:$0x0] %vm460, %v466
    %s473 = scalar_lea.vmem [#allocation3], 33
    %474 = vst.msk [vmem:[%s473] ss:$8 sm:$0x3] %vm460, %v467
    %475 = vst.msk [vmem:[%s473] ss:$8 sm:$0x0] %vm460, %v467
    %v476 = vcombine.high %v417, %v418
    %v478 = vunpack.c.l.s4 1966171168
    %v479 = vunpack.c.0.s8 %v478
    %v480 = vlaneseq
    %v481 = vshrl.u32 %v480, 7
    %v482 = vsub.s32 %v479, %v481
    %v483 = vrot.slane %v476, %v482
    %v485 = vunpack.c.l.s4 1966171168
    %v486 = vunpack.c.0.s8 %v485
    %v487 = vlaneseq
    %v488 = vshrl.u32 %v487, 7
    %v489 = vsub.s32 %v486, %v488
    %v490 = vrot.slane %v483, %v489
    %v491 = vcombine.high %v419, %v420
    %v493 = vunpack.c.l.s4 1966171168
    %v494 = vunpack.c.0.s8 %v493
    %v495 = vlaneseq
    %v496 = vshrl.u32 %v495, 7
    %v497 = vsub.s32 %v494, %v496
    %v498 = vrot.slane %v491, %v497
    %v500 = vunpack.c.l.s4 1966171168
    %v501 = vunpack.c.0.s8 %v500
    %v502 = vlaneseq
    %v503 = vshrl.u32 %v502, 7
    %v504 = vsub.s32 %v501, %v503
    %v505 = vrot.slane %v498, %v504
    %s508 = scalar_lea.vmem [#allocation3], 2
    %509 = vst.msk [vmem:[%s508] ss:$8 sm:$0x3] %vm460, %v490
    %510 = vst.msk [vmem:[%s508] ss:$8 sm:$0x0] %vm460, %v490
    %s511 = scalar_lea.vmem [#allocation3], 34
    %512 = vst.msk [vmem:[%s511] ss:$8 sm:$0x3] %vm460, %v505
    %513 = vst.msk [vmem:[%s511] ss:$8 sm:$0x0] %vm460, %v505
    %v514 = vcombine.high %v490, %v490
    %v515 = vcombine.high %v505, %v505
    %s518 = scalar_lea.vmem [#allocation3], 3
    %519 = vst.msk [vmem:[%s518] ss:$8 sm:$0x3] %vm460, %v514
    %520 = vst.msk [vmem:[%s518] ss:$8 sm:$0x0] %vm460, %v514
    %s521 = scalar_lea.vmem [#allocation3], 35
    %522 = vst.msk [vmem:[%s521] ss:$8 sm:$0x3] %vm460, %v515
    %523 = vst.msk [vmem:[%s521] ss:$8 sm:$0x0] %vm460, %v515
    %v528 = vrot.slane %v381, 1
    %v529 = vrot.slane %v383, 1
    %v530 = vrot.slane %v397, 1
    %v531 = vrot.slane %v399, 1
    %v536 = vmax.f32 %v381, %v528
    %v537 = vmax.f32 %v383, %v529
    %v538 = vmax.f32 %v397, %v530
    %v539 = vmax.f32 %v399, %v531
    %v544 = vcombine.low %v536, %v537
    %v546 = vunpack.c.l.s4 1966171168
    %v547 = vunpack.c.0.s8 %v546
    %v548 = vlaneseq
    %v549 = vshrl.u32 %v548, 7
    %v550 = vsub.s32 %v547, %v549
    %v551 = vrot.slane %v544, %v550
    %v553 = vunpack.c.l.s4 1966171168
    %v554 = vunpack.c.0.s8 %v553
    %v555 = vlaneseq
    %v556 = vshrl.u32 %v555, 7
    %v557 = vsub.s32 %v554, %v556
    %v558 = vrot.slane %v551, %v557
    %v559 = vcombine.low %v538, %v539
    %v561 = vunpack.c.l.s4 1966171168
    %v562 = vunpack.c.0.s8 %v561
    %v563 = vlaneseq
    %v564 = vshrl.u32 %v563, 7
    %v565 = vsub.s32 %v562, %v564
    %v566 = vrot.slane %v559, %v565
    %v568 = vunpack.c.l.s4 1966171168
    %v569 = vunpack.c.0.s8 %v568
    %v570 = vlaneseq
    %v571 = vshrl.u32 %v570, 7
    %v572 = vsub.s32 %v569, %v571
    %v573 = vrot.slane %v566, %v572
    %s576 = scalar_lea.vmem [#allocation3], 4
    %577 = vst.msk [vmem:[%s576] ss:$8 sm:$0x3] %vm460, %v558
    %578 = vst.msk [vmem:[%s576] ss:$8 sm:$0x0] %vm460, %v558
    %s579 = scalar_lea.vmem [#allocation3], 36
    %580 = vst.msk [vmem:[%s579] ss:$8 sm:$0x3] %vm460, %v573
    %581 = vst.msk [vmem:[%s579] ss:$8 sm:$0x0] %vm460, %v573
    %v582 = vcombine.high %v558, %v558
    %v583 = vcombine.high %v573, %v573
    %s586 = scalar_lea.vmem [#allocation3], 5
    %587 = vst.msk [vmem:[%s586] ss:$8 sm:$0x3] %vm460, %v582
    %588 = vst.msk [vmem:[%s586] ss:$8 sm:$0x0] %vm460, %v582
    %s589 = scalar_lea.vmem [#allocation3], 37
    %590 = vst.msk [vmem:[%s589] ss:$8 sm:$0x3] %vm460, %v583
    %591 = vst.msk [vmem:[%s589] ss:$8 sm:$0x0] %vm460, %v583
    %v592 = vcombine.high %v536, %v537
    %v594 = vunpack.c.l.s4 1966171168
    %v595 = vunpack.c.0.s8 %v594
    %v596 = vlaneseq
    %v597 = vshrl.u32 %v596, 7
    %v598 = vsub.s32 %v595, %v597
    %v599 = vrot.slane %v592, %v598
    %v601 = vunpack.c.l.s4 1966171168
    %v602 = vunpack.c.0.s8 %v601
    %v603 = vlaneseq
    %v604 = vshrl.u32 %v603, 7
    %v605 = vsub.s32 %v602, %v604
    %v606 = vrot.slane %v599, %v605
    %v607 = vcombine.high %v538, %v539
    %v609 = vunpack.c.l.s4 1966171168
    %v610 = vunpack.c.0.s8 %v609
    %v611 = vlaneseq
    %v612 = vshrl.u32 %v611, 7
    %v613 = vsub.s32 %v610, %v612
    %v614 = vrot.slane %v607, %v613
    %v616 = vunpack.c.l.s4 1966171168
    %v617 = vunpack.c.0.s8 %v616
    %v618 = vlaneseq
    %v619 = vshrl.u32 %v618, 7
    %v620 = vsub.s32 %v617, %v619
    %v621 = vrot.slane %v614, %v620
    %s624 = scalar_lea.vmem [#allocation3], 6
    %625 = vst.msk [vmem:[%s624] ss:$8 sm:$0x3] %vm460, %v606
    %626 = vst.msk [vmem:[%s624] ss:$8 sm:$0x0] %vm460, %v606
    %s627 = scalar_lea.vmem [#allocation3], 38
    %628 = vst.msk [vmem:[%s627] ss:$8 sm:$0x3] %vm460, %v621
    %629 = vst.msk [vmem:[%s627] ss:$8 sm:$0x0] %vm460, %v621
    %v630 = vcombine.high %v606, %v606
    %v631 = vcombine.high %v621, %v621
    %s634 = scalar_lea.vmem [#allocation3], 7
    %635 = vst.msk [vmem:[%s634] ss:$8 sm:$0x3] %vm460, %v630
    %636 = vst.msk [vmem:[%s634] ss:$8 sm:$0x0] %vm460, %v630
    %s637 = scalar_lea.vmem [#allocation3], 39
    %638 = vst.msk [vmem:[%s637] ss:$8 sm:$0x3] %vm460, %v631
    %639 = vst.msk [vmem:[%s637] ss:$8 sm:$0x0] %vm460, %v631
    %v644 = vrot.slane %v387, 1
    %v645 = vrot.slane %v389, 1
    %v646 = vrot.slane %v401, 1
    %v647 = vrot.slane %v403, 1
    %v652 = vmax.f32 %v387, %v644
    %v653 = vmax.f32 %v389, %v645
    %v654 = vmax.f32 %v401, %v646
    %v655 = vmax.f32 %v403, %v647
    %v660 = vcombine.low %v652, %v653
    %v662 = vunpack.c.l.s4 1966171168
    %v663 = vunpack.c.0.s8 %v662
    %v664 = vlaneseq
    %v665 = vshrl.u32 %v664, 7
    %v666 = vsub.s32 %v663, %v665
    %v667 = vrot.slane %v660, %v666
    %v669 = vunpack.c.l.s4 1966171168
    %v670 = vunpack.c.0.s8 %v669
    %v671 = vlaneseq
    %v672 = vshrl.u32 %v671, 7
    %v673 = vsub.s32 %v670, %v672
    %v674 = vrot.slane %v667, %v673
    %v675 = vcombine.low %v654, %v655
    %v677 = vunpack.c.l.s4 1966171168
    %v678 = vunpack.c.0.s8 %v677
    %v679 = vlaneseq
    %v680 = vshrl.u32 %v679, 7
    %v681 = vsub.s32 %v678, %v680
    %v682 = vrot.slane %v675, %v681
    %v684 = vunpack.c.l.s4 1966171168
    %v685 = vunpack.c.0.s8 %v684
    %v686 = vlaneseq
    %v687 = vshrl.u32 %v686, 7
    %v688 = vsub.s32 %v685, %v687
    %v689 = vrot.slane %v682, %v688
    %s692 = scalar_lea.vmem [#allocation3], 16
    %693 = vst.msk [vmem:[%s692] ss:$8 sm:$0x3] %vm460, %v674
    %694 = vst.msk [vmem:[%s692] ss:$8 sm:$0x0] %vm460, %v674
    %s695 = scalar_lea.vmem [#allocation3], 48
    %696 = vst.msk [vmem:[%s695] ss:$8 sm:$0x3] %vm460, %v689
    %697 = vst.msk [vmem:[%s695] ss:$8 sm:$0x0] %vm460, %v689
    %v698 = vcombine.high %v674, %v674
    %v699 = vcombine.high %v689, %v689
    %s702 = scalar_lea.vmem [#allocation3], 17
    %703 = vst.msk [vmem:[%s702] ss:$8 sm:$0x3] %vm460, %v698
    %704 = vst.msk [vmem:[%s702] ss:$8 sm:$0x0] %vm460, %v698
    %s705 = scalar_lea.vmem [#allocation3], 49
    %706 = vst.msk [vmem:[%s705] ss:$8 sm:$0x3] %vm460, %v699
    %707 = vst.msk [vmem:[%s705] ss:$8 sm:$0x0] %vm460, %v699
    %v708 = vcombine.high %v652, %v653
    %v710 = vunpack.c.l.s4 1966171168
    %v711 = vunpack.c.0.s8 %v710
    %v712 = vlaneseq
    %v713 = vshrl.u32 %v712, 7
    %v714 = vsub.s32 %v711, %v713
    %v715 = vrot.slane %v708, %v714
    %v717 = vunpack.c.l.s4 1966171168
    %v718 = vunpack.c.0.s8 %v717
    %v719 = vlaneseq
    %v720 = vshrl.u32 %v719, 7
    %v721 = vsub.s32 %v718, %v720
    %v722 = vrot.slane %v715, %v721
    %v723 = vcombine.high %v654, %v655
    %v725 = vunpack.c.l.s4 1966171168
    %v726 = vunpack.c.0.s8 %v725
    %v727 = vlaneseq
    %v728 = vshrl.u32 %v727, 7
    %v729 = vsub.s32 %v726, %v728
    %v730 = vrot.slane %v723, %v729
    %v732 = vunpack.c.l.s4 1966171168
    %v733 = vunpack.c.0.s8 %v732
    %v734 = vlaneseq
    %v735 = vshrl.u32 %v734, 7
    %v736 = vsub.s32 %v733, %v735
    %v737 = vrot.slane %v730, %v736
    %s740 = scalar_lea.vmem [#allocation3], 18
    %741 = vst.msk [vmem:[%s740] ss:$8 sm:$0x3] %vm460, %v722
    %742 = vst.msk [vmem:[%s740] ss:$8 sm:$0x0] %vm460, %v722
    %s743 = scalar_lea.vmem [#allocation3], 50
    %744 = vst.msk [vmem:[%s743] ss:$8 sm:$0x3] %vm460, %v737
    %745 = vst.msk [vmem:[%s743] ss:$8 sm:$0x0] %vm460, %v737
    %v746 = vcombine.high %v722, %v722
    %v747 = vcombine.high %v737, %v737
    %s750 = scalar_lea.vmem [#allocation3], 19
    %751 = vst.msk [vmem:[%s750] ss:$8 sm:$0x3] %vm460, %v746
    %752 = vst.msk [vmem:[%s750] ss:$8 sm:$0x0] %vm460, %v746
    %s753 = scalar_lea.vmem [#allocation3], 51
    %754 = vst.msk [vmem:[%s753] ss:$8 sm:$0x3] %vm460, %v747
    %755 = vst.msk [vmem:[%s753] ss:$8 sm:$0x0] %vm460, %v747
    %v756 = vld [vmem:[#allocation3] sm:$0xff]
    %v757 = vld [vmem:[#allocation3 + $0x10] sm:$0xf]
    %v758 = vld [vmem:[#allocation3 + $0x20] sm:$0xff]
    %v759 = vld [vmem:[#allocation3 + $0x30] sm:$0xf]
    %764 = vrot.lane.b32.xlu0 %v756, 118
    %v765 = vpop.permute.xlu0 %764
    %766 = vrot.lane.b32.xlu0 %v757, 118
    %v767 = vpop.permute.xlu0 %766
    %768 = vrot.lane.b32.xlu0 %v758, 118
    %v769 = vpop.permute.xlu0 %768
    %770 = vrot.lane.b32.xlu0 %v759, 118
    %v771 = vpop.permute.xlu0 %770
    %v776 = vmax.f32 %v756, %v765
    %v777 = vmax.f32 %v757, %v767
    %v778 = vmax.f32 %v758, %v769
    %v779 = vmax.f32 %v759, %v771
    %v780 = vld [vmem:[%s2] sm:$0x1]
    %v782 = vlaneseq
    %v783 = vshrl.u32 %v782, 7
    %v784 = vsub.s32 0, %v783
    %v785 = vrot.slane %v780, %v784
    %v787 = vadd.f32 %v776, %v785
    %v788 = vadd.f32 %v777, %v785
    %v789 = vadd.f32 %v778, %v785
    %v790 = vadd.f32 %v779, %v785
    %v791 = vmax.f32 %v787, 0.0
    %v792 = vmax.f32 %v788, 0.0
    %v793 = vmax.f32 %v789, 0.0
    %v794 = vmax.f32 %v790, 0.0
    %vm795 = vcmask 80896
    %796 = vst.msk [vmem:[#allocation4] sm:$0xff] %vm795, %v791
    %vm797 = vcmask 76800
    %798 = vst.msk [vmem:[#allocation4 + $0x8] sm:$0xf] %vm797, %v792
    %799 = vst.msk [vmem:[#allocation4 + $0x10] sm:$0xff] %vm795, %v793
    %800 = vst.msk [vmem:[#allocation4 + $0x18] sm:$0xf] %vm797, %v794
    %v801 = vld [vmem:[#allocation3] sm:$0xff]
    %v802 = vld [vmem:[#allocation3 + $0x10] sm:$0xf]
    %v803 = vld [vmem:[#allocation3 + $0x20] sm:$0xff]
    %v804 = vld [vmem:[#allocation3 + $0x30] sm:$0xf]
    %809 = vrot.lane.b32.xlu0 %v801, 118
    %v810 = vpop.permute.xlu0 %809
    %811 = vrot.lane.b32.xlu0 %v802, 118
    %v812 = vpop.permute.xlu0 %811
    %813 = vrot.lane.b32.xlu0 %v803, 118
    %v814 = vpop.permute.xlu0 %813
    %815 = vrot.lane.b32.xlu0 %v804, 118
    %v816 = vpop.permute.xlu0 %815
    %v821 = vmax.f32 %v801, %v810
    %v822 = vmax.f32 %v802, %v812
    %v823 = vmax.f32 %v803, %v814
    %v824 = vmax.f32 %v804, %v816
    %v825 = vld [vmem:[%s2] sm:$0x1]
    %v827 = vlaneseq
    %v828 = vshrl.u32 %v827, 7
    %v829 = vsub.s32 0, %v828
    %v830 = vrot.slane %v825, %v829
    %831 = vrot.lane.b32.xlu0 %v830, 20
    %v832 = vpop.permute.xlu0 %831
    %v834 = vadd.f32 %v821, %v832
    %v835 = vadd.f32 %v822, %v832
    %v836 = vadd.f32 %v823, %v832
    %v837 = vadd.f32 %v824, %v832
    %v838 = vmax.f32 %v834, 0.0
    %v839 = vmax.f32 %v835, 0.0
    %v840 = vmax.f32 %v836, 0.0
    %v841 = vmax.f32 %v837, 0.0
    %846 = vrot.lane.b32.xlu0 %v838, 118
    %v847 = vpop.permute.xlu0 %846
    %848 = vrot.lane.b32.xlu0 %v839, 118
    %v849 = vpop.permute.xlu0 %848
    %850 = vrot.lane.b32.xlu0 %v840, 118
    %v851 = vpop.permute.xlu0 %850
    %852 = vrot.lane.b32.xlu0 %v841, 118
    %v853 = vpop.permute.xlu0 %852
    %vm858 = vcmask 162896
    %859 = vst.msk [vmem:[#allocation4] sm:$0xff] %vm858, %v847
    %vm860 = vcmask 158800
    %861 = vst.msk [vmem:[#allocation4 + $0x8] sm:$0xf] %vm860, %v849
    %862 = vst.msk [vmem:[#allocation4 + $0x10] sm:$0xff] %vm858, %v851
    %863 = vst.msk [vmem:[#allocation4 + $0x18] sm:$0xf] %vm860, %v853
    %v864 = vld [vmem:[#allocation3] sm:$0xff]
    %v865 = vld [vmem:[#allocation3 + $0x10] sm:$0xf]
    %v866 = vld [vmem:[#allocation3 + $0x20] sm:$0xff]
    %v867 = vld [vmem:[#allocation3 + $0x30] sm:$0xf]
    %872 = vrot.lane.b32.xlu0 %v864, 118
    %v873 = vpop.permute.xlu0 %872
    %874 = vrot.lane.b32.xlu0 %v865, 118
    %v875 = vpop.permute.xlu0 %874
    %876 = vrot.lane.b32.xlu0 %v866, 118
    %v877 = vpop.permute.xlu0 %876
    %878 = vrot.lane.b32.xlu0 %v867, 118
    %v879 = vpop.permute.xlu0 %878
    %v884 = vmax.f32 %v864, %v873
    %v885 = vmax.f32 %v865, %v875
    %v886 = vmax.f32 %v866, %v877
    %v887 = vmax.f32 %v867, %v879
    %v888 = vld [vmem:[%s2] sm:$0x1]
    %v890 = vlaneseq
    %v891 = vshrl.u32 %v890, 7
    %v892 = vsub.s32 0, %v891
    %v893 = vrot.slane %v888, %v892
    %894 = vrot.lane.b32.xlu0 %v893, 40
    %v895 = vpop.permute.xlu0 %894
    %v897 = vadd.f32 %v884, %v895
    %v898 = vadd.f32 %v885, %v895
    %v899 = vadd.f32 %v886, %v895
    %v900 = vadd.f32 %v887, %v895
    %v901 = vmax.f32 %v897, 0.0
    %v902 = vmax.f32 %v898, 0.0
    %v903 = vmax.f32 %v899, 0.0
    %v904 = vmax.f32 %v900, 0.0
    %909 = vrot.lane.b32.xlu0 %v901, 108
    %v910 = vpop.permute.xlu0 %909
    %911 = vrot.lane.b32.xlu0 %v902, 108
    %v912 = vpop.permute.xlu0 %911
    %913 = vrot.lane.b32.xlu0 %v903, 108
    %v914 = vpop.permute.xlu0 %913
    %915 = vrot.lane.b32.xlu0 %v904, 108
    %v916 = vpop.permute.xlu0 %915
    %vm921 = vcmask 244896
    %922 = vst.msk [vmem:[#allocation4] sm:$0xff] %vm921, %v910
    %vm923 = vcmask 240800
    %924 = vst.msk [vmem:[#allocation4 + $0x8] sm:$0xf] %vm923, %v912
    %925 = vst.msk [vmem:[#allocation4 + $0x10] sm:$0xff] %vm921, %v914
    %926 = vst.msk [vmem:[#allocation4 + $0x18] sm:$0xf] %vm923, %v916
    %v927 = vld [vmem:[#allocation3] sm:$0xff]
    %v928 = vld [vmem:[#allocation3 + $0x10] sm:$0xf]
    %v929 = vld [vmem:[#allocation3 + $0x20] sm:$0xff]
    %v930 = vld [vmem:[#allocation3 + $0x30] sm:$0xf]
    %935 = vrot.lane.b32.xlu0 %v927, 118
    %v936 = vpop.permute.xlu0 %935
    %937 = vrot.lane.b32.xlu0 %v928, 118
    %v938 = vpop.permute.xlu0 %937
    %939 = vrot.lane.b32.xlu0 %v929, 118
    %v940 = vpop.permute.xlu0 %939
    %941 = vrot.lane.b32.xlu0 %v930, 118
    %v942 = vpop.permute.xlu0 %941
    %v947 = vmax.f32 %v927, %v936
    %v948 = vmax.f32 %v928, %v938
    %v949 = vmax.f32 %v929, %v940
    %v950 = vmax.f32 %v930, %v942
    %v951 = vld [vmem:[%s2] sm:$0x1]
    %v953 = vlaneseq
    %v954 = vshrl.u32 %v953, 7
    %v955 = vsub.s32 0, %v954
    %v956 = vrot.slane %v951, %v955
    %957 = vrot.lane.b32.xlu0 %v956, 60
    %v958 = vpop.permute.xlu0 %957
    %v960 = vadd.f32 %v947, %v958
    %v961 = vadd.f32 %v948, %v958
    %v962 = vadd.f32 %v949, %v958
    %v963 = vadd.f32 %v950, %v958
    %v964 = vmax.f32 %v960, 0.0
    %v965 = vmax.f32 %v961, 0.0
    %v966 = vmax.f32 %v962, 0.0
    %v967 = vmax.f32 %v963, 0.0
    %972 = vrot.lane.b32.xlu0 %v964, 98
    %v973 = vpop.permute.xlu0 %972
    %974 = vrot.lane.b32.xlu0 %v965, 98
    %v975 = vpop.permute.xlu0 %974
    %976 = vrot.lane.b32.xlu0 %v966, 98
    %v977 = vpop.permute.xlu0 %976
    %978 = vrot.lane.b32.xlu0 %v967, 98
    %v979 = vpop.permute.xlu0 %978
    %vm984 = vcmask 326896
    %985 = vst.msk [vmem:[#allocation4] sm:$0xff] %vm984, %v973
    %vm986 = vcmask 322800
    %987 = vst.msk [vmem:[#allocation4 + $0x8] sm:$0xf] %vm986, %v975
    %988 = vst.msk [vmem:[#allocation4 + $0x10] sm:$0xff] %vm984, %v977
    %989 = vst.msk [vmem:[#allocation4 + $0x18] sm:$0xf] %vm986, %v979
    %v990 = vld [vmem:[#allocation3] sm:$0xff]
    %v991 = vld [vmem:[#allocation3 + $0x10] sm:$0xf]
    %v992 = vld [vmem:[#allocation3 + $0x20] sm:$0xff]
    %v993 = vld [vmem:[#allocation3 + $0x30] sm:$0xf]
    %998 = vrot.lane.b32.xlu0 %v990, 118
    %v999 = vpop.permute.xlu0 %998
    %1000 = vrot.lane.b32.xlu0 %v991, 118
    %v1001 = vpop.permute.xlu0 %1000
    %1002 = vrot.lane.b32.xlu0 %v992, 118
    %v1003 = vpop.permute.xlu0 %1002
    %1004 = vrot.lane.b32.xlu0 %v993, 118
    %v1005 = vpop.permute.xlu0 %1004
    %v1010 = vmax.f32 %v990, %v999
    %v1011 = vmax.f32 %v991, %v1001
    %v1012 = vmax.f32 %v992, %v1003
    %v1013 = vmax.f32 %v993, %v1005
    %v1014 = vld [vmem:[%s2] sm:$0x1]
    %v1016 = vlaneseq
    %v1017 = vshrl.u32 %v1016, 7
    %v1018 = vsub.s32 0, %v1017
    %v1019 = vrot.slane %v1014, %v1018
    %1020 = vrot.lane.b32.xlu0 %v1019, 80
    %v1021 = vpop.permute.xlu0 %1020
    %v1023 = vadd.f32 %v1010, %v1021
    %v1024 = vadd.f32 %v1011, %v1021
    %v1025 = vadd.f32 %v1012, %v1021
    %v1026 = vadd.f32 %v1013, %v1021
    %v1027 = vmax.f32 %v1023, 0.0
    %v1028 = vmax.f32 %v1024, 0.0
    %v1029 = vmax.f32 %v1025, 0.0
    %v1030 = vmax.f32 %v1026, 0.0
    %1035 = vrot.lane.b32.xlu0 %v1027, 88
    %v1036 = vpop.permute.xlu0 %1035
    %1037 = vrot.lane.b32.xlu0 %v1028, 88
    %v1038 = vpop.permute.xlu0 %1037
    %1039 = vrot.lane.b32.xlu0 %v1029, 88
    %v1040 = vpop.permute.xlu0 %1039
    %1041 = vrot.lane.b32.xlu0 %v1030, 88
    %v1042 = vpop.permute.xlu0 %1041
    %vm1047 = vcmask 408896
    %1048 = vst.msk [vmem:[#allocation4] sm:$0xff] %vm1047, %v1036
    %vm1049 = vcmask 404800
    %1050 = vst.msk [vmem:[#allocation4 + $0x8] sm:$0xf] %vm1049, %v1038
    %1051 = vst.msk [vmem:[#allocation4 + $0x10] sm:$0xff] %vm1047, %v1040
    %1052 = vst.msk [vmem:[#allocation4 + $0x18] sm:$0xf] %vm1049, %v1042
    %v1053 = vld [vmem:[#allocation3] sm:$0xff]
    %v1054 = vld [vmem:[#allocation3 + $0x10] sm:$0xf]
    %v1055 = vld [vmem:[#allocation3 + $0x20] sm:$0xff]
    %v1056 = vld [vmem:[#allocation3 + $0x30] sm:$0xf]
    %1061 = vrot.lane.b32.xlu0 %v1053, 118
    %v1062 = vpop.permute.xlu0 %1061
    %1063 = vrot.lane.b32.xlu0 %v1054, 118
    %v1064 = vpop.permute.xlu0 %1063
    %1065 = vrot.lane.b32.xlu0 %v1055, 118
    %v1066 = vpop.permute.xlu0 %1065
    %1067 = vrot.lane.b32.xlu0 %v1056, 118
    %v1068 = vpop.permute.xlu0 %1067
    %v1073 = vmax.f32 %v1053, %v1062
    %v1074 = vmax.f32 %v1054, %v1064
    %v1075 = vmax.f32 %v1055, %v1066
    %v1076 = vmax.f32 %v1056, %v1068
    %v1077 = vld [vmem:[%s2] sm:$0x1]
    %v1079 = vlaneseq
    %v1080 = vshrl.u32 %v1079, 7
    %v1081 = vsub.s32 0, %v1080
    %v1082 = vrot.slane %v1077, %v1081
    %1083 = vrot.lane.b32.xlu0 %v1082, 100
    %v1084 = vpop.permute.xlu0 %1083
    %v1086 = vadd.f32 %v1073, %v1084
    %v1087 = vadd.f32 %v1074, %v1084
    %v1088 = vadd.f32 %v1075, %v1084
    %v1089 = vadd.f32 %v1076, %v1084
    %v1090 = vmax.f32 %v1086, 0.0
    %v1091 = vmax.f32 %v1087, 0.0
    %v1092 = vmax.f32 %v1088, 0.0
    %v1093 = vmax.f32 %v1089, 0.0
    %1098 = vrot.lane.b32.xlu0 %v1090, 78
    %v1099 = vpop.permute.xlu0 %1098
    %1100 = vrot.lane.b32.xlu0 %v1091, 78
    %v1101 = vpop.permute.xlu0 %1100
    %1102 = vrot.lane.b32.xlu0 %v1092, 78
    %v1103 = vpop.permute.xlu0 %1102
    %1104 = vrot.lane.b32.xlu0 %v1093, 78
    %v1105 = vpop.permute.xlu0 %1104
    %vm1110 = vcmask 490896
    %1111 = vst.msk [vmem:[#allocation4] sm:$0xff] %vm1110, %v1099
    %vm1112 = vcmask 486800
    %1113 = vst.msk [vmem:[#allocation4 + $0x8] sm:$0xf] %vm1112, %v1101
    %1114 = vst.msk [vmem:[#allocation4 + $0x10] sm:$0xff] %vm1110, %v1103
    %1115 = vst.msk [vmem:[#allocation4 + $0x18] sm:$0xf] %vm1112, %v1105
    %v1116 = vld [vmem:[#allocation3] sm:$0xff]
    %v1117 = vld [vmem:[#allocation3 + $0x8] sm:$0xff]
    %v1118 = vld [vmem:[#allocation3 + $0x10] sm:$0xf]
    %v1119 = vld [vmem:[#allocation3 + $0x18] sm:$0xf]
    %v1120 = vld [vmem:[#allocation3 + $0x20] sm:$0xff]
    %v1121 = vld [vmem:[#allocation3 + $0x28] sm:$0xff]
    %v1122 = vld [vmem:[#allocation3 + $0x30] sm:$0xf]
    %v1123 = vld [vmem:[#allocation3 + $0x38] sm:$0xf]
    %1128 = vrot.lane.b32.xlu0 %v1117, 118
    %v1129 = vpop.permute.xlu0 %1128
    %1130 = vrot.lane.b32.xlu0 %v1119, 118
    %v1131 = vpop.permute.xlu0 %1130
    %1132 = vrot.lane.b32.xlu0 %v1121, 118
    %v1133 = vpop.permute.xlu0 %1132
    %1134 = vrot.lane.b32.xlu0 %v1123, 118
    %v1135 = vpop.permute.xlu0 %1134
    %v1140 = vmax.f32 %v1116, %v1129
    %v1141 = vmax.f32 %v1117, %v1129
    %v1142 = vmax.f32 %v1118, %v1131
    %v1143 = vmax.f32 %v1119, %v1131
    %v1144 = vmax.f32 %v1120, %v1133
    %v1145 = vmax.f32 %v1121, %v1133
    %v1146 = vmax.f32 %v1122, %v1135
    %v1147 = vmax.f32 %v1123, %v1135
    %v1148 = vld [vmem:[%s2] sm:$0x1]
    %v1150 = vlaneseq
    %v1151 = vshrl.u32 %v1150, 7
    %v1152 = vsub.s32 0, %v1151
    %v1153 = vrot.slane %v1148, %v1152
    %1154 = vrot.lane.b32.xlu0 %v1153, 120
    %v1155 = vpop.permute.xlu0 %1154
    %v1157 = vadd.f32 %v1140, %v1155
    %v1158 = vadd.f32 %v1141, %v1155
    %v1159 = vadd.f32 %v1142, %v1155
    %v1160 = vadd.f32 %v1143, %v1155
    %v1161 = vadd.f32 %v1144, %v1155
    %v1162 = vadd.f32 %v1145, %v1155
    %v1163 = vadd.f32 %v1146, %v1155
    %v1164 = vadd.f32 %v1147, %v1155
    %v1165 = vmax.f32 %v1157, 0.0
    %v1166 = vmax.f32 %v1158, 0.0
    %v1167 = vmax.f32 %v1159, 0.0
    %v1168 = vmax.f32 %v1160, 0.0
    %v1169 = vmax.f32 %v1161, 0.0
    %v1170 = vmax.f32 %v1162, 0.0
    %v1171 = vmax.f32 %v1163, 0.0
    %v1172 = vmax.f32 %v1164, 0.0
    %1181 = vrot.lane.b32.xlu0 %v1165, 68
    %v1182 = vpop.permute.xlu0 %1181
    %1183 = vrot.lane.b32.xlu0 %v1166, 68
    %v1184 = vpop.permute.xlu0 %1183
    %1185 = vrot.lane.b32.xlu0 %v1167, 68
    %v1186 = vpop.permute.xlu0 %1185
    %1187 = vrot.lane.b32.xlu0 %v1168, 68
    %v1188 = vpop.permute.xlu0 %1187
    %1189 = vrot.lane.b32.xlu0 %v1169, 68
    %v1190 = vpop.permute.xlu0 %1189
    %1191 = vrot.lane.b32.xlu0 %v1170, 68
    %v1192 = vpop.permute.xlu0 %1191
    %1193 = vrot.lane.b32.xlu0 %v1171, 68
    %v1194 = vpop.permute.xlu0 %1193
    %1195 = vrot.lane.b32.xlu0 %v1172, 68
    %v1196 = vpop.permute.xlu0 %1195
    %vm1197 = vcmask 556032
    %v1198 = vsel %vm1197, %v1182, %v1184
    %v1199 = vsel %vm1197, %v1186, %v1188
    %v1200 = vsel %vm1197, %v1190, %v1192
    %v1201 = vsel %vm1197, %v1194, %v1196
    %vm1206 = vcmask 572896
    %1207 = vst.msk [vmem:[#allocation4] sm:$0xff] %vm1206, %v1198
    %vm1208 = vcmask 568800
    %1209 = vst.msk [vmem:[#allocation4 + $0x8] sm:$0xf] %vm1208, %v1199
    %1210 = vst.msk [vmem:[#allocation4 + $0x10] sm:$0xff] %vm1206, %v1200
    %1211 = vst.msk [vmem:[#allocation4 + $0x18] sm:$0xf] %vm1208, %v1201
    %v1212 = vld [vmem:[#allocation3 + $0x8] sm:$0xff]
    %v1213 = vld [vmem:[#allocation3 + $0x18] sm:$0xf]
    %v1214 = vld [vmem:[#allocation3 + $0x28] sm:$0xff]
    %v1215 = vld [vmem:[#allocation3 + $0x38] sm:$0xf]
    %1220 = vrot.lane.b32.xlu0 %v1212, 118
    %v1221 = vpop.permute.xlu0 %1220
    %1222 = vrot.lane.b32.xlu0 %v1213, 118
    %v1223 = vpop.permute.xlu0 %1222
    %1224 = vrot.lane.b32.xlu0 %v1214, 118
    %v1225 = vpop.permute.xlu0 %1224
    %1226 = vrot.lane.b32.xlu0 %v1215, 118
    %v1227 = vpop.permute.xlu0 %1226
    %v1232 = vmax.f32 %v1212, %v1221
    %v1233 = vmax.f32 %v1213, %v1223
    %v1234 = vmax.f32 %v1214, %v1225
    %v1235 = vmax.f32 %v1215, %v1227
    %v1236 = vld [vmem:[%s2] sm:$0x1]
    %v1238 = vlaneseq
    %v1239 = vshrl.u32 %v1238, 7
    %v1240 = vsub.s32 0, %v1239
    %v1241 = vrot.slane %v1236, %v1240
    %1242 = vrot.lane.b32.xlu0 %v1241, 12
    %v1243 = vpop.permute.xlu0 %1242
    %v1245 = vadd.f32 %v1232, %v1243
    %v1246 = vadd.f32 %v1233, %v1243
    %v1247 = vadd.f32 %v1234, %v1243
    %v1248 = vadd.f32 %v1235, %v1243
    %v1249 = vmax.f32 %v1245, 0.0
    %v1250 = vmax.f32 %v1246, 0.0
    %v1251 = vmax.f32 %v1247, 0.0
    %v1252 = vmax.f32 %v1248, 0.0
    %1257 = vrot.lane.b32.xlu0 %v1249, 58
    %v1258 = vpop.permute.xlu0 %1257
    %1259 = vrot.lane.b32.xlu0 %v1250, 58
    %v1260 = vpop.permute.xlu0 %1259
    %1261 = vrot.lane.b32.xlu0 %v1251, 58
    %v1262 = vpop.permute.xlu0 %1261
    %1263 = vrot.lane.b32.xlu0 %v1252, 58
    %v1264 = vpop.permute.xlu0 %1263
    %vm1269 = vcmask 654896
    %1270 = vst.msk [vmem:[#allocation4] sm:$0xff] %vm1269, %v1258
    %vm1271 = vcmask 650800
    %1272 = vst.msk [vmem:[#allocation4 + $0x8] sm:$0xf] %vm1271, %v1260
    %1273 = vst.msk [vmem:[#allocation4 + $0x10] sm:$0xff] %vm1269, %v1262
    %1274 = vst.msk [vmem:[#allocation4 + $0x18] sm:$0xf] %vm1271, %v1264
    %v1275 = vld [vmem:[#allocation3 + $0x8] sm:$0xff]
    %v1276 = vld [vmem:[#allocation3 + $0x18] sm:$0xf]
    %v1277 = vld [vmem:[#allocation3 + $0x28] sm:$0xff]
    %v1278 = vld [vmem:[#allocation3 + $0x38] sm:$0xf]
    %1283 = vrot.lane.b32.xlu0 %v1275, 118
    %v1284 = vpop.permute.xlu0 %1283
    %1285 = vrot.lane.b32.xlu0 %v1276, 118
    %v1286 = vpop.permute.xlu0 %1285
    %1287 = vrot.lane.b32.xlu0 %v1277, 118
    %v1288 = vpop.permute.xlu0 %1287
    %1289 = vrot.lane.b32.xlu0 %v1278, 118
    %v1290 = vpop.permute.xlu0 %1289
    %v1295 = vmax.f32 %v1275, %v1284
    %v1296 = vmax.f32 %v1276, %v1286
    %v1297 = vmax.f32 %v1277, %v1288
    %v1298 = vmax.f32 %v1278, %v1290
    %v1299 = vld [vmem:[%s2] sm:$0x1]
    %v1301 = vlaneseq
    %v1302 = vshrl.u32 %v1301, 7
    %v1303 = vsub.s32 0, %v1302
    %v1304 = vrot.slane %v1299, %v1303
    %1305 = vrot.lane.b32.xlu0 %v1304, 32
    %v1306 = vpop.permute.xlu0 %1305
    %v1308 = vadd.f32 %v1295, %v1306
    %v1309 = vadd.f32 %v1296, %v1306
    %v1310 = vadd.f32 %v1297, %v1306
    %v1311 = vadd.f32 %v1298, %v1306
    %v1312 = vmax.f32 %v1308, 0.0
    %v1313 = vmax.f32 %v1309, 0.0
    %v1314 = vmax.f32 %v1310, 0.0
    %v1315 = vmax.f32 %v1311, 0.0
    %1320 = vrot.lane.b32.xlu0 %v1312, 48
    %v1321 = vpop.permute.xlu0 %1320
    %1322 = vrot.lane.b32.xlu0 %v1313, 48
    %v1323 = vpop.permute.xlu0 %1322
    %1324 = vrot.lane.b32.xlu0 %v1314, 48
    %v1325 = vpop.permute.xlu0 %1324
    %1326 = vrot.lane.b32.xlu0 %v1315, 48
    %v1327 = vpop.permute.xlu0 %1326
    %vm1332 = vcmask 736896
    %1333 = vst.msk [vmem:[#allocation4] sm:$0xff] %vm1332, %v1321
    %vm1334 = vcmask 732800
    %1335 = vst.msk [vmem:[#allocation4 + $0x8] sm:$0xf] %vm1334, %v1323
    %1336 = vst.msk [vmem:[#allocation4 + $0x10] sm:$0xff] %vm1332, %v1325
    %1337 = vst.msk [vmem:[#allocation4 + $0x18] sm:$0xf] %vm1334, %v1327
    %v1338 = vld [vmem:[#allocation3 + $0x8] sm:$0xff]
    %v1339 = vld [vmem:[#allocation3 + $0x18] sm:$0xf]
    %v1340 = vld [vmem:[#allocation3 + $0x28] sm:$0xff]
    %v1341 = vld [vmem:[#allocation3 + $0x38] sm:$0xf]
    %1346 = vrot.lane.b32.xlu0 %v1338, 118
    %v1347 = vpop.permute.xlu0 %1346
    %1348 = vrot.lane.b32.xlu0 %v1339, 118
    %v1349 = vpop.permute.xlu0 %1348
    %1350 = vrot.lane.b32.xlu0 %v1340, 118
    %v1351 = vpop.permute.xlu0 %1350
    %1352 = vrot.lane.b32.xlu0 %v1341, 118
    %v1353 = vpop.permute.xlu0 %1352
    %v1358 = vmax.f32 %v1338, %v1347
    %v1359 = vmax.f32 %v1339, %v1349
    %v1360 = vmax.f32 %v1340, %v1351
    %v1361 = vmax.f32 %v1341, %v1353
    %v1362 = vld [vmem:[%s2] sm:$0x1]
    %v1364 = vlaneseq
    %v1365 = vshrl.u32 %v1364, 7
    %v1366 = vsub.s32 0, %v1365
    %v1367 = vrot.slane %v1362, %v1366
    %1368 = vrot.lane.b32.xlu0 %v1367, 52
    %v1369 = vpop.permute.xlu0 %1368
    %v1371 = vadd.f32 %v1358, %v1369
    %v1372 = vadd.f32 %v1359, %v1369
    %v1373 = vadd.f32 %v1360, %v1369
    %v1374 = vadd.f32 %v1361, %v1369
    %v1375 = vmax.f32 %v1371, 0.0
    %v1376 = vmax.f32 %v1372, 0.0
    %v1377 = vmax.f32 %v1373, 0.0
    %v1378 = vmax.f32 %v1374, 0.0
    %1383 = vrot.lane.b32.xlu0 %v1375, 38
    %v1384 = vpop.permute.xlu0 %1383
    %1385 = vrot.lane.b32.xlu0 %v1376, 38
    %v1386 = vpop.permute.xlu0 %1385
    %1387 = vrot.lane.b32.xlu0 %v1377, 38
    %v1388 = vpop.permute.xlu0 %1387
    %1389 = vrot.lane.b32.xlu0 %v1378, 38
    %v1390 = vpop.permute.xlu0 %1389
    %vm1395 = vcmask 818896
    %1396 = vst.msk [vmem:[#allocation4] sm:$0xff] %vm1395, %v1384
    %vm1397 = vcmask 814800
    %1398 = vst.msk [vmem:[#allocation4 + $0x8] sm:$0xf] %vm1397, %v1386
    %1399 = vst.msk [vmem:[#allocation4 + $0x10] sm:$0xff] %vm1395, %v1388
    %1400 = vst.msk [vmem:[#allocation4 + $0x18] sm:$0xf] %vm1397, %v1390
    %v1401 = vld [vmem:[#allocation3 + $0x8] sm:$0xff]
    %v1402 = vld [vmem:[#allocation3 + $0x18] sm:$0xf]
    %v1403 = vld [vmem:[#allocation3 + $0x28] sm:$0xff]
    %v1404 = vld [vmem:[#allocation3 + $0x38] sm:$0xf]
    %1409 = vrot.lane.b32.xlu0 %v1401, 118
    %v1410 = vpop.permute.xlu0 %1409
    %1411 = vrot.lane.b32.xlu0 %v1402, 118
    %v1412 = vpop.permute.xlu0 %1411
    %1413 = vrot.lane.b32.xlu0 %v1403, 118
    %v1414 = vpop.permute.xlu0 %1413
    %1415 = vrot.lane.b32.xlu0 %v1404, 118
    %v1416 = vpop.permute.xlu0 %1415
    %v1421 = vmax.f32 %v1401, %v1410
    %v1422 = vmax.f32 %v1402, %v1412
    %v1423 = vmax.f32 %v1403, %v1414
    %v1424 = vmax.f32 %v1404, %v1416
    %v1425 = vld [vmem:[%s2] sm:$0x1]
    %v1427 = vlaneseq
    %v1428 = vshrl.u32 %v1427, 7
    %v1429 = vsub.s32 0, %v1428
    %v1430 = vrot.slane %v1425, %v1429
    %1431 = vrot.lane.b32.xlu0 %v1430, 72
    %v1432 = vpop.permute.xlu0 %1431
    %v1434 = vadd.f32 %v1421, %v1432
    %v1435 = vadd.f32 %v1422, %v1432
    %v1436 = vadd.f32 %v1423, %v1432
    %v1437 = vadd.f32 %v1424, %v1432
    %v1438 = vmax.f32 %v1434, 0.0
    %v1439 = vmax.f32 %v1435, 0.0
    %v1440 = vmax.f32 %v1436, 0.0
    %v1441 = vmax.f32 %v1437, 0.0
    %1446 = vrot.lane.b32.xlu0 %v1438, 28
    %v1447 = vpop.permute.xlu0 %1446
    %1448 = vrot.lane.b32.xlu0 %v1439, 28
    %v1449 = vpop.permute.xlu0 %1448
    %1450 = vrot.lane.b32.xlu0 %v1440, 28
    %v1451 = vpop.permute.xlu0 %1450
    %1452 = vrot.lane.b32.xlu0 %v1441, 28
    %v1453 = vpop.permute.xlu0 %1452
    %vm1458 = vcmask 900896
    %1459 = vst.msk [vmem:[#allocation4] sm:$0xff] %vm1458, %v1447
    %vm1460 = vcmask 896800
    %1461 = vst.msk [vmem:[#allocation4 + $0x8] sm:$0xf] %vm1460, %v1449
    %1462 = vst.msk [vmem:[#allocation4 + $0x10] sm:$0xff] %vm1458, %v1451
    %1463 = vst.msk [vmem:[#allocation4 + $0x18] sm:$0xf] %vm1460, %v1453
    %v1464 = vld [vmem:[#allocation3 + $0x8] sm:$0xff]
    %v1465 = vld [vmem:[#allocation3 + $0x18] sm:$0xf]
    %v1466 = vld [vmem:[#allocation3 + $0x28] sm:$0xff]
    %v1467 = vld [vmem:[#allocation3 + $0x38] sm:$0xf]
    %1472 = vrot.lane.b32.xlu0 %v1464, 118
    %v1473 = vpop.permute.xlu0 %1472
    %1474 = vrot.lane.b32.xlu0 %v1465, 118
    %v1475 = vpop.permute.xlu0 %1474
    %1476 = vrot.lane.b32.xlu0 %v1466, 118
    %v1477 = vpop.permute.xlu0 %1476
    %1478 = vrot.lane.b32.xlu0 %v1467, 118
    %v1479 = vpop.permute.xlu0 %1478
    %v1484 = vmax.f32 %v1464, %v1473
    %v1485 = vmax.f32 %v1465, %v1475
    %v1486 = vmax.f32 %v1466, %v1477
    %v1487 = vmax.f32 %v1467, %v1479
    %v1488 = vld [vmem:[%s2] sm:$0x1]
    %v1490 = vlaneseq
    %v1491 = vshrl.u32 %v1490, 7
    %v1492 = vsub.s32 0, %v1491
    %v1493 = vrot.slane %v1488, %v1492
    %1494 = vrot.lane.b32.xlu0 %v1493, 92
    %v1495 = vpop.permute.xlu0 %1494
    %v1497 = vadd.f32 %v1484, %v1495
    %v1498 = vadd.f32 %v1485, %v1495
    %v1499 = vadd.f32 %v1486, %v1495
    %v1500 = vadd.f32 %v1487, %v1495
    %v1501 = vmax.f32 %v1497, 0.0
    %v1502 = vmax.f32 %v1498, 0.0
    %v1503 = vmax.f32 %v1499, 0.0
    %v1504 = vmax.f32 %v1500, 0.0
    %1509 = vrot.lane.b32.xlu0 %v1501, 18
    %v1510 = vpop.permute.xlu0 %1509
    %1511 = vrot.lane.b32.xlu0 %v1502, 18
    %v1512 = vpop.permute.xlu0 %1511
    %1513 = vrot.lane.b32.xlu0 %v1503, 18
    %v1514 = vpop.permute.xlu0 %1513
    %1515 = vrot.lane.b32.xlu0 %v1504, 18
    %v1516 = vpop.permute.xlu0 %1515
    %vm1521 = vcmask 982896
    %1522 = vst.msk [vmem:[#allocation4] sm:$0xff] %vm1521, %v1510
    %vm1523 = vcmask 978800
    %1524 = vst.msk [vmem:[#allocation4 + $0x8] sm:$0xf] %vm1523, %v1512
    %1525 = vst.msk [vmem:[#allocation4 + $0x10] sm:$0xff] %vm1521, %v1514
    %1526 = vst.msk [vmem:[#allocation4 + $0x18] sm:$0xf] %vm1523, %v1516
    %v1527 = vld [vmem:[#allocation4] sm:$0xff]
    %v1528 = vld [vmem:[#allocation4 + $0x10] sm:$0xff]
    %vm1529 = vcmask 982016
    %1530 = vst.msk [vmem:[#allocation5] sm:$0xff] %vm1529, %v1527
    %1531 = vst.msk [vmem:[#allocation5 + $0x28] sm:$0xff] %vm1529, %v1528
    %v1532 = vld [vmem:[#allocation4 + $0x1] sm:$0xff]
    %v1533 = vld [vmem:[#allocation4 + $0x11] sm:$0xff]
    %1536 = vrot.lane.b32.xlu0 %v1532, 120
    %v1537 = vpop.permute.xlu0 %1536
    %1538 = vrot.lane.b32.xlu0 %v1533, 120
    %v1539 = vpop.permute.xlu0 %1538
    %vm1542 = vcmask 1048512
    %1543 = vst.msk [vmem:[#allocation5] sm:$0xff] %vm1542, %v1537
    %vm1544 = vcmask 916480
    %1545 = vst.msk [vmem:[#allocation5 + $0x8] sm:$0xff] %vm1544, %v1537
    %1546 = vst.msk [vmem:[#allocation5 + $0x28] sm:$0xff] %vm1542, %v1539
    %1547 = vst.msk [vmem:[#allocation5 + $0x30] sm:$0xff] %vm1544, %v1539
    %v1548 = vld [vmem:[#allocation4 + $0x2] sm:$0xff]
    %v1549 = vld [vmem:[#allocation4 + $0x12] sm:$0xff]
    %1552 = vrot.lane.b32.xlu0 %v1548, 112
    %v1553 = vpop.permute.xlu0 %1552
    %1554 = vrot.lane.b32.xlu0 %v1549, 112
    %v1555 = vpop.permute.xlu0 %1554
    %1558 = vst.msk [vmem:[#allocation5 + $0x8] sm:$0xff] %vm188, %v1553
    %vm1559 = vcmask 850944
    %1560 = vst.msk [vmem:[#allocation5 + $0x10] sm:$0xff] %vm1559, %v1553
    %1561 = vst.msk [vmem:[#allocation5 + $0x30] sm:$0xff] %vm188, %v1555
    %1562 = vst.msk [vmem:[#allocation5 + $0x38] sm:$0xff] %vm1559, %v1555
    %v1563 = vld [vmem:[#allocation4 + $0x3] sm:$0xff]
    %v1564 = vld [vmem:[#allocation4 + $0x13] sm:$0xff]
    %1567 = vrot.lane.b32.xlu0 %v1563, 104
    %v1568 = vpop.permute.xlu0 %1567
    %1569 = vrot.lane.b32.xlu0 %v1564, 104
    %v1570 = vpop.permute.xlu0 %1569
    %vm1573 = vcmask 1048384
    %1574 = vst.msk [vmem:[#allocation5 + $0x10] sm:$0xff] %vm1573, %v1568
    %vm1575 = vcmask 785408
    %1576 = vst.msk [vmem:[#allocation5 + $0x18] sm:$0xff] %vm1575, %v1568
    %1577 = vst.msk [vmem:[#allocation5 + $0x38] sm:$0xff] %vm1573, %v1570
    %1578 = vst.msk [vmem:[#allocation5 + $0x40] sm:$0xff] %vm1575, %v1570
    %v1579 = vld [vmem:[#allocation4 + $0x4] sm:$0xff]
    %v1580 = vld [vmem:[#allocation4 + $0x14] sm:$0xff]
    %1583 = vrot.lane.b32.xlu0 %v1579, 96
    %v1584 = vpop.permute.xlu0 %1583
    %1585 = vrot.lane.b32.xlu0 %v1580, 96
    %v1586 = vpop.permute.xlu0 %1585
    %vm1589 = vcmask 1048320
    %1590 = vst.msk [vmem:[#allocation5 + $0x18] sm:$0xff] %vm1589, %v1584
    %vm1591 = vcmask 719872
    %1592 = vst.msk [vmem:[#allocation5 + $0x20] sm:$0xff] %vm1591, %v1584
    %1593 = vst.msk [vmem:[#allocation5 + $0x40] sm:$0xff] %vm1589, %v1586
    %1594 = vst.msk [vmem:[#allocation5 + $0x48] sm:$0xff] %vm1591, %v1586
    %v1595 = vld [vmem:[#allocation5] sm:$0xff]
    %v1596 = vld [vmem:[#allocation5 + $0x8] sm:$0xff]
    %v1597 = vld [vmem:[#allocation5 + $0x10] sm:$0xff]
    %v1598 = vld [vmem:[#allocation5 + $0x18] sm:$0xff]
    %v1599 = vld [vmem:[#allocation5 + $0x20] sm:$0xff]
    %v1600 = vld [vmem:[#allocation5 + $0x28] sm:$0xff]
    %v1601 = vld [vmem:[#allocation5 + $0x30] sm:$0xff]
    %v1602 = vld [vmem:[#allocation5 + $0x38] sm:$0xff]
    %v1603 = vld [vmem:[#allocation5 + $0x40] sm:$0xff]
    %v1604 = vld [vmem:[#allocation5 + $0x48] sm:$0xff]
    %v1605 = vld [vmem:[%s3] sm:$0xff]
    %v1606 = vld [vmem:[%s3 + $0x8] sm:$0xff]
    %v1607 = vld [vmem:[%s3 + $0x10] sm:$0xff]
    %v1608 = vld [vmem:[%s3 + $0x18] sm:$0xff]
    %v1609 = vld [vmem:[%s3 + $0x20] sm:$0xff]
    %v1610 = vld [vmem:[%s3 + $0x28] sm:$0xff]
    %v1611 = vld [vmem:[%s3 + $0x30] sm:$0xff]
    %v1612 = vld [vmem:[%s3 + $0x38] sm:$0xff]
    %v1613 = vld [vmem:[%s3 + $0x40] sm:$0xff]
    %v1614 = vld [vmem:[%s3 + $0x48] sm:$0xff]
    %v1615 = vld [vmem:[%s3 + $0x50] sm:$0xff]
    %v1616 = vld [vmem:[%s3 + $0x58] sm:$0xff]
    %v1617 = vld [vmem:[%s3 + $0x60] sm:$0xff]
    %v1618 = vld [vmem:[%s3 + $0x68] sm:$0xff]
    %v1619 = vld [vmem:[%s3 + $0x70] sm:$0xff]
    %v1620 = vld [vmem:[%s3 + $0x78] sm:$0xff]
    %v1621 = vld [vmem:[%s3 + $0x80] sm:$0xff]
    %v1622 = vld [vmem:[%s3 + $0x88] sm:$0xff]
    %v1623 = vld [vmem:[%s3 + $0x90] sm:$0xff]
    %v1624 = vld [vmem:[%s3 + $0x98] sm:$0xff]
    %v1625 = vld [vmem:[%s3 + $0xa0] sm:$0xff]
    %v1626 = vld [vmem:[%s3 + $0xa8] sm:$0xff]
    %v1627 = vld [vmem:[%s3 + $0xb0] sm:$0xff]
    %v1628 = vld [vmem:[%s3 + $0xb8] sm:$0xff]
    %v1629 = vld [vmem:[%s3 + $0xc0] sm:$0xff]
    %v1630 = vld [vmem:[%s3 + $0xc8] sm:$0xff]
    %v1631 = vld [vmem:[%s3 + $0xd0] sm:$0xff]
    %v1632 = vld [vmem:[%s3 + $0xd8] sm:$0xff]
    %v1633 = vld [vmem:[%s3 + $0xe0] sm:$0xff]
    %v1634 = vld [vmem:[%s3 + $0xe8] sm:$0xff]
    %v1635 = vld [vmem:[%s3 + $0xf0] sm:$0xff]
    %v1636 = vld [vmem:[%s3 + $0xf8] sm:$0xff]
    %v1637 = vld [vmem:[%s3 + $0x100] sm:$0xff]
    %v1638 = vld [vmem:[%s3 + $0x108] sm:$0xff]
    %v1639 = vld [vmem:[%s3 + $0x110] sm:$0xff]
    %v1640 = vld [vmem:[%s3 + $0x118] sm:$0xff]
    %v1641 = vld [vmem:[%s3 + $0x120] sm:$0xff]
    %v1642 = vld [vmem:[%s3 + $0x128] sm:$0xff]
    %v1643 = vld [vmem:[%s3 + $0x130] sm:$0xff]
    %v1644 = vld [vmem:[%s3 + $0x138] sm:$0xff]
    %v1645 = vld [vmem:[%s3 + $0x140] sm:$0xff]
    %v1646 = vld [vmem:[%s3 + $0x148] sm:$0xff]
    %v1647 = vld [vmem:[%s3 + $0x150] sm:$0xff]
    %v1648 = vld [vmem:[%s3 + $0x158] sm:$0xff]
    %v1649 = vld [vmem:[%s3 + $0x160] sm:$0xff]
    %v1650 = vld [vmem:[%s3 + $0x168] sm:$0xff]
    %v1651 = vld [vmem:[%s3 + $0x170] sm:$0xff]
    %v1652 = vld [vmem:[%s3 + $0x178] sm:$0xff]
    %v1653 = vld [vmem:[%s3 + $0x180] sm:$0xff]
    %v1654 = vld [vmem:[%s3 + $0x188] sm:$0xff]
    %v1655 = vld [vmem:[%s3 + $0x190] sm:$0xff]
    %v1656 = vld [vmem:[%s3 + $0x198] sm:$0xff]
    %v1657 = vld [vmem:[%s3 + $0x1a0] sm:$0xff]
    %v1658 = vld [vmem:[%s3 + $0x1a8] sm:$0xff]
    %v1659 = vld [vmem:[%s3 + $0x1b0] sm:$0xff]
    %v1660 = vld [vmem:[%s3 + $0x1b8] sm:$0xff]
    %v1661 = vld [vmem:[%s3 + $0x1c0] sm:$0xff]
    %v1662 = vld [vmem:[%s3 + $0x1c8] sm:$0xff]
    %v1663 = vld [vmem:[%s3 + $0x1d0] sm:$0xff]
    %v1664 = vld [vmem:[%s3 + $0x1d8] sm:$0xff]
    %v1665 = vld [vmem:[%s3 + $0x1e0] sm:$0xff]
    %v1666 = vld [vmem:[%s3 + $0x1e8] sm:$0xff]
    %v1667 = vld [vmem:[%s3 + $0x1f0] sm:$0xff]
    %v1668 = vld [vmem:[%s3 + $0x1f8] sm:$0xff]
    %v1669 = vld [vmem:[%s3 + $0x200] sm:$0xff]
    %v1670 = vld [vmem:[%s3 + $0x208] sm:$0xff]
    %v1671 = vld [vmem:[%s3 + $0x210] sm:$0xff]
    %v1672 = vld [vmem:[%s3 + $0x218] sm:$0xff]
    %v1673 = vld [vmem:[%s3 + $0x220] sm:$0xff]
    %v1674 = vld [vmem:[%s3 + $0x228] sm:$0xff]
    %v1675 = vld [vmem:[%s3 + $0x230] sm:$0xff]
    %v1676 = vld [vmem:[%s3 + $0x238] sm:$0xff]
    %v1677 = vld [vmem:[%s3 + $0x240] sm:$0xff]
    %v1678 = vld [vmem:[%s3 + $0x248] sm:$0xff]
    %v1679 = vld [vmem:[%s3 + $0x250] sm:$0xff]
    %v1680 = vpack.c.bf16 %v1600, %v1595
    %v1681 = vpack.c.bf16 %v1601, %v1596
    %v1682 = vpack.c.bf16 %v1602, %v1597
    %v1683 = vpack.c.bf16 %v1603, %v1598
    %v1684 = vpack.c.bf16 %v1604, %v1599
    %v1760 = vunpack.c.l.b16 %v1605
    %v1761 = vunpack.c.h.b16 %v1605
    %v1762 = vunpack.c.l.b16 %v1606
    %v1763 = vunpack.c.h.b16 %v1606
    %v1764 = vunpack.c.l.b16 %v1607
    %v1765 = vunpack.c.h.b16 %v1607
    %v1766 = vunpack.c.l.b16 %v1608
    %v1767 = vunpack.c.h.b16 %v1608
    %v1768 = vunpack.c.l.b16 %v1609
    %v1769 = vunpack.c.h.b16 %v1609
    %v1770 = vunpack.c.l.b16 %v1610
    %v1771 = vunpack.c.h.b16 %v1610
    %v1772 = vunpack.c.l.b16 %v1611
    %v1773 = vunpack.c.h.b16 %v1611
    %v1774 = vunpack.c.l.b16 %v1612
    %v1775 = vunpack.c.h.b16 %v1612
    %v1776 = vunpack.c.l.b16 %v1613
    %v1777 = vunpack.c.h.b16 %v1613
    %v1778 = vunpack.c.l.b16 %v1614
    %v1779 = vunpack.c.h.b16 %v1614
    %v1780 = vunpack.c.l.b16 %v1615
    %v1781 = vunpack.c.h.b16 %v1615
    %v1782 = vunpack.c.l.b16 %v1616
    %v1783 = vunpack.c.h.b16 %v1616
    %v1784 = vunpack.c.l.b16 %v1617
    %v1785 = vunpack.c.h.b16 %v1617
    %v1786 = vunpack.c.l.b16 %v1618
    %v1787 = vunpack.c.h.b16 %v1618
    %v1788 = vunpack.c.l.b16 %v1619
    %v1789 = vunpack.c.h.b16 %v1619
    %v1790 = vunpack.c.l.b16 %v1620
    %v1791 = vunpack.c.h.b16 %v1620
    %v1792 = vunpack.c.l.b16 %v1621
    %v1793 = vunpack.c.h.b16 %v1621
    %v1794 = vunpack.c.l.b16 %v1622
    %v1795 = vunpack.c.h.b16 %v1622
    %v1796 = vunpack.c.l.b16 %v1623
    %v1797 = vunpack.c.h.b16 %v1623
    %v1798 = vunpack.c.l.b16 %v1624
    %v1799 = vunpack.c.h.b16 %v1624
    %v1800 = vunpack.c.l.b16 %v1625
    %v1801 = vunpack.c.h.b16 %v1625
    %v1802 = vunpack.c.l.b16 %v1626
    %v1803 = vunpack.c.h.b16 %v1626
    %v1804 = vunpack.c.l.b16 %v1627
    %v1805 = vunpack.c.h.b16 %v1627
    %v1806 = vunpack.c.l.b16 %v1628
    %v1807 = vunpack.c.h.b16 %v1628
    %v1808 = vunpack.c.l.b16 %v1629
    %v1809 = vunpack.c.h.b16 %v1629
    %v1810 = vunpack.c.l.b16 %v1630
    %v1811 = vunpack.c.h.b16 %v1630
    %v1812 = vunpack.c.l.b16 %v1631
    %v1813 = vunpack.c.h.b16 %v1631
    %v1814 = vunpack.c.l.b16 %v1632
    %v1815 = vunpack.c.h.b16 %v1632
    %v1816 = vunpack.c.l.b16 %v1633
    %v1817 = vunpack.c.h.b16 %v1633
    %v1818 = vunpack.c.l.b16 %v1634
    %v1819 = vunpack.c.h.b16 %v1634
    %v1820 = vunpack.c.l.b16 %v1635
    %v1821 = vunpack.c.h.b16 %v1635
    %v1822 = vunpack.c.l.b16 %v1636
    %v1823 = vunpack.c.h.b16 %v1636
    %v1824 = vunpack.c.l.b16 %v1637
    %v1825 = vunpack.c.h.b16 %v1637
    %v1826 = vunpack.c.l.b16 %v1638
    %v1827 = vunpack.c.h.b16 %v1638
    %v1828 = vunpack.c.l.b16 %v1639
    %v1829 = vunpack.c.h.b16 %v1639
    %v1830 = vunpack.c.l.b16 %v1640
    %v1831 = vunpack.c.h.b16 %v1640
    %v1832 = vunpack.c.l.b16 %v1641
    %v1833 = vunpack.c.h.b16 %v1641
    %v1834 = vunpack.c.l.b16 %v1642
    %v1835 = vunpack.c.h.b16 %v1642
    %v1836 = vunpack.c.l.b16 %v1643
    %v1837 = vunpack.c.h.b16 %v1643
    %v1838 = vunpack.c.l.b16 %v1644
    %v1839 = vunpack.c.h.b16 %v1644
    %v1840 = vunpack.c.l.b16 %v1645
    %v1841 = vunpack.c.h.b16 %v1645
    %v1842 = vunpack.c.l.b16 %v1646
    %v1843 = vunpack.c.h.b16 %v1646
    %v1844 = vunpack.c.l.b16 %v1647
    %v1845 = vunpack.c.h.b16 %v1647
    %v1846 = vunpack.c.l.b16 %v1648
    %v1847 = vunpack.c.h.b16 %v1648
    %v1848 = vunpack.c.l.b16 %v1649
    %v1849 = vunpack.c.h.b16 %v1649
    %v1850 = vunpack.c.l.b16 %v1650
    %v1851 = vunpack.c.h.b16 %v1650
    %v1852 = vunpack.c.l.b16 %v1651
    %v1853 = vunpack.c.h.b16 %v1651
    %v1854 = vunpack.c.l.b16 %v1652
    %v1855 = vunpack.c.h.b16 %v1652
    %v1856 = vunpack.c.l.b16 %v1653
    %v1857 = vunpack.c.h.b16 %v1653
    %v1858 = vunpack.c.l.b16 %v1654
    %v1859 = vunpack.c.h.b16 %v1654
    %v1860 = vunpack.c.l.b16 %v1655
    %v1861 = vunpack.c.h.b16 %v1655
    %v1862 = vunpack.c.l.b16 %v1656
    %v1863 = vunpack.c.h.b16 %v1656
    %v1864 = vunpack.c.l.b16 %v1657
    %v1865 = vunpack.c.h.b16 %v1657
    %v1866 = vunpack.c.l.b16 %v1658
    %v1867 = vunpack.c.h.b16 %v1658
    %v1868 = vunpack.c.l.b16 %v1659
    %v1869 = vunpack.c.h.b16 %v1659
    %v1870 = vunpack.c.l.b16 %v1660
    %v1871 = vunpack.c.h.b16 %v1660
    %v1872 = vunpack.c.l.b16 %v1661
    %v1873 = vunpack.c.h.b16 %v1661
    %v1874 = vunpack.c.l.b16 %v1662
    %v1875 = vunpack.c.h.b16 %v1662
    %v1876 = vunpack.c.l.b16 %v1663
    %v1877 = vunpack.c.h.b16 %v1663
    %v1878 = vunpack.c.l.b16 %v1664
    %v1879 = vunpack.c.h.b16 %v1664
    %v1880 = vunpack.c.l.b16 %v1665
    %v1881 = vunpack.c.h.b16 %v1665
    %v1882 = vunpack.c.l.b16 %v1666
    %v1883 = vunpack.c.h.b16 %v1666
    %v1884 = vunpack.c.l.b16 %v1667
    %v1885 = vunpack.c.h.b16 %v1667
    %v1886 = vunpack.c.l.b16 %v1668
    %v1887 = vunpack.c.h.b16 %v1668
    %v1888 = vunpack.c.l.b16 %v1669
    %v1889 = vunpack.c.h.b16 %v1669
    %v1890 = vunpack.c.l.b16 %v1670
    %v1891 = vunpack.c.h.b16 %v1670
    %v1892 = vunpack.c.l.b16 %v1671
    %v1893 = vunpack.c.h.b16 %v1671
    %v1894 = vunpack.c.l.b16 %v1672
    %v1895 = vunpack.c.h.b16 %v1672
    %v1896 = vunpack.c.l.b16 %v1673
    %v1897 = vunpack.c.h.b16 %v1673
    %v1898 = vunpack.c.l.b16 %v1674
    %v1899 = vunpack.c.h.b16 %v1674
    %v1900 = vunpack.c.l.b16 %v1675
    %v1901 = vunpack.c.h.b16 %v1675
    %v1902 = vunpack.c.l.b16 %v1676
    %v1903 = vunpack.c.h.b16 %v1676
    %v1904 = vunpack.c.l.b16 %v1677
    %v1905 = vunpack.c.h.b16 %v1677
    %v1906 = vunpack.c.l.b16 %v1678
    %v1907 = vunpack.c.h.b16 %v1678
    %v1908 = vunpack.c.l.b16 %v1679
    %v1909 = vunpack.c.h.b16 %v1679
    %v1910 = vpack.c.b16 %v1762, %v1760
    %v1911 = vpack.c.b16 %v1763, %v1761
    %v1912 = vpack.c.b16 %v1766, %v1764
    %v1913 = vpack.c.b16 %v1767, %v1765
    %v1914 = vpack.c.b16 %v1770, %v1768
    %v1915 = vpack.c.b16 %v1771, %v1769
    %v1916 = vpack.c.b16 %v1774, %v1772
    %v1917 = vpack.c.b16 %v1775, %v1773
    %v1918 = vpack.c.b16 %v1778, %v1776
    %v1919 = vpack.c.b16 %v1779, %v1777
    %v1920 = vpack.c.b16 %v1782, %v1780
    %v1921 = vpack.c.b16 %v1783, %v1781
    %v1922 = vpack.c.b16 %v1786, %v1784
    %v1923 = vpack.c.b16 %v1787, %v1785
    %v1924 = vpack.c.b16 %v1790, %v1788
    %v1925 = vpack.c.b16 %v1791, %v1789
    %v1926 = vpack.c.b16 %v1794, %v1792
    %v1927 = vpack.c.b16 %v1795, %v1793
    %v1928 = vpack.c.b16 %v1798, %v1796
    %v1929 = vpack.c.b16 %v1799, %v1797
    %v1930 = vpack.c.b16 %v1802, %v1800
    %v1931 = vpack.c.b16 %v1803, %v1801
    %v1932 = vpack.c.b16 %v1806, %v1804
    %v1933 = vpack.c.b16 %v1807, %v1805
    %v1934 = vpack.c.b16 %v1810, %v1808
    %v1935 = vpack.c.b16 %v1811, %v1809
    %v1936 = vpack.c.b16 %v1814, %v1812
    %v1937 = vpack.c.b16 %v1815, %v1813
    %v1938 = vpack.c.b16 %v1818, %v1816
    %v1939 = vpack.c.b16 %v1819, %v1817
    %v1940 = vpack.c.b16 %v1822, %v1820
    %v1941 = vpack.c.b16 %v1823, %v1821
    %v1942 = vpack.c.b16 %v1826, %v1824
    %v1943 = vpack.c.b16 %v1827, %v1825
    %v1944 = vpack.c.b16 %v1830, %v1828
    %v1945 = vpack.c.b16 %v1831, %v1829
    %v1946 = vpack.c.b16 %v1834, %v1832
    %v1947 = vpack.c.b16 %v1835, %v1833
    %v1948 = vpack.c.b16 %v1838, %v1836
    %v1949 = vpack.c.b16 %v1839, %v1837
    %v1950 = vpack.c.b16 %v1842, %v1840
    %v1951 = vpack.c.b16 %v1843, %v1841
    %v1952 = vpack.c.b16 %v1846, %v1844
    %v1953 = vpack.c.b16 %v1847, %v1845
    %v1954 = vpack.c.b16 %v1850, %v1848
    %v1955 = vpack.c.b16 %v1851, %v1849
    %v1956 = vpack.c.b16 %v1854, %v1852
    %v1957 = vpack.c.b16 %v1855, %v1853
    %v1958 = vpack.c.b16 %v1858, %v1856
    %v1959 = vpack.c.b16 %v1859, %v1857
    %v1960 = vpack.c.b16 %v1862, %v1860
    %v1961 = vpack.c.b16 %v1863, %v1861
    %v1962 = vpack.c.b16 %v1866, %v1864
    %v1963 = vpack.c.b16 %v1867, %v1865
    %v1964 = vpack.c.b16 %v1870, %v1868
    %v1965 = vpack.c.b16 %v1871, %v1869
    %v1966 = vpack.c.b16 %v1874, %v1872
    %v1967 = vpack.c.b16 %v1875, %v1873
    %v1968 = vpack.c.b16 %v1878, %v1876
    %v1969 = vpack.c.b16 %v1879, %v1877
    %v1970 = vpack.c.b16 %v1882, %v1880
    %v1971 = vpack.c.b16 %v1883, %v1881
    %v1972 = vpack.c.b16 %v1886, %v1884
    %v1973 = vpack.c.b16 %v1887, %v1885
    %v1974 = vpack.c.b16 %v1890, %v1888
    %v1975 = vpack.c.b16 %v1891, %v1889
    %v1976 = vpack.c.b16 %v1894, %v1892
    %v1977 = vpack.c.b16 %v1895, %v1893
    %v1978 = vpack.c.b16 %v1898, %v1896
    %v1979 = vpack.c.b16 %v1899, %v1897
    %v1980 = vpack.c.b16 %v1902, %v1900
    %v1981 = vpack.c.b16 %v1903, %v1901
    %v1982 = vpack.c.b16 %v1906, %v1904
    %v1983 = vpack.c.b16 %v1907, %v1905
    %v1984 = vpack.c.b16 %v1908, %v1908
    %v1985 = vpack.c.b16 %v1909, %v1909
    %v2061 = vsel %vm1591, %v1684, 0
    %vm2063 = vcmask 1043456
    %v2065 = vsel %vm2063, %v1984, 0
    %v2068 = vsel %vm2063, %v1985, 0
    %2070 = vmatprep.subr.bf16.mxu0 %v1925
    %2071 = vmatpush1.bf16.msra.mxu0 %v1924
    %2072 = vmatprep.subr.bf16.mxu0 %v1923
    %2073 = vmatpush1.bf16.msra.mxu0 %v1922
    %2074 = vmatprep.subr.bf16.mxu0 %v1921
    %2075 = vmatpush1.bf16.msra.mxu0 %v1920
    %2076 = vmatprep.subr.bf16.mxu0 %v1919
    %2077 = vmatpush1.bf16.msra.mxu0 %v1918
    %2078 = vmatprep.subr.bf16.mxu0 %v1917
    %2079 = vmatpush1.bf16.msra.mxu0 %v1916
    %2080 = vmatprep.subr.bf16.mxu0 %v1915
    %2081 = vmatpush1.bf16.msra.mxu0 %v1914
    %2082 = vmatprep.subr.bf16.mxu0 %v1913
    %2083 = vmatpush1.bf16.msra.mxu0 %v1912
    %2084 = vmatprep.subr.bf16.mxu0 %v1911
    %2085 = vmatpush1.bf16.msra.mxu0 %v1910
    %2086 = vmatprep.subr.bf16.mxu0 %v1941
    %2087 = vmatpush2.bf16.msra.mxu0 %v1940
    %2088 = vmatprep.subr.bf16.mxu0 %v1939
    %2089 = vmatpush2.bf16.msra.mxu0 %v1938
    %2090 = vmatprep.subr.bf16.mxu0 %v1937
    %2091 = vmatpush2.bf16.msra.mxu0 %v1936
    %2092 = vmatprep.subr.bf16.mxu0 %v1935
    %2093 = vmatpush2.bf16.msra.mxu0 %v1934
    %2094 = vmatprep.subr.bf16.mxu0 %v1933
    %2095 = vmatpush2.bf16.msra.mxu0 %v1932
    %2096 = vmatprep.subr.bf16.mxu0 %v1931
    %2097 = vmatpush2.bf16.msra.mxu0 %v1930
    %2098 = vmatprep.subr.bf16.mxu0 %v1929
    %2099 = vmatpush2.bf16.msra.mxu0 %v1928
    %2100 = vmatprep.subr.bf16.mxu0 %v1927
    %2101 = vmatpush2.bf16.msra.mxu0 %v1926
    %2102 = vmatprep.mubr.bf16.mxu0 %v1681
    %2103 = vmatmul.mubr.bf16.gmra.mxu0 %v1680
    %v2104 = vpop.f32.mrf.mxu0
    %v2105 = vadd.f32 0.0, %v2104
    %v2106 = vpop.f32.mrf.mxu0
    %v2107 = vadd.f32 0.0, %v2106
    %v2108 = vpop.f32.mrf.mxu0
    %v2109 = vadd.f32 0.0, %v2108
    %v2110 = vpop.f32.mrf.mxu0
    %v2111 = vadd.f32 0.0, %v2110
    %2112 = vdwg.mxu0
    %2113 = vmatprep.subr.bf16.mxu0 %v1957
    %2114 = vmatpush1.bf16.msra.mxu0 %v1956
    %2115 = vmatprep.subr.bf16.mxu0 %v1955
    %2116 = vmatpush1.bf16.msra.mxu0 %v1954
    %2117 = vmatprep.subr.bf16.mxu0 %v1953
    %2118 = vmatpush1.bf16.msra.mxu0 %v1952
    %2119 = vmatprep.subr.bf16.mxu0 %v1951
    %2120 = vmatpush1.bf16.msra.mxu0 %v1950
    %2121 = vmatprep.subr.bf16.mxu0 %v1949
    %2122 = vmatpush1.bf16.msra.mxu0 %v1948
    %2123 = vmatprep.subr.bf16.mxu0 %v1947
    %2124 = vmatpush1.bf16.msra.mxu0 %v1946
    %2125 = vmatprep.subr.bf16.mxu0 %v1945
    %2126 = vmatpush1.bf16.msra.mxu0 %v1944
    %2127 = vmatprep.subr.bf16.mxu0 %v1943
    %2128 = vmatpush1.bf16.msra.mxu0 %v1942
    %2129 = vmatprep.subr.bf16.mxu0 %v1973
    %2130 = vmatpush2.bf16.msra.mxu0 %v1972
    %2131 = vmatprep.subr.bf16.mxu0 %v1971
    %2132 = vmatpush2.bf16.msra.mxu0 %v1970
    %2133 = vmatprep.subr.bf16.mxu0 %v1969
    %2134 = vmatpush2.bf16.msra.mxu0 %v1968
    %2135 = vmatprep.subr.bf16.mxu0 %v1967
    %2136 = vmatpush2.bf16.msra.mxu0 %v1966
    %2137 = vmatprep.subr.bf16.mxu0 %v1965
    %2138 = vmatpush2.bf16.msra.mxu0 %v1964
    %2139 = vmatprep.subr.bf16.mxu0 %v1963
    %2140 = vmatpush2.bf16.msra.mxu0 %v1962
    %2141 = vmatprep.subr.bf16.mxu0 %v1961
    %2142 = vmatpush2.bf16.msra.mxu0 %v1960
    %2143 = vmatprep.subr.bf16.mxu0 %v1959
    %2144 = vmatpush2.bf16.msra.mxu0 %v1958
    %2145 = vmatprep.mubr.bf16.mxu0 %v1683
    %2146 = vmatmul.mubr.bf16.gmra.mxu0 %v1682
    %v2147 = vpop.f32.mrf.mxu0
    %v2148 = vadd.f32 %v2105, %v2147
    %v2149 = vpop.f32.mrf.mxu0
    %v2150 = vadd.f32 %v2107, %v2149
    %v2151 = vpop.f32.mrf.mxu0
    %v2152 = vadd.f32 %v2109, %v2151
    %v2153 = vpop.f32.mrf.mxu0
    %v2154 = vadd.f32 %v2111, %v2153
    %2155 = vdwg.mxu0
    %2156 = vmatprep.subr.bf16.mxu0 0
    %2157 = vmatpush1.bf16.msra.mxu0 0
    %2158 = vmatprep.subr.bf16.mxu0 0
    %2159 = vmatpush1.bf16.msra.mxu0 0
    %2160 = vmatprep.subr.bf16.mxu0 %v2068
    %2161 = vmatpush1.bf16.msra.mxu0 %v2065
    %2162 = vmatprep.subr.bf16.mxu0 %v1983
    %2163 = vmatpush1.bf16.msra.mxu0 %v1982
    %2164 = vmatprep.subr.bf16.mxu0 %v1981
    %2165 = vmatpush1.bf16.msra.mxu0 %v1980
    %2166 = vmatprep.subr.bf16.mxu0 %v1979
    %2167 = vmatpush1.bf16.msra.mxu0 %v1978
    %2168 = vmatprep.subr.bf16.mxu0 %v1977
    %2169 = vmatpush1.bf16.msra.mxu0 %v1976
    %2170 = vmatprep.subr.bf16.mxu0 %v1975
    %2171 = vmatpush1.bf16.msra.mxu0 %v1974
    %2172 = vmatprep.subr.bf16.mxu0 0
    %2173 = vmatpush2.bf16.msra.mxu0 0
    %2174 = vmatprep.subr.bf16.mxu0 0
    %2175 = vmatpush2.bf16.msra.mxu0 0
    %2176 = vmatprep.subr.bf16.mxu0 0
    %2177 = vmatpush2.bf16.msra.mxu0 0
    %2178 = vmatprep.subr.bf16.mxu0 0
    %2179 = vmatpush2.bf16.msra.mxu0 0
    %2180 = vmatprep.subr.bf16.mxu0 0
    %2181 = vmatpush2.bf16.msra.mxu0 0
    %2182 = vmatprep.subr.bf16.mxu0 0
    %2183 = vmatpush2.bf16.msra.mxu0 0
    %2184 = vmatprep.subr.bf16.mxu0 0
    %2185 = vmatpush2.bf16.msra.mxu0 0
    %2186 = vmatprep.subr.bf16.mxu0 0
    %2187 = vmatpush2.bf16.msra.mxu0 0
    %2188 = vmatprep.mubr.bf16.mxu0 0
    %2189 = vmatmul.mubr.bf16.gmra.mxu0 %v2061
    %v2190 = vpop.f32.mrf.mxu0
    %v2191 = vadd.f32 %v2148, %v2190
    %v2192 = vpop.f32.mrf.mxu0
    %v2193 = vadd.f32 %v2150, %v2192
    %v2194 = vpop.f32.mrf.mxu0
    %v2195 = vadd.f32 %v2152, %v2194
    %v2196 = vpop.f32.mrf.mxu0
    %v2197 = vadd.f32 %v2154, %v2196
    %2198 = vdwg.mxu0
    %v2203 = vrot.slane %v2191, 1
    %v2204 = vrot.slane %v2193, 1
    %v2205 = vrot.slane %v2195, 1
    %v2206 = vrot.slane %v2197, 1
    %v2211 = vmax.f32 %v2191, %v2203
    %v2212 = vmax.f32 %v2193, %v2204
    %v2213 = vmax.f32 %v2195, %v2205
    %v2214 = vmax.f32 %v2197, %v2206
    %2217 = vrot.lane.b32.xlu0 %v2211, 108
    %v2218 = vpop.permute.xlu0 %2217
    %2219 = vrot.lane.b32.xlu0 %v2213, 108
    %v2220 = vpop.permute.xlu0 %2219
    %v2223 = vmax.f32 %v2211, %v2218
    %v2224 = vmax.f32 %v2213, %v2220
    %v2225 = vld [vmem:[%s4] sm:$0x1]
    %v2227 = vlaneseq
    %v2228 = vshrl.u32 %v2227, 7
    %v2229 = vsub.s32 0, %v2228
    %v2230 = vrot.slane %v2225, %v2229
    %v2232 = vadd.f32 %v2223, %v2230
    %v2233 = vadd.f32 %v2224, %v2230
    %v2234 = vmax.f32 %v2232, 0.0
    %v2235 = vmax.f32 %v2233, 0.0
    %v2239 = vunpack.c.l.s4 1983009808
    %v2240 = vunpack.c.0.s8 %v2239
    %v2241 = vlaneseq
    %v2242 = vshrl.u32 %v2241, 7
    %v2243 = vsub.s32 %v2240, %v2242
    %v2244 = vrot.slane %v2234, %v2243
    %v2246 = vunpack.c.l.s4 1983009808
    %v2247 = vunpack.c.0.s8 %v2246
    %v2248 = vlaneseq
    %v2249 = vshrl.u32 %v2248, 7
    %v2250 = vsub.s32 %v2247, %v2249
    %v2251 = vrot.slane %v2235, %v2250
    %vm2252 = vcmask 1044484
    %v2253 = vsel %vm2252, %v2244, %v2244
    %vm2254 = vcmask 1046534
    %v2255 = vsel %vm2254, %v2244, %v2253
    %v2256 = vrot.slane %v2251, 7
    %vm2257 = vcmask 1041409
    %v2258 = vsel %vm2257, %v2256, %v2255
    %vm2259 = vcmask 1043459
    %v2260 = vsel %vm2259, %v2256, %v2258
    %vm2261 = vcmask 1045509
    %v2262 = vsel %vm2261, %v2256, %v2260
    %vm2263 = vcmask 1047559
    %v2264 = vsel %vm2263, %v2256, %v2262
    %vm2266 = vcmask 156672
    %2267 = vst.msk [vmem:[#allocation6] sm:$0x3] %vm2266, %v2264
    %v2268 = vld [vmem:[%s4] sm:$0x1]
    %v2270 = vlaneseq
    %v2271 = vshrl.u32 %v2270, 7
    %v2272 = vsub.s32 0, %v2271
    %v2273 = vrot.slane %v2268, %v2272
    %2274 = vrot.lane.b32.xlu0 %v2273, 40
    %v2275 = vpop.permute.xlu0 %2274
    %v2277 = vadd.f32 %v2223, %v2275
    %v2278 = vadd.f32 %v2224, %v2275
    %v2279 = vmax.f32 %v2277, 0.0
    %v2280 = vmax.f32 %v2278, 0.0
    %v2284 = vunpack.c.l.s4 1983009808
    %v2285 = vunpack.c.0.s8 %v2284
    %v2286 = vlaneseq
    %v2287 = vshrl.u32 %v2286, 7
    %v2288 = vsub.s32 %v2285, %v2287
    %v2289 = vrot.slane %v2279, %v2288
    %v2291 = vunpack.c.l.s4 1983009808
    %v2292 = vunpack.c.0.s8 %v2291
    %v2293 = vlaneseq
    %v2294 = vshrl.u32 %v2293, 7
    %v2295 = vsub.s32 %v2292, %v2294
    %v2296 = vrot.slane %v2280, %v2295
    %v2297 = vsel %vm2252, %v2289, %v2289
    %v2298 = vsel %vm2254, %v2289, %v2297
    %v2299 = vrot.slane %v2296, 7
    %v2300 = vsel %vm2257, %v2299, %v2298
    %v2301 = vsel %vm2259, %v2299, %v2300
    %v2302 = vsel %vm2261, %v2299, %v2301
    %v2303 = vsel %vm2263, %v2299, %v2302
    %2304 = vrot.lane.b32.xlu0 %v2303, 108
    %v2305 = vpop.permute.xlu0 %2304
    %vm2307 = vcmask 320672
    %2308 = vst.msk [vmem:[#allocation6] sm:$0x3] %vm2307, %v2305
    %v2309 = vld [vmem:[%s4] sm:$0x1]
    %v2311 = vlaneseq
    %v2312 = vshrl.u32 %v2311, 7
    %v2313 = vsub.s32 0, %v2312
    %v2314 = vrot.slane %v2309, %v2313
    %2315 = vrot.lane.b32.xlu0 %v2314, 80
    %v2316 = vpop.permute.xlu0 %2315
    %v2318 = vadd.f32 %v2223, %v2316
    %v2319 = vadd.f32 %v2224, %v2316
    %v2320 = vmax.f32 %v2318, 0.0
    %v2321 = vmax.f32 %v2319, 0.0
    %v2325 = vunpack.c.l.s4 1983009808
    %v2326 = vunpack.c.0.s8 %v2325
    %v2327 = vlaneseq
    %v2328 = vshrl.u32 %v2327, 7
    %v2329 = vsub.s32 %v2326, %v2328
    %v2330 = vrot.slane %v2320, %v2329
    %v2332 = vunpack.c.l.s4 1983009808
    %v2333 = vunpack.c.0.s8 %v2332
    %v2334 = vlaneseq
    %v2335 = vshrl.u32 %v2334, 7
    %v2336 = vsub.s32 %v2333, %v2335
    %v2337 = vrot.slane %v2321, %v2336
    %v2338 = vsel %vm2252, %v2330, %v2330
    %v2339 = vsel %vm2254, %v2330, %v2338
    %v2340 = vrot.slane %v2337, 7
    %v2341 = vsel %vm2257, %v2340, %v2339
    %v2342 = vsel %vm2259, %v2340, %v2341
    %v2343 = vsel %vm2261, %v2340, %v2342
    %v2344 = vsel %vm2263, %v2340, %v2343
    %2345 = vrot.lane.b32.xlu0 %v2344, 88
    %v2346 = vpop.permute.xlu0 %2345
    %vm2348 = vcmask 484672
    %2349 = vst.msk [vmem:[#allocation6] sm:$0x3] %vm2348, %v2346
    %2352 = vrot.lane.b32.xlu0 %v2212, 108
    %v2353 = vpop.permute.xlu0 %2352
    %2354 = vrot.lane.b32.xlu0 %v2214, 108
    %v2355 = vpop.permute.xlu0 %2354
    %v2358 = vmax.f32 %v2211, %v2353
    %v2359 = vmax.f32 %v2212, %v2353
    %v2360 = vmax.f32 %v2213, %v2355
    %v2361 = vmax.f32 %v2214, %v2355
    %v2362 = vld [vmem:[%s4] sm:$0x1]
    %v2364 = vlaneseq
    %v2365 = vshrl.u32 %v2364, 7
    %v2366 = vsub.s32 0, %v2365
    %v2367 = vrot.slane %v2362, %v2366
    %2368 = vrot.lane.b32.xlu0 %v2367, 120
    %v2369 = vpop.permute.xlu0 %2368
    %v2371 = vadd.f32 %v2358, %v2369
    %v2372 = vadd.f32 %v2359, %v2369
    %v2373 = vadd.f32 %v2360, %v2369
    %v2374 = vadd.f32 %v2361, %v2369
    %v2375 = vmax.f32 %v2371, 0.0
    %v2376 = vmax.f32 %v2372, 0.0
    %v2377 = vmax.f32 %v2373, 0.0
    %v2378 = vmax.f32 %v2374, 0.0
    %v2383 = vcombine.low %v2375, %v2376
    %v2385 = vunpack.c.l.s4 1983009808
    %v2386 = vunpack.c.0.s8 %v2385
    %v2387 = vlaneseq
    %v2388 = vshrl.u32 %v2387, 7
    %v2389 = vsub.s32 %v2386, %v2388
    %v2390 = vrot.slane %v2383, %v2389
    %v2391 = vcombine.low %v2377, %v2378
    %v2393 = vunpack.c.l.s4 1983009808
    %v2394 = vunpack.c.0.s8 %v2393
    %v2395 = vlaneseq
    %v2396 = vshrl.u32 %v2395, 7
    %v2397 = vsub.s32 %v2394, %v2396
    %v2398 = vrot.slane %v2391, %v2397
    %v2399 = vsel %vm2252, %v2390, %v2390
    %v2400 = vsel %vm2254, %v2390, %v2399
    %v2401 = vrot.slane %v2398, 7
    %v2402 = vsel %vm2257, %v2401, %v2400
    %v2403 = vsel %vm2259, %v2401, %v2402
    %v2404 = vsel %vm2261, %v2401, %v2403
    %v2405 = vsel %vm2263, %v2401, %v2404
    %2406 = vrot.lane.b32.xlu0 %v2405, 68
    %v2407 = vpop.permute.xlu0 %2406
    %v2408 = vrot.slane %v2407, 2
    %v2409 = vsel %vm1197, %v2407, %v2408
    %vm2411 = vcmask 648672
    %2412 = vst.msk [vmem:[#allocation6] sm:$0x3] %vm2411, %v2409
    %v2413 = vld [vmem:[%s4] sm:$0x1]
    %v2415 = vlaneseq
    %v2416 = vshrl.u32 %v2415, 7
    %v2417 = vsub.s32 0, %v2416
    %v2418 = vrot.slane %v2413, %v2417
    %v2420 = vadd.f32 %v2223, %v2418
    %v2421 = vadd.f32 %v2224, %v2418
    %v2422 = vmax.f32 %v2420, 0.0
    %v2423 = vmax.f32 %v2421, 0.0
    %v2427 = vunpack.c.l.s4 1983009808
    %v2428 = vunpack.c.0.s8 %v2427
    %v2429 = vlaneseq
    %v2430 = vshrl.u32 %v2429, 7
    %v2431 = vsub.s32 %v2428, %v2430
    %v2432 = vrot.slane %v2422, %v2431
    %v2433 = vcombine.high %v2432, %v2432
    %v2435 = vunpack.c.l.s4 1983009808
    %v2436 = vunpack.c.0.s8 %v2435
    %v2437 = vlaneseq
    %v2438 = vshrl.u32 %v2437, 7
    %v2439 = vsub.s32 %v2436, %v2438
    %v2440 = vrot.slane %v2423, %v2439
    %v2441 = vcombine.high %v2440, %v2440
    %v2442 = vsel %vm2252, %v2433, %v2433
    %v2443 = vsel %vm2254, %v2433, %v2442
    %v2444 = vrot.slane %v2441, 7
    %v2445 = vsel %vm2257, %v2444, %v2443
    %v2446 = vsel %vm2259, %v2444, %v2445
    %v2447 = vsel %vm2261, %v2444, %v2446
    %v2448 = vsel %vm2263, %v2444, %v2447
    %2449 = vrot.lane.b32.xlu0 %v2448, 80
    %v2450 = vpop.permute.xlu0 %2449
    %vm2452 = vcmask 812672
    %2453 = vst.msk [vmem:[#allocation6] sm:$0x3] %vm2452, %v2450
    %v2454 = vld [vmem:[%s4] sm:$0x1]
    %v2456 = vlaneseq
    %v2457 = vshrl.u32 %v2456, 7
    %v2458 = vsub.s32 0, %v2457
    %v2459 = vrot.slane %v2454, %v2458
    %2460 = vrot.lane.b32.xlu0 %v2459, 40
    %v2461 = vpop.permute.xlu0 %2460
    %v2463 = vadd.f32 %v2223, %v2461
    %v2464 = vadd.f32 %v2224, %v2461
    %v2465 = vmax.f32 %v2463, 0.0
    %v2466 = vmax.f32 %v2464, 0.0
    %v2470 = vunpack.c.l.s4 1983009808
    %v2471 = vunpack.c.0.s8 %v2470
    %v2472 = vlaneseq
    %v2473 = vshrl.u32 %v2472, 7
    %v2474 = vsub.s32 %v2471, %v2473
    %v2475 = vrot.slane %v2465, %v2474
    %v2476 = vcombine.high %v2475, %v2475
    %v2478 = vunpack.c.l.s4 1983009808
    %v2479 = vunpack.c.0.s8 %v2478
    %v2480 = vlaneseq
    %v2481 = vshrl.u32 %v2480, 7
    %v2482 = vsub.s32 %v2479, %v2481
    %v2483 = vrot.slane %v2466, %v2482
    %v2484 = vcombine.high %v2483, %v2483
    %v2485 = vsel %vm2252, %v2476, %v2476
    %v2486 = vsel %vm2254, %v2476, %v2485
    %v2487 = vrot.slane %v2484, 7
    %v2488 = vsel %vm2257, %v2487, %v2486
    %v2489 = vsel %vm2259, %v2487, %v2488
    %v2490 = vsel %vm2261, %v2487, %v2489
    %v2491 = vsel %vm2263, %v2487, %v2490
    %2492 = vrot.lane.b32.xlu0 %v2491, 60
    %v2493 = vpop.permute.xlu0 %2492
    %vm2495 = vcmask 976672
    %2496 = vst.msk [vmem:[#allocation6] sm:$0x3] %vm2495, %v2493
    %v2497 = vld [vmem:[%s4] sm:$0x1]
    %v2499 = vlaneseq
    %v2500 = vshrl.u32 %v2499, 7
    %v2501 = vsub.s32 0, %v2500
    %v2502 = vrot.slane %v2497, %v2501
    %2503 = vrot.lane.b32.xlu0 %v2502, 80
    %v2504 = vpop.permute.xlu0 %2503
    %v2506 = vadd.f32 %v2223, %v2504
    %v2507 = vadd.f32 %v2224, %v2504
    %v2508 = vmax.f32 %v2506, 0.0
    %v2509 = vmax.f32 %v2507, 0.0
    %v2513 = vunpack.c.l.s4 1983009808
    %v2514 = vunpack.c.0.s8 %v2513
    %v2515 = vlaneseq
    %v2516 = vshrl.u32 %v2515, 7
    %v2517 = vsub.s32 %v2514, %v2516
    %v2518 = vrot.slane %v2508, %v2517
    %v2519 = vcombine.high %v2518, %v2518
    %v2521 = vunpack.c.l.s4 1983009808
    %v2522 = vunpack.c.0.s8 %v2521
    %v2523 = vlaneseq
    %v2524 = vshrl.u32 %v2523, 7
    %v2525 = vsub.s32 %v2522, %v2524
    %v2526 = vrot.slane %v2509, %v2525
    %v2527 = vcombine.high %v2526, %v2526
    %v2528 = vsel %vm2252, %v2519, %v2519
    %v2529 = vsel %vm2254, %v2519, %v2528
    %v2530 = vrot.slane %v2527, 7
    %v2531 = vsel %vm2257, %v2530, %v2529
    %v2532 = vsel %vm2259, %v2530, %v2531
    %v2533 = vsel %vm2261, %v2530, %v2532
    %v2534 = vsel %vm2263, %v2530, %v2533
    %2535 = vrot.lane.b32.xlu0 %v2534, 40
    %v2536 = vpop.permute.xlu0 %2535
    %v2537 = vrot.slane %v2536, 6
    %vm2538 = vcmask 326656
    %v2539 = vsel %vm2538, %v2537, %v2536
    %vm2541 = vcmask 1042368
    %vm2542 = vcmask 93186
    %vm2543 = vmor %vm2542, %vm2541
    %2544 = vst.msk [vmem:[#allocation6] sm:$0xf] %vm2543, %v2539
    %v2545 = vld [vmem:[%s4] sm:$0x1]
    %v2547 = vlaneseq
    %v2548 = vshrl.u32 %v2547, 7
    %v2549 = vsub.s32 0, %v2548
    %v2550 = vrot.slane %v2545, %v2549
    %2551 = vrot.lane.b32.xlu0 %v2550, 120
    %v2552 = vpop.permute.xlu0 %2551
    %v2554 = vadd.f32 %v2358, %v2552
    %v2555 = vadd.f32 %v2359, %v2552
    %v2556 = vadd.f32 %v2360, %v2552
    %v2557 = vadd.f32 %v2361, %v2552
    %v2558 = vmax.f32 %v2554, 0.0
    %v2559 = vmax.f32 %v2555, 0.0
    %v2560 = vmax.f32 %v2556, 0.0
    %v2561 = vmax.f32 %v2557, 0.0
    %v2566 = vcombine.low %v2558, %v2559
    %v2568 = vunpack.c.l.s4 1983009808
    %v2569 = vunpack.c.0.s8 %v2568
    %v2570 = vlaneseq
    %v2571 = vshrl.u32 %v2570, 7
    %v2572 = vsub.s32 %v2569, %v2571
    %v2573 = vrot.slane %v2566, %v2572
    %v2574 = vcombine.high %v2573, %v2573
    %v2575 = vcombine.low %v2560, %v2561
    %v2577 = vunpack.c.l.s4 1983009808
    %v2578 = vunpack.c.0.s8 %v2577
    %v2579 = vlaneseq
    %v2580 = vshrl.u32 %v2579, 7
    %v2581 = vsub.s32 %v2578, %v2580
    %v2582 = vrot.slane %v2575, %v2581
    %v2583 = vcombine.high %v2582, %v2582
    %v2584 = vsel %vm2252, %v2574, %v2574
    %v2585 = vsel %vm2254, %v2574, %v2584
    %v2586 = vrot.slane %v2583, 7
    %v2587 = vsel %vm2257, %v2586, %v2585
    %v2588 = vsel %vm2259, %v2586, %v2587
    %v2589 = vsel %vm2261, %v2586, %v2588
    %v2590 = vsel %vm2263, %v2586, %v2589
    %2591 = vrot.lane.b32.xlu0 %v2590, 20
    %v2592 = vpop.permute.xlu0 %2591
    %v2593 = vrot.slane %v2592, 2
    %vm2594 = vcmask 162816
    %v2595 = vsel %vm2594, %v2592, %v2593
    %vm2597 = vcmask 255072
    %2598 = vst.msk [vmem:[#allocation6 + $0x2] sm:$0x3] %vm2597, %v2595
    %v2599 = vld [vmem:[%s4] sm:$0x1]
    %v2601 = vlaneseq
    %v2602 = vshrl.u32 %v2601, 7
    %v2603 = vsub.s32 0, %v2602
    %v2604 = vrot.slane %v2599, %v2603
    %v2606 = vadd.f32 %v2223, %v2604
    %v2607 = vadd.f32 %v2224, %v2604
    %v2608 = vmax.f32 %v2606, 0.0
    %v2609 = vmax.f32 %v2607, 0.0
    %v2612 = vcombine.high %v2608, %v2608
    %v2614 = vunpack.c.l.s4 1983009808
    %v2615 = vunpack.c.0.s8 %v2614
    %v2616 = vlaneseq
    %v2617 = vshrl.u32 %v2616, 7
    %v2618 = vsub.s32 %v2615, %v2617
    %v2619 = vrot.slane %v2612, %v2618
    %v2620 = vcombine.high %v2609, %v2609
    %v2622 = vunpack.c.l.s4 1983009808
    %v2623 = vunpack.c.0.s8 %v2622
    %v2624 = vlaneseq
    %v2625 = vshrl.u32 %v2624, 7
    %v2626 = vsub.s32 %v2623, %v2625
    %v2627 = vrot.slane %v2620, %v2626
    %v2628 = vsel %vm2252, %v2619, %v2619
    %v2629 = vsel %vm2254, %v2619, %v2628
    %v2630 = vrot.slane %v2627, 7
    %v2631 = vsel %vm2257, %v2630, %v2629
    %v2632 = vsel %vm2259, %v2630, %v2631
    %v2633 = vsel %vm2261, %v2630, %v2632
    %v2634 = vsel %vm2263, %v2630, %v2633
    %2635 = vrot.lane.b32.xlu0 %v2634, 32
    %v2636 = vpop.permute.xlu0 %2635
    %vm2638 = vcmask 419072
    %2639 = vst.msk [vmem:[#allocation6 + $0x2] sm:$0x3] %vm2638, %v2636
    %v2640 = vld [vmem:[%s4] sm:$0x1]
    %v2642 = vlaneseq
    %v2643 = vshrl.u32 %v2642, 7
    %v2644 = vsub.s32 0, %v2643
    %v2645 = vrot.slane %v2640, %v2644
    %2646 = vrot.lane.b32.xlu0 %v2645, 40
    %v2647 = vpop.permute.xlu0 %2646
    %v2649 = vadd.f32 %v2223, %v2647
    %v2650 = vadd.f32 %v2224, %v2647
    %v2651 = vmax.f32 %v2649, 0.0
    %v2652 = vmax.f32 %v2650, 0.0
    %v2655 = vcombine.high %v2651, %v2651
    %v2657 = vunpack.c.l.s4 1983009808
    %v2658 = vunpack.c.0.s8 %v2657
    %v2659 = vlaneseq
    %v2660 = vshrl.u32 %v2659, 7
    %v2661 = vsub.s32 %v2658, %v2660
    %v2662 = vrot.slane %v2655, %v2661
    %v2663 = vcombine.high %v2652, %v2652
    %v2665 = vunpack.c.l.s4 1983009808
    %v2666 = vunpack.c.0.s8 %v2665
    %v2667 = vlaneseq
    %v2668 = vshrl.u32 %v2667, 7
    %v2669 = vsub.s32 %v2666, %v2668
    %v2670 = vrot.slane %v2663, %v2669
    %v2671 = vsel %vm2252, %v2662, %v2662
    %v2672 = vsel %vm2254, %v2662, %v2671
    %v2673 = vrot.slane %v2670, 7
    %v2674 = vsel %vm2257, %v2673, %v2672
    %v2675 = vsel %vm2259, %v2673, %v2674
    %v2676 = vsel %vm2261, %v2673, %v2675
    %v2677 = vsel %vm2263, %v2673, %v2676
    %2678 = vrot.lane.b32.xlu0 %v2677, 12
    %v2679 = vpop.permute.xlu0 %2678
    %vm2681 = vcmask 583072
    %2682 = vst.msk [vmem:[#allocation6 + $0x2] sm:$0x3] %vm2681, %v2679
    %v2683 = vld [vmem:[%s4] sm:$0x1]
    %v2685 = vlaneseq
    %v2686 = vshrl.u32 %v2685, 7
    %v2687 = vsub.s32 0, %v2686
    %v2688 = vrot.slane %v2683, %v2687
    %2689 = vrot.lane.b32.xlu0 %v2688, 80
    %v2690 = vpop.permute.xlu0 %2689
    %v2692 = vadd.f32 %v2223, %v2690
    %v2693 = vadd.f32 %v2224, %v2690
    %v2694 = vmax.f32 %v2692, 0.0
    %v2695 = vmax.f32 %v2693, 0.0
    %v2698 = vcombine.high %v2694, %v2694
    %v2700 = vunpack.c.l.s4 1983009808
    %v2701 = vunpack.c.0.s8 %v2700
    %v2702 = vlaneseq
    %v2703 = vshrl.u32 %v2702, 7
    %v2704 = vsub.s32 %v2701, %v2703
    %v2705 = vrot.slane %v2698, %v2704
    %v2706 = vcombine.high %v2695, %v2695
    %v2708 = vunpack.c.l.s4 1983009808
    %v2709 = vunpack.c.0.s8 %v2708
    %v2710 = vlaneseq
    %v2711 = vshrl.u32 %v2710, 7
    %v2712 = vsub.s32 %v2709, %v2711
    %v2713 = vrot.slane %v2706, %v2712
    %v2714 = vsel %vm2252, %v2705, %v2705
    %v2715 = vsel %vm2254, %v2705, %v2714
    %v2716 = vrot.slane %v2713, 7
    %v2717 = vsel %vm2257, %v2716, %v2715
    %v2718 = vsel %vm2259, %v2716, %v2717
    %v2719 = vsel %vm2261, %v2716, %v2718
    %v2720 = vsel %vm2263, %v2716, %v2719
    %2721 = vrot.lane.b32.xlu0 %v2720, 120
    %v2722 = vpop.permute.xlu0 %2721
    %vm2724 = vcmask 747072
    %2725 = vst.msk [vmem:[#allocation6 + $0x2] sm:$0x3] %vm2724, %v2722
    %v2726 = vld [vmem:[%s4] sm:$0x1]
    %v2728 = vlaneseq
    %v2729 = vshrl.u32 %v2728, 7
    %v2730 = vsub.s32 0, %v2729
    %v2731 = vrot.slane %v2726, %v2730
    %2732 = vrot.lane.b32.xlu0 %v2731, 120
    %v2733 = vpop.permute.xlu0 %2732
    %v2735 = vadd.f32 %v2358, %v2733
    %v2736 = vadd.f32 %v2359, %v2733
    %v2737 = vadd.f32 %v2360, %v2733
    %v2738 = vadd.f32 %v2361, %v2733
    %v2739 = vmax.f32 %v2735, 0.0
    %v2740 = vmax.f32 %v2736, 0.0
    %v2741 = vmax.f32 %v2737, 0.0
    %v2742 = vmax.f32 %v2738, 0.0
    %v2747 = vcombine.high %v2739, %v2740
    %v2749 = vunpack.c.l.s4 1983009808
    %v2750 = vunpack.c.0.s8 %v2749
    %v2751 = vlaneseq
    %v2752 = vshrl.u32 %v2751, 7
    %v2753 = vsub.s32 %v2750, %v2752
    %v2754 = vrot.slane %v2747, %v2753
    %v2755 = vcombine.high %v2741, %v2742
    %v2757 = vunpack.c.l.s4 1983009808
    %v2758 = vunpack.c.0.s8 %v2757
    %v2759 = vlaneseq
    %v2760 = vshrl.u32 %v2759, 7
    %v2761 = vsub.s32 %v2758, %v2760
    %v2762 = vrot.slane %v2755, %v2761
    %v2763 = vsel %vm2252, %v2754, %v2754
    %v2764 = vsel %vm2254, %v2754, %v2763
    %v2765 = vrot.slane %v2762, 7
    %v2766 = vsel %vm2257, %v2765, %v2764
    %v2767 = vsel %vm2259, %v2765, %v2766
    %v2768 = vsel %vm2261, %v2765, %v2767
    %v2769 = vsel %vm2263, %v2765, %v2768
    %2770 = vrot.lane.b32.xlu0 %v2769, 100
    %v2771 = vpop.permute.xlu0 %2770
    %v2772 = vrot.slane %v2771, 2
    %vm2773 = vcmask 818176
    %v2774 = vsel %vm2773, %v2771, %v2772
    %vm2776 = vcmask 911072
    %2777 = vst.msk [vmem:[#allocation6 + $0x2] sm:$0x3] %vm2776, %v2774
    %v2778 = vld [vmem:[%s4] sm:$0x1]
    %v2780 = vlaneseq
    %v2781 = vshrl.u32 %v2780, 7
    %v2782 = vsub.s32 0, %v2781
    %v2783 = vrot.slane %v2778, %v2782
    %v2785 = vadd.f32 %v2223, %v2783
    %v2786 = vadd.f32 %v2224, %v2783
    %v2787 = vmax.f32 %v2785, 0.0
    %v2788 = vmax.f32 %v2786, 0.0
    %v2791 = vcombine.high %v2787, %v2787
    %v2793 = vunpack.c.l.s4 1983009808
    %v2794 = vunpack.c.0.s8 %v2793
    %v2795 = vlaneseq
    %v2796 = vshrl.u32 %v2795, 7
    %v2797 = vsub.s32 %v2794, %v2796
    %v2798 = vrot.slane %v2791, %v2797
    %v2799 = vcombine.high %v2798, %v2798
    %v2800 = vcombine.high %v2788, %v2788
    %v2802 = vunpack.c.l.s4 1983009808
    %v2803 = vunpack.c.0.s8 %v2802
    %v2804 = vlaneseq
    %v2805 = vshrl.u32 %v2804, 7
    %v2806 = vsub.s32 %v2803, %v2805
    %v2807 = vrot.slane %v2800, %v2806
    %v2808 = vcombine.high %v2807, %v2807
    %v2809 = vsel %vm2252, %v2799, %v2799
    %v2810 = vsel %vm2254, %v2799, %v2809
    %v2811 = vrot.slane %v2808, 7
    %v2812 = vsel %vm2257, %v2811, %v2810
    %v2813 = vsel %vm2259, %v2811, %v2812
    %v2814 = vsel %vm2261, %v2811, %v2813
    %v2815 = vsel %vm2263, %v2811, %v2814
    %2816 = vrot.lane.b32.xlu0 %v2815, 112
    %v2817 = vpop.permute.xlu0 %2816
    %v2818 = vrot.slane %v2817, 6
    %v2819 = vsel %vm1544, %v2818, %v2817
    %vm2821 = vcmask 1042304
    %vm2822 = vcmask 27650
    %vm2823 = vmor %vm2822, %vm2821
    %2824 = vst.msk [vmem:[#allocation6 + $0x2] sm:$0xf] %vm2823, %v2819
    %v2825 = vld [vmem:[%s4] sm:$0x1]
    %v2827 = vlaneseq
    %v2828 = vshrl.u32 %v2827, 7
    %v2829 = vsub.s32 0, %v2828
    %v2830 = vrot.slane %v2825, %v2829
    %2831 = vrot.lane.b32.xlu0 %v2830, 40
    %v2832 = vpop.permute.xlu0 %2831
    %v2834 = vadd.f32 %v2223, %v2832
    %v2835 = vadd.f32 %v2224, %v2832
    %v2836 = vmax.f32 %v2834, 0.0
    %v2837 = vmax.f32 %v2835, 0.0
    %v2840 = vcombine.high %v2836, %v2836
    %v2842 = vunpack.c.l.s4 1983009808
    %v2843 = vunpack.c.0.s8 %v2842
    %v2844 = vlaneseq
    %v2845 = vshrl.u32 %v2844, 7
    %v2846 = vsub.s32 %v2843, %v2845
    %v2847 = vrot.slane %v2840, %v2846
    %v2848 = vcombine.high %v2847, %v2847
    %v2849 = vcombine.high %v2837, %v2837
    %v2851 = vunpack.c.l.s4 1983009808
    %v2852 = vunpack.c.0.s8 %v2851
    %v2853 = vlaneseq
    %v2854 = vshrl.u32 %v2853, 7
    %v2855 = vsub.s32 %v2852, %v2854
    %v2856 = vrot.slane %v2849, %v2855
    %v2857 = vcombine.high %v2856, %v2856
    %v2858 = vsel %vm2252, %v2848, %v2848
    %v2859 = vsel %vm2254, %v2848, %v2858
    %v2860 = vrot.slane %v2857, 7
    %v2861 = vsel %vm2257, %v2860, %v2859
    %v2862 = vsel %vm2259, %v2860, %v2861
    %v2863 = vsel %vm2261, %v2860, %v2862
    %v2864 = vsel %vm2263, %v2860, %v2863
    %2865 = vrot.lane.b32.xlu0 %v2864, 92
    %v2866 = vpop.permute.xlu0 %2865
    %vm2868 = vcmask 189472
    %2869 = vst.msk [vmem:[#allocation6 + $0x4] sm:$0x3] %vm2868, %v2866
    %v2870 = vld [vmem:[%s4] sm:$0x1]
    %v2872 = vlaneseq
    %v2873 = vshrl.u32 %v2872, 7
    %v2874 = vsub.s32 0, %v2873
    %v2875 = vrot.slane %v2870, %v2874
    %2876 = vrot.lane.b32.xlu0 %v2875, 80
    %v2877 = vpop.permute.xlu0 %2876
    %v2879 = vadd.f32 %v2223, %v2877
    %v2880 = vadd.f32 %v2224, %v2877
    %v2881 = vmax.f32 %v2879, 0.0
    %v2882 = vmax.f32 %v2880, 0.0
    %v2885 = vcombine.high %v2881, %v2881
    %v2887 = vunpack.c.l.s4 1983009808
    %v2888 = vunpack.c.0.s8 %v2887
    %v2889 = vlaneseq
    %v2890 = vshrl.u32 %v2889, 7
    %v2891 = vsub.s32 %v2888, %v2890
    %v2892 = vrot.slane %v2885, %v2891
    %v2893 = vcombine.high %v2892, %v2892
    %v2894 = vcombine.high %v2882, %v2882
    %v2896 = vunpack.c.l.s4 1983009808
    %v2897 = vunpack.c.0.s8 %v2896
    %v2898 = vlaneseq
    %v2899 = vshrl.u32 %v2898, 7
    %v2900 = vsub.s32 %v2897, %v2899
    %v2901 = vrot.slane %v2894, %v2900
    %v2902 = vcombine.high %v2901, %v2901
    %v2903 = vsel %vm2252, %v2893, %v2893
    %v2904 = vsel %vm2254, %v2893, %v2903
    %v2905 = vrot.slane %v2902, 7
    %v2906 = vsel %vm2257, %v2905, %v2904
    %v2907 = vsel %vm2259, %v2905, %v2906
    %v2908 = vsel %vm2261, %v2905, %v2907
    %v2909 = vsel %vm2263, %v2905, %v2908
    %2910 = vrot.lane.b32.xlu0 %v2909, 72
    %v2911 = vpop.permute.xlu0 %2910
    %vm2913 = vcmask 353472
    %2914 = vst.msk [vmem:[#allocation6 + $0x4] sm:$0x3] %vm2913, %v2911
    %v2915 = vld [vmem:[%s4] sm:$0x1]
    %v2917 = vlaneseq
    %v2918 = vshrl.u32 %v2917, 7
    %v2919 = vsub.s32 0, %v2918
    %v2920 = vrot.slane %v2915, %v2919
    %2921 = vrot.lane.b32.xlu0 %v2920, 120
    %v2922 = vpop.permute.xlu0 %2921
    %v2924 = vadd.f32 %v2358, %v2922
    %v2925 = vadd.f32 %v2359, %v2922
    %v2926 = vadd.f32 %v2360, %v2922
    %v2927 = vadd.f32 %v2361, %v2922
    %v2928 = vmax.f32 %v2924, 0.0
    %v2929 = vmax.f32 %v2925, 0.0
    %v2930 = vmax.f32 %v2926, 0.0
    %v2931 = vmax.f32 %v2927, 0.0
    %v2936 = vcombine.high %v2928, %v2929
    %v2938 = vunpack.c.l.s4 1983009808
    %v2939 = vunpack.c.0.s8 %v2938
    %v2940 = vlaneseq
    %v2941 = vshrl.u32 %v2940, 7
    %v2942 = vsub.s32 %v2939, %v2941
    %v2943 = vrot.slane %v2936, %v2942
    %v2944 = vcombine.high %v2943, %v2943
    %v2945 = vcombine.high %v2930, %v2931
    %v2947 = vunpack.c.l.s4 1983009808
    %v2948 = vunpack.c.0.s8 %v2947
    %v2949 = vlaneseq
    %v2950 = vshrl.u32 %v2949, 7
    %v2951 = vsub.s32 %v2948, %v2950
    %v2952 = vrot.slane %v2945, %v2951
    %v2953 = vcombine.high %v2952, %v2952
    %v2954 = vsel %vm2252, %v2944, %v2944
    %v2955 = vsel %vm2254, %v2944, %v2954
    %v2956 = vrot.slane %v2953, 7
    %v2957 = vsel %vm2257, %v2956, %v2955
    %v2958 = vsel %vm2259, %v2956, %v2957
    %v2959 = vsel %vm2261, %v2956, %v2958
    %v2960 = vsel %vm2263, %v2956, %v2959
    %2961 = vrot.lane.b32.xlu0 %v2960, 52
    %v2962 = vpop.permute.xlu0 %2961
    %v2963 = vrot.slane %v2962, 2
    %vm2964 = vcmask 424960
    %v2965 = vsel %vm2964, %v2962, %v2963
    %vm2967 = vcmask 517472
    %2968 = vst.msk [vmem:[#allocation6 + $0x4] sm:$0x3] %vm2967, %v2965
    %v2969 = vld [vmem:[#allocation6] sm:$0x3f]
    %v2970 = vld [vmem:[%s5] sm:$0xf]
    %v2971 = vld [vmem:[%s5 + $0x4] sm:$0xf]
    %v2972 = vld [vmem:[%s5 + $0x8] sm:$0xf]
    %v2973 = vld [vmem:[%s5 + $0xc] sm:$0xf]
    %v2974 = vld [vmem:[%s5 + $0x10] sm:$0xf]
    %v2975 = vld [vmem:[%s5 + $0x14] sm:$0xf]
    %v2976 = vld [vmem:[%s5 + $0x18] sm:$0xf]
    %v2977 = vld [vmem:[%s5 + $0x1c] sm:$0xf]
    %v2978 = vld [vmem:[%s5 + $0x20] sm:$0xf]
    %v2979 = vld [vmem:[%s5 + $0x24] sm:$0xf]
    %v2980 = vld [vmem:[%s5 + $0x28] sm:$0xf]
    %v2981 = vld [vmem:[%s5 + $0x2c] sm:$0xf]
    %v2982 = vld [vmem:[%s5 + $0x30] sm:$0xf]
    %v2983 = vld [vmem:[%s5 + $0x34] sm:$0xf]
    %v2984 = vld [vmem:[%s5 + $0x38] sm:$0xf]
    %v2985 = vld [vmem:[%s5 + $0x3c] sm:$0xf]
    %v2986 = vld [vmem:[%s5 + $0x40] sm:$0xf]
    %v2987 = vld [vmem:[%s5 + $0x44] sm:$0xf]
    %v2988 = vld [vmem:[%s5 + $0x48] sm:$0xf]
    %v2989 = vld [vmem:[%s5 + $0x4c] sm:$0xf]
    %v2990 = vld [vmem:[%s5 + $0x50] sm:$0xf]
    %v2991 = vld [vmem:[%s5 + $0x54] sm:$0xf]
    %v2992 = vld [vmem:[%s5 + $0x58] sm:$0xf]
    %v2993 = vld [vmem:[%s5 + $0x5c] sm:$0xf]
    %v2994 = vld [vmem:[%s5 + $0x60] sm:$0xf]
    %v2995 = vld [vmem:[%s5 + $0x64] sm:$0xf]
    %v2996 = vld [vmem:[%s5 + $0x68] sm:$0xf]
    %v2997 = vld [vmem:[%s5 + $0x6c] sm:$0xf]
    %v2998 = vld [vmem:[%s5 + $0x70] sm:$0xf]
    %v2999 = vld [vmem:[%s5 + $0x74] sm:$0xf]
    %v3000 = vld [vmem:[%s5 + $0x78] sm:$0xf]
    %v3001 = vld [vmem:[%s5 + $0x7c] sm:$0xf]
    %v3002 = vld [vmem:[%s5 + $0x80] sm:$0xf]
    %v3003 = vld [vmem:[%s5 + $0x84] sm:$0xf]
    %v3004 = vld [vmem:[%s5 + $0x88] sm:$0xf]
    %v3005 = vld [vmem:[%s5 + $0x8c] sm:$0xf]
    %v3006 = vld [vmem:[%s5 + $0x90] sm:$0xf]
    %v3007 = vld [vmem:[%s5 + $0x94] sm:$0xf]
    %v3008 = vld [vmem:[%s5 + $0x98] sm:$0xf]
    %v3009 = vld [vmem:[%s5 + $0x9c] sm:$0xf]
    %v3011 = vcombine.high %v2969, %v2969
    %v3013 = vunpack.c.l.s4 1983009808
    %v3014 = vunpack.c.0.s8 %v3013
    %v3015 = vlaneseq
    %v3016 = vshrl.u32 %v3015, 7
    %v3017 = vsub.s32 %v3014, %v3016
    %v3018 = vrot.slane %v2969, %v3017
    %v3020 = vunpack.c.l.s4 1983009808
    %v3021 = vunpack.c.0.s8 %v3020
    %v3022 = vlaneseq
    %v3023 = vshrl.u32 %v3022, 7
    %v3024 = vsub.s32 %v3021, %v3023
    %v3025 = vrot.slane %v3011, %v3024
    %v3026 = vcombine.high %v3018, %v3018
    %v3030 = vpack.c.bf16 %v3018, %v3018
    %v3031 = vpack.c.bf16 %v3026, %v3026
    %v3032 = vpack.c.bf16 %v3025, %v3025
    %v3033 = vld [vmem:[%s6] sm:$0x1]
    %v3035 = vlaneseq
    %v3036 = vshrl.u32 %v3035, 7
    %v3037 = vsub.s32 0, %v3036
    %v3038 = vrot.slane %v3033, %v3037
    %v3080 = vunpack.c.l.b16 %v2970
    %v3081 = vunpack.c.l.b16 %v2971
    %v3082 = vunpack.c.l.b16 %v2972
    %v3083 = vunpack.c.l.b16 %v2973
    %v3084 = vunpack.c.l.b16 %v2974
    %v3085 = vunpack.c.l.b16 %v2975
    %v3086 = vunpack.c.l.b16 %v2976
    %v3087 = vunpack.c.l.b16 %v2977
    %v3088 = vunpack.c.l.b16 %v2978
    %v3089 = vunpack.c.l.b16 %v2979
    %v3090 = vunpack.c.l.b16 %v2980
    %v3091 = vunpack.c.l.b16 %v2981
    %v3092 = vunpack.c.l.b16 %v2982
    %v3093 = vunpack.c.l.b16 %v2983
    %v3094 = vunpack.c.l.b16 %v2984
    %v3095 = vunpack.c.l.b16 %v2985
    %v3096 = vunpack.c.l.b16 %v2986
    %v3097 = vunpack.c.l.b16 %v2987
    %v3098 = vunpack.c.l.b16 %v2988
    %v3099 = vunpack.c.l.b16 %v2989
    %v3100 = vunpack.c.l.b16 %v2990
    %v3101 = vunpack.c.l.b16 %v2991
    %v3102 = vunpack.c.l.b16 %v2992
    %v3103 = vunpack.c.l.b16 %v2993
    %v3104 = vunpack.c.l.b16 %v2994
    %v3105 = vunpack.c.l.b16 %v2995
    %v3106 = vunpack.c.l.b16 %v2996
    %v3107 = vunpack.c.l.b16 %v2997
    %v3108 = vunpack.c.l.b16 %v2998
    %v3109 = vunpack.c.l.b16 %v2999
    %v3110 = vunpack.c.l.b16 %v3000
    %v3111 = vunpack.c.l.b16 %v3001
    %v3112 = vunpack.c.l.b16 %v3002
    %v3113 = vunpack.c.l.b16 %v3003
    %v3114 = vunpack.c.l.b16 %v3004
    %v3115 = vunpack.c.l.b16 %v3005
    %v3116 = vunpack.c.l.b16 %v3006
    %v3117 = vunpack.c.l.b16 %v3007
    %v3118 = vunpack.c.l.b16 %v3008
    %v3119 = vunpack.c.l.b16 %v3009
    %v3120 = vpack.c.b16 %v3081, %v3080
    %v3121 = vpack.c.b16 %v3083, %v3082
    %v3122 = vpack.c.b16 %v3085, %v3084
    %v3123 = vpack.c.b16 %v3087, %v3086
    %v3124 = vpack.c.b16 %v3089, %v3088
    %v3125 = vpack.c.b16 %v3091, %v3090
    %v3126 = vpack.c.b16 %v3093, %v3092
    %v3127 = vpack.c.b16 %v3095, %v3094
    %v3128 = vpack.c.b16 %v3097, %v3096
    %v3129 = vpack.c.b16 %v3099, %v3098
    %v3130 = vpack.c.b16 %v3101, %v3100
    %v3131 = vpack.c.b16 %v3103, %v3102
    %v3132 = vpack.c.b16 %v3105, %v3104
    %v3133 = vpack.c.b16 %v3107, %v3106
    %v3134 = vpack.c.b16 %v3109, %v3108
    %v3135 = vpack.c.b16 %v3111, %v3110
    %v3136 = vpack.c.b16 %v3113, %v3112
    %v3137 = vpack.c.b16 %v3115, %v3114
    %v3138 = vpack.c.b16 %v3117, %v3116
    %v3139 = vpack.c.b16 %v3119, %v3118
    %vm3160 = vcmask 523264
    %v3162 = vsel %vm3160, %v3032, 0
    %3164 = vmatprep.subr.bf16.mxu0 0
    %3165 = vmatpush1.bf16.msra.mxu0 %v3127
    %3166 = vmatprep.subr.bf16.mxu0 0
    %3167 = vmatpush1.bf16.msra.mxu0 %v3126
    %3168 = vmatprep.subr.bf16.mxu0 0
    %3169 = vmatpush1.bf16.msra.mxu0 %v3125
    %3170 = vmatprep.subr.bf16.mxu0 0
    %3171 = vmatpush1.bf16.msra.mxu0 %v3124
    %3172 = vmatprep.subr.bf16.mxu0 0
    %3173 = vmatpush1.bf16.msra.mxu0 %v3123
    %3174 = vmatprep.subr.bf16.mxu0 0
    %3175 = vmatpush1.bf16.msra.mxu0 %v3122
    %3176 = vmatprep.subr.bf16.mxu0 0
    %3177 = vmatpush1.bf16.msra.mxu0 %v3121
    %3178 = vmatprep.subr.bf16.mxu0 0
    %3179 = vmatpush1.bf16.msra.mxu0 %v3120
    %3180 = vmatprep.subr.bf16.mxu0 0
    %3181 = vmatpush2.bf16.msra.mxu0 %v3135
    %3182 = vmatprep.subr.bf16.mxu0 0
    %3183 = vmatpush2.bf16.msra.mxu0 %v3134
    %3184 = vmatprep.subr.bf16.mxu0 0
    %3185 = vmatpush2.bf16.msra.mxu0 %v3133
    %3186 = vmatprep.subr.bf16.mxu0 0
    %3187 = vmatpush2.bf16.msra.mxu0 %v3132
    %3188 = vmatprep.subr.bf16.mxu0 0
    %3189 = vmatpush2.bf16.msra.mxu0 %v3131
    %3190 = vmatprep.subr.bf16.mxu0 0
    %3191 = vmatpush2.bf16.msra.mxu0 %v3130
    %3192 = vmatprep.subr.bf16.mxu0 0
    %3193 = vmatpush2.bf16.msra.mxu0 %v3129
    %3194 = vmatprep.subr.bf16.mxu0 0
    %3195 = vmatpush2.bf16.msra.mxu0 %v3128
    %3196 = vmatprep.mubr.bf16.mxu0 %v3031
    %3197 = vmatmul.mubr.bf16.gmra.mxu0 %v3030
    %v3198 = vpop.f32.mrf.mxu0
    %v3199 = vadd.f32 %v3038, %v3198
    %v3200 = vpop.f32.mrf.mxu0
    %v3201 = vpop.f32.mrf.mxu0
    %v3202 = vpop.f32.mrf.mxu0
    %3203 = vdwg.mxu0
    %3204 = vmatprep.subr.bf16.mxu0 0
    %3205 = vmatpush1.bf16.msra.mxu0 0
    %3206 = vmatprep.subr.bf16.mxu0 0
    %3207 = vmatpush1.bf16.msra.mxu0 0
    %3208 = vmatprep.subr.bf16.mxu0 0
    %3209 = vmatpush1.bf16.msra.mxu0 0
    %3210 = vmatprep.subr.bf16.mxu0 0
    %3211 = vmatpush1.bf16.msra.mxu0 0
    %3212 = vmatprep.subr.bf16.mxu0 0
    %3213 = vmatpush1.bf16.msra.mxu0 %v3139
    %3214 = vmatprep.subr.bf16.mxu0 0
    %3215 = vmatpush1.bf16.msra.mxu0 %v3138
    %3216 = vmatprep.subr.bf16.mxu0 0
    %3217 = vmatpush1.bf16.msra.mxu0 %v3137
    %3218 = vmatprep.subr.bf16.mxu0 0
    %3219 = vmatpush1.bf16.msra.mxu0 %v3136
    %3220 = vmatprep.subr.bf16.mxu0 0
    %3221 = vmatpush2.bf16.msra.mxu0 0
    %3222 = vmatprep.subr.bf16.mxu0 0
    %3223 = vmatpush2.bf16.msra.mxu0 0
    %3224 = vmatprep.subr.bf16.mxu0 0
    %3225 = vmatpush2.bf16.msra.mxu0 0
    %3226 = vmatprep.subr.bf16.mxu0 0
    %3227 = vmatpush2.bf16.msra.mxu0 0
    %3228 = vmatprep.subr.bf16.mxu0 0
    %3229 = vmatpush2.bf16.msra.mxu0 0
    %3230 = vmatprep.subr.bf16.mxu0 0
    %3231 = vmatpush2.bf16.msra.mxu0 0
    %3232 = vmatprep.subr.bf16.mxu0 0
    %3233 = vmatpush2.bf16.msra.mxu0 0
    %3234 = vmatprep.subr.bf16.mxu0 0
    %3235 = vmatpush2.bf16.msra.mxu0 0
    %3236 = vmatprep.mubr.bf16.mxu0 0
    %3237 = vmatmul.mubr.bf16.gmra.mxu0 %v3162
    %v3238 = vpop.f32.mrf.mxu0
    %v3239 = vadd.f32 %v3199, %v3238
    %v3240 = vpop.f32.mrf.mxu0
    %v3241 = vpop.f32.mrf.mxu0
    %v3242 = vpop.f32.mrf.mxu0
    %3243 = vdwg.mxu0
    %v3244 = vmax.f32 %v3239, 0.0
    %v3245 = vld [vmem:[%s7] sm:$0xf]
    %v3246 = vld [vmem:[%s7 + $0x4] sm:$0xf]
    %v3247 = vld [vmem:[%s7 + $0x8] sm:$0xf]
    %v3248 = vld [vmem:[%s7 + $0xc] sm:$0xf]
    %v3249 = vld [vmem:[%s7 + $0x10] sm:$0xf]
    %v3250 = vld [vmem:[%s7 + $0x14] sm:$0xf]
    %v3251 = vld [vmem:[%s7 + $0x18] sm:$0x1]
    %v3252 = vpack.c.bf16 %v3244, %v3244
    %v3253 = vld [vmem:[%s8] sm:$0x1]
    %v3255 = vlaneseq
    %v3256 = vshrl.u32 %v3255, 7
    %v3257 = vsub.s32 0, %v3256
    %v3258 = vrot.slane %v3253, %v3257
    %v3267 = vunpack.c.l.b16 %v3245
    %v3268 = vunpack.c.l.b16 %v3246
    %v3269 = vunpack.c.l.b16 %v3247
    %v3270 = vunpack.c.l.b16 %v3248
    %v3271 = vunpack.c.l.b16 %v3249
    %v3272 = vunpack.c.l.b16 %v3250
    %v3273 = vunpack.c.l.b16 %v3251
    %v3274 = vpack.c.b16 %v3268, %v3267
    %v3275 = vpack.c.b16 %v3270, %v3269
    %v3276 = vpack.c.b16 %v3272, %v3271
    %v3277 = vpack.c.b16 %v3273, %v3273
    %vm3281 = vcmask 408576
    %v3283 = vsel %vm3281, %v3252, 0
    %vm3285 = vcmask 1040384
    %v3287 = vsel %vm3285, %v3277, 0
    %3289 = vmatprep.subr.bf16.mxu0 0
    %3290 = vmatpush1.bf16.msra.mxu0 0
    %3291 = vmatprep.subr.bf16.mxu0 0
    %3292 = vmatpush1.bf16.msra.mxu0 0
    %3293 = vmatprep.subr.bf16.mxu0 0
    %3294 = vmatpush1.bf16.msra.mxu0 0
    %3295 = vmatprep.subr.bf16.mxu0 0
    %3296 = vmatpush1.bf16.msra.mxu0 0
    %3297 = vmatprep.subr.bf16.mxu0 0
    %3298 = vmatpush1.bf16.msra.mxu0 %v3287
    %3299 = vmatprep.subr.bf16.mxu0 0
    %3300 = vmatpush1.bf16.msra.mxu0 %v3276
    %3301 = vmatprep.subr.bf16.mxu0 0
    %3302 = vmatpush1.bf16.msra.mxu0 %v3275
    %3303 = vmatprep.subr.bf16.mxu0 0
    %3304 = vmatpush1.bf16.msra.mxu0 %v3274
    %3305 = vmatprep.subr.bf16.mxu0 0
    %3306 = vmatpush2.bf16.msra.mxu0 0
    %3307 = vmatprep.subr.bf16.mxu0 0
    %3308 = vmatpush2.bf16.msra.mxu0 0
    %3309 = vmatprep.subr.bf16.mxu0 0
    %3310 = vmatpush2.bf16.msra.mxu0 0
    %3311 = vmatprep.subr.bf16.mxu0 0
    %3312 = vmatpush2.bf16.msra.mxu0 0
    %3313 = vmatprep.subr.bf16.mxu0 0
    %3314 = vmatpush2.bf16.msra.mxu0 0
    %3315 = vmatprep.subr.bf16.mxu0 0
    %3316 = vmatpush2.bf16.msra.mxu0 0
    %3317 = vmatprep.subr.bf16.mxu0 0
    %3318 = vmatpush2.bf16.msra.mxu0 0
    %3319 = vmatprep.subr.bf16.mxu0 0
    %3320 = vmatpush2.bf16.msra.mxu0 0
    %3321 = vmatprep.mubr.bf16.mxu0 0
    %3322 = vmatmul.mubr.bf16.gmra.mxu0 %v3283
    %v3323 = vpop.f32.mrf.mxu0
    %v3324 = vadd.f32 %v3258, %v3323
    %v3325 = vpop.f32.mrf.mxu0
    %v3326 = vpop.f32.mrf.mxu0
    %v3327 = vpop.f32.mrf.mxu0
    %3328 = vdwg.mxu0
    %vm3329 = vcmask 74752
    %v3330 = vsel %vm3329, %v3324, -inf
    %v3331 = vrot.slane %v3330, 4
    %v3332 = vmax.f32 %v3330, %v3331
    %v3333 = vrot.slane %v3332, 2
    %v3334 = vmax.f32 %v3332, %v3333
    %v3335 = vrot.slane %v3334, 1
    %v3336 = vmax.f32 %v3334, %v3335
    %v3337 = vsub.f32 %v3324, %v3336
    %v3338 = vmul.f32 %v3337, 1.442695
    %v3339 = vpow.pop %v3338
    %v3340 = vsel %vm3329, %v3339, 0.0
    %v3341 = vrot.slane %v3340, 4
    %v3342 = vadd.f32 %v3340, %v3341
    %v3343 = vrot.slane %v3342, 2
    %v3344 = vadd.f32 %v3342, %v3343
    %v3345 = vrot.slane %v3344, 1
    %v3346 = vadd.f32 %v3344, %v3345
    %v3347 = vlog2.pop %v3346
    %v3348 = vmul.f32 %v3347, 0.6931472
    %v3349 = vadd.f32 %v3348, %v3336
    %v3350 = vsub.f32 %v3324, %v3349
    %3351 = vst.msk [vmem:[#allocation7] sm:$0x3] %vm3329, %v3350
    // Predicated region
    $region38: #{net_forward_pallas.1} parent=1 // pred_check
      _
    $region39: #{net_forward_pallas.1} parent=1 // pred_check_branch
      %3353 = sbr.rel (0) target = $region41
    $region40: #{net_forward_pallas.1} parent=1 // pred_region
      %s3355 = ssub.s32 32, 32
      %3356 = vsyncadd [#allocation8], %s3355
      %s3358 = sshll.u32 [#allocation7], 4
      %s3359 = int_to_ptr.vmem [resolvable:$true] %s3358
      %3361 = dma.vmem_to_hbm [thread:$0]  %s3359, 32, %s9, [#allocation8]
    $region41: #{net_forward_pallas.1} parent=1 // pred_fallthru
      _
    // Predicated region
    $region42: #{net_forward_pallas.1} parent=1 // pred_check
      _
    $region43: #{net_forward_pallas.1} parent=1 // pred_check_branch
      %3363 = sbr.rel (0) target = $region45
    $region44: #{net_forward_pallas.1} parent=1 // pred_region
      %3364 = dma.done [#allocation8], 32
    $region45: #{net_forward_pallas.1} parent=1 // pred_fallthru
      _
    %3365 = vsyncpa [#allocation8], 1

</llo_original>
